<compile_context>
chip_gen: v6e
topology: v6e:2x2x1
jax: 0.10.0
libtpu: 0.0.40
codegen_flags: <defaults>
</compile_context>

<pallas_src>
import jax
import jax.numpy as jnp
from jax.experimental import pallas as pl
from jax.experimental.pallas import tpu as pltpu


# ----------------------------------------------------------------------------
# Small helpers
# ----------------------------------------------------------------------------
def _round_up(x, m):
    return (x + m - 1) // m * m


def _same_padding(h, w, kernel_size, stride):
    """Exactly reproduces the PyTorch Conv module's padding computation."""
    oh = (h - 1) // stride * stride + kernel_size
    ow = (w - 1) // stride * stride + kernel_size
    oh = max(0, oh - h)
    ow = max(0, ow - w)
    # returns (top, bottom), (left, right)
    return (oh // 2, (oh + 1) // 2), (ow // 2, (ow + 1) // 2)


# ----------------------------------------------------------------------------
# In-kernel im2col helpers.  Activations are (C, H*W): channels on sublanes,
# flattened pixels on lanes.  Taps are written straight into a VMEM scratch
# whose rows are laid out (kh, kw, ci_padded) to match the folded weights.
# ----------------------------------------------------------------------------
def _make_col_masks(W, P, K):
    """Horizontal-overrun masks, one per kw tap column.  Hoisted: built once
    per kernel invocation and reused for every image and every kh row."""
    padl = (K - 1) // 2
    col = jax.lax.broadcasted_iota(jnp.int32, (1, P), 1) % W   # output column
    masks = []
    for kw in range(K):
        if kw == padl:
            masks.append(None)                                  # always valid
        else:
            c = col + (kw - padl)
            masks.append(jnp.logical_and(c >= 0, c < W))
    return masks


def _im2col_s1(x, scr_ref, *, col_off, W, K, cin_pad, col_masks):
    """KxK, stride 1, SAME im2col of one image's flat (Cin, H*W) activation,
    written into an aligned VMEM scratch (rows [t*cin_pad, (t+1)*cin_pad),
    cols [col_off, col_off+P)).  Taps are lane shifts of a vertically
    zero-padded flat buffer; horizontal overrun is masked."""
    Cin, P = x.shape
    padl = (K - 1) // 2
    padr = K // 2
    if cin_pad > Cin:   # pad channel rows -> every scratch store is 8-row aligned
        x = jnp.concatenate([x, jnp.zeros((cin_pad - Cin, P), x.dtype)], axis=0)
    # flat buffer: [padl slack+rows of zeros | image | padr rows of zeros+slack]
    front = jnp.zeros((cin_pad, padl * (W + 1)), x.dtype)
    back = jnp.zeros((cin_pad, padr * (W + 1)), x.dtype)
    buf = jnp.concatenate([front, x, back], axis=1)
    t = 0
    for kh in range(K):
        for kw in range(K):
            start = kh * W + kw
            tap = buf[:, start:start + P]                       # (cin_pad, P) lane shift
            m = col_masks[kw]
            if m is not None:
                tap = jnp.where(m, tap, 0.0)
            scr_ref[t * cin_pad:(t + 1) * cin_pad, col_off:col_off + P] = tap
            t += 1


def _im2col_strided(x, scr_ref, *, col_off, H, W, K, stride, cin_pad):
    # TODO(synk): stride>1 fallback is unoptimized (reshape + strided lane
    # slices relayout on TPU); the stride=1 demo never traces this path.
    Cin, P = x.shape
    if cin_pad > Cin:
        x = jnp.concatenate([x, jnp.zeros((cin_pad - Cin, P), x.dtype)], axis=0)
    (pt, pb), (pleft, pright) = _same_padding(H, W, K, stride)
    Hp, Wp = H + pt + pb, W + pleft + pright
    Hout = (Hp - K) // stride + 1
    Wout = (Wp - K) // stride + 1
    x3 = x.reshape(cin_pad, H, W)
    if pleft or pright:
        x3 = jnp.concatenate(
            [jnp.zeros((cin_pad, H, pleft), x3.dtype), x3,
             jnp.zeros((cin_pad, H, pright), x3.dtype)], axis=2)
    if pt or pb:
        x3 = jnp.concatenate(
            [jnp.zeros((cin_pad, pt, Wp), x3.dtype), x3,
             jnp.zeros((cin_pad, pb, Wp), x3.dtype)], axis=1)
    t = 0
    for kh in range(K):
        for kw in range(K):
            tap = jax.lax.slice(
                x3, (0, kh, kw),
                (cin_pad, kh + (Hout - 1) * stride + 1, kw + (Wout - 1) * stride + 1),
                (1, stride, stride)).reshape(cin_pad, Hout * Wout)
            scr_ref[t * cin_pad:(t + 1) * cin_pad,
                    col_off:col_off + Hout * Wout] = tap
            t += 1


# ----------------------------------------------------------------------------
# Fused bottleneck kernel (one grid step = B_blk batch elements)
# ----------------------------------------------------------------------------
def _make_bottleneck_kernel(*, B_blk, H, W, K1, Kd, stride, downsample,
                            C1_pad, Cin_pad, Pout):
    P = H * W

    def kernel(*refs):
        if downsample:
            (x_ref, w0_ref, b0_ref, w1_ref, b1_ref, w2_ref, b2_ref,
             wd_ref, bd_ref, o_ref, scr1, scrd) = refs
        else:
            (x_ref, w0_ref, b0_ref, w1_ref, b1_ref, w2_ref, b2_ref,
             o_ref, scr1) = refs
            scrd = None

        # Hoisted per-conv horizontal masks (shared by all images / kh taps).
        masks1 = _make_col_masks(W, P, K1) if stride == 1 else None
        masksd = (_make_col_masks(W, P, Kd)
                  if (downsample and stride == 1) else None)

        w0 = w0_ref[...]            # bf16 (C1, Cin), fetched once per step
        b0 = b0_ref[...]            # f32  (C1, 1)

        # Per-image stage-0 + im2col, unrolled: B_blk images share one grid
        # step so the fixed per-step cost and the weight fetches are amortized.
        for b in range(B_blk):
            xb = x_ref[b]                                          # (Cin, P) f32
            # b0: 1x1 conv (BN folded) + ReLU — bf16 MXU, f32 accumulate.
            a0 = jnp.dot(w0, xb.astype(jnp.bfloat16),
                         preferred_element_type=jnp.float32)
            a0 = jnp.maximum(a0 + b0, 0.0)                         # (C1, P) f32
            if stride == 1:
                _im2col_s1(a0, scr1, col_off=b * Pout, W=W, K=K1,
                           cin_pad=C1_pad, col_masks=masks1)
                if downsample:
                    _im2col_s1(xb, scrd, col_off=b * Pout, W=W, K=Kd,
                               cin_pad=Cin_pad, col_masks=masksd)
            else:
                _im2col_strided(a0, scr1, col_off=b * Pout, H=H, W=W, K=K1,
                                stride=stride, cin_pad=C1_pad)
                if downsample:
                    _im2col_strided(xb, scrd, col_off=b * Pout, H=H, W=W, K=Kd,
                                    stride=stride, cin_pad=Cin_pad)

        # b1: K1xK1 conv (BN folded) + ReLU — ONE bf16 MXU matmul over all
        # B_blk images (MXU N axis = B_blk*Pout lanes).
        a1 = jnp.dot(w1_ref[...], scr1[...].astype(jnp.bfloat16),
                     preferred_element_type=jnp.float32)
        a1 = jnp.maximum(a1 + b1_ref[...], 0.0)                    # (C1, B_blk*Pout)

        # b2: 1x1 conv (BN folded), no activation.
        a2 = jnp.dot(w2_ref[...], a1.astype(jnp.bfloat16),
                     preferred_element_type=jnp.float32) + b2_ref[...]

        # Residual branch (downsample conv over all images, or identity).
        if downsample:
            r = jnp.dot(wd_ref[...], scrd[...].astype(jnp.bfloat16),
                        preferred_element_type=jnp.float32) + bd_ref[...]

        # Residual add + final ReLU; 256-lane-dense unmasked stores per image.
        for b in range(B_blk):
            a2b = a2[:, b * Pout:(b + 1) * Pout]
            rb = r[:, b * Pout:(b + 1) * Pout] if downsample else x_ref[b]
            o_ref[b] = jnp.maximum(a2b + rb, 0.0).astype(o_ref.dtype)

    return kernel


# ----------------------------------------------------------------------------
# Host-side parameter folding / specs / VMEM budgeting
# ----------------------------------------------------------------------------
def _fold_bn(w_hwio, scale, bias, *, cin_pad=None):
    """Fold BN scale into the conv weight, lay it out as (Cout, K*K*cin_pad)
    with row order (kh, kw, ci) matching the im2col scratch, zero-pad the
    input-channel axis to `cin_pad`, and cast the weight to bfloat16 for the
    MXU (bias stays f32, applied after f32 accumulation)."""
    KH, KW, Cin, Cout = w_hwio.shape
    if cin_pad is None:
        cin_pad = Cin
    w = jnp.transpose(w_hwio, (3, 0, 1, 2)) * scale[:, None, None, None]
    if cin_pad > Cin:
        w = jnp.concatenate(
            [w, jnp.zeros((Cout, KH, KW, cin_pad - Cin), w.dtype)], axis=3)
    w2d = w.reshape(Cout, KH * KW * cin_pad).astype(jnp.bfloat16)
    return w2d, bias.reshape(Cout, 1).astype(jnp.float32)


def _const_spec(arr):
    # Small parameter array, resident in VMEM; constant index_map so it is not
    # re-fetched across grid steps.
    nd = arr.ndim
    return pl.BlockSpec(tuple(arr.shape), lambda n: (0,) * nd)


def _vmem_bytes_estimate(B_blk, *, Cin, C1, C2, C1_pad, Cin_pad, P, Pout,
                         K1, Kd, downsample):
    f32, bf16 = 4, 2
    npix = B_blk * Pout
    total = 2 * B_blk * Cin * P * f32            # input block (double-buffered)
    total += 2 * B_blk * C2 * Pout * f32         # output block (double-buffered)
    total += K1 * K1 * C1_pad * npix * f32       # im2col scratch
    wb = C1 * Cin * bf16 + C1 * K1 * K1 * C1_pad * bf16 + C2 * C1 * bf16
    wb += (2 * C1 + C2) * f32                    # biases
    if downsample:
        total += Kd * Kd * Cin_pad * npix * f32  # downsample im2col scratch
        wb += C2 * Kd * Kd * Cin_pad * bf16 + C2 * f32
    total += 2 * wb                              # weights (double-buffered)
    # live intermediates (a0 per image, a1, a2, residual)
    total += (C1_pad * P + (C1 + 2 * C2) * npix) * f32
    return total


_VMEM_BUDGET = 24 * 1024 * 1024   # conservative: fits v7x's smaller VMEM


def bottleneck_forward(x_nchw, params, *, stride, downsample):
    """Fused Pallas Bottleneck forward.  Input and output are NCHW float32."""
    N, Cin, H, W = x_nchw.shape
    C1 = params["b0"][0].shape[3]
    C2 = params["b2"][0].shape[3]
    K1 = params["b1"][0].shape[0]
    Kd = params["ds"][0].shape[0] if downsample else 0

    C1_pad = _round_up(C1, 8)     # sublane-align the im2col tap row blocks (f32)
    Cin_pad = _round_up(Cin, 8)

    w0, b0 = _fold_bn(*params["b0"])
    w1, b1 = _fold_bn(*params["b1"], cin_pad=C1_pad)
    w2, b2 = _fold_bn(*params["b2"])

    (pt, pb), (pleft, pright) = _same_padding(H, W, K1, stride)
    Hout = (H + pt + pb - K1) // stride + 1
    Wout = (W + pleft + pright - K1) // stride + 1
    P, Pout = H * W, Hout * Wout

    # Batch blocking: largest divisor of N whose per-step footprint fits the
    # VMEM budget (amortizes the fixed per-grid-step cost, widens MXU N axis).
    def est(b_blk):
        return _vmem_bytes_estimate(
            b_blk, Cin=Cin, C1=C1, C2=C2, C1_pad=C1_pad, Cin_pad=Cin_pad,
            P=P, Pout=Pout, K1=K1, Kd=Kd, downsample=downsample)

    B_blk = 1
    for cand in range(N, 0, -1):
        if N % cand == 0 and est(cand) <= _VMEM_BUDGET:
            B_blk = cand
            break
    vmem_limit = int(min(64 * 1024 * 1024,
                         max(16 * 1024 * 1024, 2 * est(B_blk))))

    args = [x_nchw.reshape(N, Cin, P), w0, b0, w1, b1, w2, b2]  # free reshape
    in_specs = [
        pl.BlockSpec((B_blk, Cin, P), lambda n: (n, 0, 0)),     # lane-dense
        _const_spec(w0), _const_spec(b0),
        _const_spec(w1), _const_spec(b1),
        _const_spec(w2), _const_spec(b2),
    ]
    scratch_shapes = [pltpu.VMEM((K1 * K1 * C1_pad, B_blk * Pout), jnp.float32)]
    if downsample:
        wd, bd = _fold_bn(*params["ds"], cin_pad=Cin_pad)
        args += [wd, bd]
        in_specs += [_const_spec(wd), _const_spec(bd)]
        scratch_shapes.append(
            pltpu.VMEM((Kd * Kd * Cin_pad, B_blk * Pout), jnp.float32))
    else:
        assert Cin == C2 and stride == 1, \
            "identity residual requires stride==1 and in_places == places*expansion"

    kernel = _make_bottleneck_kernel(
        B_blk=B_blk, H=H, W=W, K1=K1, Kd=Kd, stride=stride,
        downsample=downsample, C1_pad=C1_pad, Cin_pad=Cin_pad, Pout=Pout)

    out = pl.pallas_call(
        kernel,
        out_shape=jax.ShapeDtypeStruct((N, C2, Pout), jnp.float32),
        grid=(N // B_blk,),
        in_specs=in_specs,
        out_specs=pl.BlockSpec((B_blk, C2, Pout), lambda n: (n, 0, 0)),
        scratch_shapes=scratch_shapes,
        compiler_params=pltpu.CompilerParams(
            dimension_semantics=("parallel",),      # megacore on v7x
            vmem_limit_bytes=vmem_limit),
    )(*args)
    return out.reshape(N, C2, Hout, Wout)


# ----------------------------------------------------------------------------
# Pure-JAX reference (for correctness check), NCHW end-to-end, f32
# ----------------------------------------------------------------------------
def _ref_conv_bn_act(x, w, scale, bias, *, stride, apply_relu):
    K = w.shape[0]
    _, _, H, W = x.shape
    (pt, pb), (pleft, pright) = _same_padding(H, W, K, stride)
    xp = jnp.pad(x, ((0, 0), (0, 0), (pt, pb), (pleft, pright)))
    y = jax.lax.conv_general_dilated(
        xp, w, (stride, stride), "VALID",
        dimension_numbers=("NCHW", "HWIO", "NCHW"))
    y = y * scale[None, :, None, None] + bias[None, :, None, None]
    if apply_relu:
        y = jnp.maximum(y, 0.0)
    return y


def _ref_bottleneck(x, params, *, stride, downsample):
    out = _ref_conv_bn_act(x, *params["b0"], stride=1, apply_relu=True)
    out = _ref_conv_bn_act(out, *params["b1"], stride=stride, apply_relu=True)
    out = _ref_conv_bn_act(out, *params["b2"], stride=1, apply_relu=False)
    residual = (_ref_conv_bn_act(x, *params["ds"], stride=stride, apply_relu=False)
                if downsample else x)
    return jnp.maximum(out + residual, 0.0)


# ----------------------------------------------------------------------------
# Deterministic parameter construction (synthetic; BN in inference mode)
# ----------------------------------------------------------------------------
def _make_conv_bn_params(key, cin, cout, k):
    k1, k2, k3, k4, k5 = jax.random.split(key, 5)
    fan_in = cin * k * k
    w = jax.random.normal(k1, (k, k, cin, cout), jnp.float32) * (fan_in ** -0.5)
    gamma = 1.0 + 0.1 * jax.random.normal(k2, (cout,), jnp.float32)
    beta = 0.1 * jax.random.normal(k3, (cout,), jnp.float32)
    mean = 0.1 * jax.random.normal(k4, (cout,), jnp.float32)
    var = jnp.abs(jax.random.normal(k5, (cout,), jnp.float32)) + 0.5
    eps = 1e-5
    scale = gamma / jnp.sqrt(var + eps)
    bias = beta - mean * scale
    return (w, scale, bias)


if __name__ == "__main__":
    in_places, places, expansion, stride = 4, 4, 2, 1
    downsample = (stride > 1) or (in_places != places * expansion)   # True here
    N, H, W = 2, 16, 16

    key = jax.random.PRNGKey(0)
    kx, k0, k1, k2, kd = jax.random.split(key, 5)

    x = jax.random.normal(kx, (N, in_places, H, W), jnp.float32)     # NCHW input

    params = {
        "b0": _make_conv_bn_params(k0, in_places, places, 1),
        "b1": _make_conv_bn_params(k1, places, places, 5),
        "b2": _make_conv_bn_params(k2, places, places * expansion, 1),
        "ds": _make_conv_bn_params(kd, in_places, places * expansion, 3),
    }

    fwd = jax.jit(bottleneck_forward, static_argnames=("stride", "downsample"))
    out = jax.block_until_ready(fwd(x, params, stride=stride, downsample=downsample))

    ref = jax.block_until_ready(
        _ref_bottleneck(x, params, stride=stride, downsample=downsample))

    assert out.shape == (N, places * expansion, H, W), out.shape
    # bf16 MXU inputs (f32 accumulation) => looser tolerance vs the f32 reference.
    if not jnp.allclose(out, ref, atol=8e-2, rtol=3e-2):
        err = float(jnp.max(jnp.abs(out - ref)))
        raise AssertionError(
            f"Pallas Bottleneck output mismatch vs reference (max abs err {err})")

    print("KERNEL_OK")
</pallas_src>

<mosaic_0001>
module attributes {stable_mosaic.version = 11 : i64} {
  func.func @kernel(%arg0: i32, %arg1: memref<2x4x256xf32, #tpu.memory_space<vmem>>, %arg2: memref<4x4xbf16, #tpu.memory_space<vmem>>, %arg3: memref<4x1xf32, #tpu.memory_space<vmem>>, %arg4: memref<4x200xbf16, #tpu.memory_space<vmem>>, %arg5: memref<4x1xf32, #tpu.memory_space<vmem>>, %arg6: memref<8x4xbf16, #tpu.memory_space<vmem>>, %arg7: memref<8x1xf32, #tpu.memory_space<vmem>>, %arg8: memref<8x72xbf16, #tpu.memory_space<vmem>>, %arg9: memref<8x1xf32, #tpu.memory_space<vmem>>, %arg10: memref<2x8x256xf32, #tpu.memory_space<vmem>>, %arg11: memref<200x512xf32, #tpu.memory_space<vmem>>, %arg12: memref<72x512xf32, #tpu.memory_space<vmem>>) attributes {dimension_semantics = [#tpu.dimension_semantics<parallel>], iteration_bounds = array<i64: 1>, scalar_prefetch = 0 : i64, scratch_operands = 2 : i64, tpu.core_type = #tpu.core_type<tc>, window_params = [{transform_indices = @transform_0, window_bounds = array<i64: 2, 4, 256>}, {pipeline_mode = #tpu.pipeline_mode<synchronous>, transform_indices = @transform_1, window_bounds = array<i64: 4, 4>}, {pipeline_mode = #tpu.pipeline_mode<synchronous>, transform_indices = @transform_2, window_bounds = array<i64: 4, 1>}, {pipeline_mode = #tpu.pipeline_mode<synchronous>, transform_indices = @transform_3, window_bounds = array<i64: 4, 200>}, {pipeline_mode = #tpu.pipeline_mode<synchronous>, transform_indices = @transform_4, window_bounds = array<i64: 4, 1>}, {pipeline_mode = #tpu.pipeline_mode<synchronous>, transform_indices = @transform_5, window_bounds = array<i64: 8, 4>}, {pipeline_mode = #tpu.pipeline_mode<synchronous>, transform_indices = @transform_6, window_bounds = array<i64: 8, 1>}, {pipeline_mode = #tpu.pipeline_mode<synchronous>, transform_indices = @transform_7, window_bounds = array<i64: 8, 72>}, {pipeline_mode = #tpu.pipeline_mode<synchronous>, transform_indices = @transform_8, window_bounds = array<i64: 8, 1>}, {transform_indices = @transform_9, window_bounds = array<i64: 2, 8, 256>}]} {
    %0 = tpu.iota {dimensions = array<i32: 1>} : vector<1x256xi32>
    %c16_i32 = arith.constant 16 : i32
    %c0_i32 = arith.constant 0 : i32
    %1 = arith.cmpi eq, %c16_i32, %c0_i32 : i32
    %c1_i32 = arith.constant 1 : i32
    %2 = arith.select %1, %c1_i32, %c16_i32 : i32
    %3 = vector.broadcast %2 : i32 to vector<1x256xi32>
    %4 = arith.remsi %0, %3 : vector<1x256xi32>
    %c0_i32_0 = arith.constant 0 : i32
    %5 = vector.broadcast %c0_i32_0 : i32 to vector<1x256xi32>
    %6 = arith.cmpi ne, %4, %5 : vector<1x256xi32>
    %c0_i32_1 = arith.constant 0 : i32
    %7 = vector.broadcast %c0_i32_1 : i32 to vector<1x256xi32>
    %8 = arith.cmpi slt, %4, %7 : vector<1x256xi32>
    %c0_i32_2 = arith.constant 0 : i32
    %9 = arith.cmpi slt, %2, %c0_i32_2 : i32
    %10 = vector.broadcast %9 : i1 to vector<1x256xi1>
    %11 = vector.broadcast %10 : vector<1x256xi1> to vector<1x256xi1>
    %12 = arith.xori %8, %11 : vector<1x256xi1>
    %13 = arith.andi %12, %6 : vector<1x256xi1>
    %14 = vector.broadcast %2 : i32 to vector<1x256xi32>
    %15 = arith.addi %4, %14 : vector<1x256xi32>
    %16 = arith.select %13, %15, %4 : vector<1x256xi1>, vector<1x256xi32>
    %c-2_i32 = arith.constant -2 : i32
    %17 = vector.broadcast %c-2_i32 : i32 to vector<1x256xi32>
    %18 = arith.addi %16, %17 : vector<1x256xi32>
    %c0_i32_3 = arith.constant 0 : i32
    %19 = vector.broadcast %c0_i32_3 : i32 to vector<1x256xi32>
    %20 = arith.cmpi sge, %18, %19 : vector<1x256xi32>
    %c16_i32_4 = arith.constant 16 : i32
    %21 = vector.broadcast %c16_i32_4 : i32 to vector<1x256xi32>
    %22 = arith.cmpi slt, %18, %21 : vector<1x256xi32>
    %23 = arith.andi %20, %22 : vector<1x256xi1>
    %c-1_i32 = arith.constant -1 : i32
    %24 = vector.broadcast %c-1_i32 : i32 to vector<1x256xi32>
    %25 = arith.addi %16, %24 : vector<1x256xi32>
    %c0_i32_5 = arith.constant 0 : i32
    %26 = vector.broadcast %c0_i32_5 : i32 to vector<1x256xi32>
    %27 = arith.cmpi sge, %25, %26 : vector<1x256xi32>
    %c16_i32_6 = arith.constant 16 : i32
    %28 = vector.broadcast %c16_i32_6 : i32 to vector<1x256xi32>
    %29 = arith.cmpi slt, %25, %28 : vector<1x256xi32>
    %30 = arith.andi %27, %29 : vector<1x256xi1>
    %c1_i32_7 = arith.constant 1 : i32
    %31 = vector.broadcast %c1_i32_7 : i32 to vector<1x256xi32>
    %32 = arith.addi %16, %31 : vector<1x256xi32>
    %c0_i32_8 = arith.constant 0 : i32
    %33 = vector.broadcast %c0_i32_8 : i32 to vector<1x256xi32>
    %34 = arith.cmpi sge, %32, %33 : vector<1x256xi32>
    %c16_i32_9 = arith.constant 16 : i32
    %35 = vector.broadcast %c16_i32_9 : i32 to vector<1x256xi32>
    %36 = arith.cmpi slt, %32, %35 : vector<1x256xi32>
    %37 = arith.andi %34, %36 : vector<1x256xi1>
    %c2_i32 = arith.constant 2 : i32
    %38 = vector.broadcast %c2_i32 : i32 to vector<1x256xi32>
    %39 = arith.addi %16, %38 : vector<1x256xi32>
    %c0_i32_10 = arith.constant 0 : i32
    %40 = vector.broadcast %c0_i32_10 : i32 to vector<1x256xi32>
    %41 = arith.cmpi sge, %39, %40 : vector<1x256xi32>
    %c16_i32_11 = arith.constant 16 : i32
    %42 = vector.broadcast %c16_i32_11 : i32 to vector<1x256xi32>
    %43 = arith.cmpi slt, %39, %42 : vector<1x256xi32>
    %44 = arith.andi %41, %43 : vector<1x256xi1>
    %45 = tpu.iota {dimensions = array<i32: 1>} : vector<1x256xi32>
    %c16_i32_12 = arith.constant 16 : i32
    %c0_i32_13 = arith.constant 0 : i32
    %46 = arith.cmpi eq, %c16_i32_12, %c0_i32_13 : i32
    %c1_i32_14 = arith.constant 1 : i32
    %47 = arith.select %46, %c1_i32_14, %c16_i32_12 : i32
    %48 = vector.broadcast %47 : i32 to vector<1x256xi32>
    %49 = arith.remsi %45, %48 : vector<1x256xi32>
    %c0_i32_15 = arith.constant 0 : i32
    %50 = vector.broadcast %c0_i32_15 : i32 to vector<1x256xi32>
    %51 = arith.cmpi ne, %49, %50 : vector<1x256xi32>
    %c0_i32_16 = arith.constant 0 : i32
    %52 = vector.broadcast %c0_i32_16 : i32 to vector<1x256xi32>
    %53 = arith.cmpi slt, %49, %52 : vector<1x256xi32>
    %c0_i32_17 = arith.constant 0 : i32
    %54 = arith.cmpi slt, %47, %c0_i32_17 : i32
    %55 = vector.broadcast %54 : i1 to vector<1x256xi1>
    %56 = vector.broadcast %55 : vector<1x256xi1> to vector<1x256xi1>
    %57 = arith.xori %53, %56 : vector<1x256xi1>
    %58 = arith.andi %57, %51 : vector<1x256xi1>
    %59 = vector.broadcast %47 : i32 to vector<1x256xi32>
    %60 = arith.addi %49, %59 : vector<1x256xi32>
    %61 = arith.select %58, %60, %49 : vector<1x256xi1>, vector<1x256xi32>
    %c-1_i32_18 = arith.constant -1 : i32
    %62 = vector.broadcast %c-1_i32_18 : i32 to vector<1x256xi32>
    %63 = arith.addi %61, %62 : vector<1x256xi32>
    %c0_i32_19 = arith.constant 0 : i32
    %64 = vector.broadcast %c0_i32_19 : i32 to vector<1x256xi32>
    %65 = arith.cmpi sge, %63, %64 : vector<1x256xi32>
    %c16_i32_20 = arith.constant 16 : i32
    %66 = vector.broadcast %c16_i32_20 : i32 to vector<1x256xi32>
    %67 = arith.cmpi slt, %63, %66 : vector<1x256xi32>
    %68 = arith.andi %65, %67 : vector<1x256xi1>
    %c1_i32_21 = arith.constant 1 : i32
    %69 = vector.broadcast %c1_i32_21 : i32 to vector<1x256xi32>
    %70 = arith.addi %61, %69 : vector<1x256xi32>
    %c0_i32_22 = arith.constant 0 : i32
    %71 = vector.broadcast %c0_i32_22 : i32 to vector<1x256xi32>
    %72 = arith.cmpi sge, %70, %71 : vector<1x256xi32>
    %c16_i32_23 = arith.constant 16 : i32
    %73 = vector.broadcast %c16_i32_23 : i32 to vector<1x256xi32>
    %74 = arith.cmpi slt, %70, %73 : vector<1x256xi32>
    %75 = arith.andi %72, %74 : vector<1x256xi1>
    %c0 = arith.constant 0 : index
    %c0_24 = arith.constant 0 : index
    %76 = vector.load %arg2[%c0, %c0_24] : memref<4x4xbf16, #tpu.memory_space<vmem>>, vector<4x4xbf16>
    %c0_25 = arith.constant 0 : index
    %c0_26 = arith.constant 0 : index
    %77 = vector.load %arg3[%c0_25, %c0_26] : memref<4x1xf32, #tpu.memory_space<vmem>>, vector<4x1xf32>
    %c0_27 = arith.constant 0 : index
    %c0_28 = arith.constant 0 : index
    %c0_29 = arith.constant 0 : index
    %78 = vector.load %arg1[%c0_27, %c0_28, %c0_29] : memref<2x4x256xf32, #tpu.memory_space<vmem>>, vector<1x4x256xf32>
    %79 = vector.shape_cast %78 : vector<1x4x256xf32> to vector<4x256xf32>
    %80 = arith.truncf %79 : vector<4x256xf32> to vector<4x256xbf16>
    %cst = arith.constant dense<0.000000e+00> : vector<4x256xf32>
    %81 = tpu.matmul %76, %80, %cst {dimension_numbers = #tpu.dot_dimension_numbers<[1], [0], [0], [1], [0, 0, 1, 1], [], []>} : vector<4x4xbf16>, vector<4x256xbf16>, vector<4x256xf32> -> vector<4x256xf32>
    %82 = vector.broadcast %77 : vector<4x1xf32> to vector<4x256xf32>
    %83 = arith.addf %81, %82 : vector<4x256xf32>
    %cst_30 = arith.constant 0.000000e+00 : f32
    %84 = vector.broadcast %cst_30 : f32 to vector<4x256xf32>
    %85 = arith.maximumf %83, %84 : vector<4x256xf32>
    %cst_31 = arith.constant 0.000000e+00 : f32
    %86 = vector.broadcast %cst_31 : f32 to vector<4x256xf32>
    %87 = tpu.concatenate %85, %86 in 0 : vector<4x256xf32>, vector<4x256xf32> -> vector<8x256xf32>
    %cst_32 = arith.constant 0.000000e+00 : f32
    %88 = vector.broadcast %cst_32 : f32 to vector<8x34xf32>
    %cst_33 = arith.constant 0.000000e+00 : f32
    %89 = vector.broadcast %cst_33 : f32 to vector<8x34xf32>
    %90 = tpu.concatenate %88, %87, %89 in 1 : vector<8x34xf32>, vector<8x256xf32>, vector<8x34xf32> -> vector<8x324xf32>
    %91 = vector.extract_strided_slice %90 {offsets = [0, 0], sizes = [8, 256], strides = [1, 1]} : vector<8x324xf32> to vector<8x256xf32>
    %cst_34 = arith.constant 0.000000e+00 : f32
    %92 = vector.shape_cast %23 : vector<1x256xi1> to vector<1x256xi1>
    %93 = vector.broadcast %92 : vector<1x256xi1> to vector<8x256xi1>
    %94 = vector.broadcast %cst_34 : f32 to vector<8x256xf32>
    %95 = arith.select %93, %91, %94 : vector<8x256xi1>, vector<8x256xf32>
    %c0_35 = arith.constant 0 : index
    %c0_36 = arith.constant 0 : index
    %96 = vector.load %arg11[%c0_35, %c0_36] : memref<200x512xf32, #tpu.memory_space<vmem>>, vector<8x256xf32>
    tpu.vector_store %arg11[%c0_35, %c0_36], %95 {strides = array<i32>} : memref<200x512xf32, #tpu.memory_space<vmem>>, vector<8x256xf32>,
    %97 = vector.extract_strided_slice %90 {offsets = [0, 1], sizes = [8, 256], strides = [1, 1]} : vector<8x324xf32> to vector<8x256xf32>
    %cst_37 = arith.constant 0.000000e+00 : f32
    %98 = vector.shape_cast %30 : vector<1x256xi1> to vector<1x256xi1>
    %99 = vector.broadcast %98 : vector<1x256xi1> to vector<8x256xi1>
    %100 = vector.broadcast %cst_37 : f32 to vector<8x256xf32>
    %101 = arith.select %99, %97, %100 : vector<8x256xi1>, vector<8x256xf32>
    %c8 = arith.constant 8 : index
    %c0_38 = arith.constant 0 : index
    %102 = vector.load %arg11[%c8, %c0_38] : memref<200x512xf32, #tpu.memory_space<vmem>>, vector<8x256xf32>
    tpu.vector_store %arg11[%c8, %c0_38], %101 {strides = array<i32>} : memref<200x512xf32, #tpu.memory_space<vmem>>, vector<8x256xf32>,
    %103 = vector.extract_strided_slice %90 {offsets = [0, 2], sizes = [8, 256], strides = [1, 1]} : vector<8x324xf32> to vector<8x256xf32>
    %c16 = arith.constant 16 : index
    %c0_39 = arith.constant 0 : index
    %104 = vector.load %arg11[%c16, %c0_39] : memref<200x512xf32, #tpu.memory_space<vmem>>, vector<8x256xf32>
    tpu.vector_store %arg11[%c16, %c0_39], %103 {strides = array<i32>} : memref<200x512xf32, #tpu.memory_space<vmem>>, vector<8x256xf32>,
    %105 = vector.extract_strided_slice %90 {offsets = [0, 3], sizes = [8, 256], strides = [1, 1]} : vector<8x324xf32> to vector<8x256xf32>
    %cst_40 = arith.constant 0.000000e+00 : f32
    %106 = vector.shape_cast %37 : vector<1x256xi1> to vector<1x256xi1>
    %107 = vector.broadcast %106 : vector<1x256xi1> to vector<8x256xi1>
    %108 = vector.broadcast %cst_40 : f32 to vector<8x256xf32>
    %109 = arith.select %107, %105, %108 : vector<8x256xi1>, vector<8x256xf32>
    %c24 = arith.constant 24 : index
    %c0_41 = arith.constant 0 : index
    %110 = vector.load %arg11[%c24, %c0_41] : memref<200x512xf32, #tpu.memory_space<vmem>>, vector<8x256xf32>
    tpu.vector_store %arg11[%c24, %c0_41], %109 {strides = array<i32>} : memref<200x512xf32, #tpu.memory_space<vmem>>, vector<8x256xf32>,
    %111 = vector.extract_strided_slice %90 {offsets = [0, 4], sizes = [8, 256], strides = [1, 1]} : vector<8x324xf32> to vector<8x256xf32>
    %cst_42 = arith.constant 0.000000e+00 : f32
    %112 = vector.shape_cast %44 : vector<1x256xi1> to vector<1x256xi1>
    %113 = vector.broadcast %112 : vector<1x256xi1> to vector<8x256xi1>
    %114 = vector.broadcast %cst_42 : f32 to vector<8x256xf32>
    %115 = arith.select %113, %111, %114 : vector<8x256xi1>, vector<8x256xf32>
    %c32 = arith.constant 32 : index
    %c0_43 = arith.constant 0 : index
    %116 = vector.load %arg11[%c32, %c0_43] : memref<200x512xf32, #tpu.memory_space<vmem>>, vector<8x256xf32>
    tpu.vector_store %arg11[%c32, %c0_43], %115 {strides = array<i32>} : memref<200x512xf32, #tpu.memory_space<vmem>>, vector<8x256xf32>,
    %117 = vector.extract_strided_slice %90 {offsets = [0, 16], sizes = [8, 256], strides = [1, 1]} : vector<8x324xf32> to vector<8x256xf32>
    %cst_44 = arith.constant 0.000000e+00 : f32
    %118 = vector.shape_cast %23 : vector<1x256xi1> to vector<1x256xi1>
    %119 = vector.broadcast %118 : vector<1x256xi1> to vector<8x256xi1>
    %120 = vector.broadcast %cst_44 : f32 to vector<8x256xf32>
    %121 = arith.select %119, %117, %120 : vector<8x256xi1>, vector<8x256xf32>
    %c40 = arith.constant 40 : index
    %c0_45 = arith.constant 0 : index
    %122 = vector.load %arg11[%c40, %c0_45] : memref<200x512xf32, #tpu.memory_space<vmem>>, vector<8x256xf32>
    tpu.vector_store %arg11[%c40, %c0_45], %121 {strides = array<i32>} : memref<200x512xf32, #tpu.memory_space<vmem>>, vector<8x256xf32>,
    %123 = vector.extract_strided_slice %90 {offsets = [0, 17], sizes = [8, 256], strides = [1, 1]} : vector<8x324xf32> to vector<8x256xf32>
    %cst_46 = arith.constant 0.000000e+00 : f32
    %124 = vector.shape_cast %30 : vector<1x256xi1> to vector<1x256xi1>
    %125 = vector.broadcast %124 : vector<1x256xi1> to vector<8x256xi1>
    %126 = vector.broadcast %cst_46 : f32 to vector<8x256xf32>
    %127 = arith.select %125, %123, %126 : vector<8x256xi1>, vector<8x256xf32>
    %c48 = arith.constant 48 : index
    %c0_47 = arith.constant 0 : index
    %128 = vector.load %arg11[%c48, %c0_47] : memref<200x512xf32, #tpu.memory_space<vmem>>, vector<8x256xf32>
    tpu.vector_store %arg11[%c48, %c0_47], %127 {strides = array<i32>} : memref<200x512xf32, #tpu.memory_space<vmem>>, vector<8x256xf32>,
    %129 = vector.extract_strided_slice %90 {offsets = [0, 18], sizes = [8, 256], strides = [1, 1]} : vector<8x324xf32> to vector<8x256xf32>
    %c56 = arith.constant 56 : index
    %c0_48 = arith.constant 0 : index
    %130 = vector.load %arg11[%c56, %c0_48] : memref<200x512xf32, #tpu.memory_space<vmem>>, vector<8x256xf32>
    tpu.vector_store %arg11[%c56, %c0_48], %129 {strides = array<i32>} : memref<200x512xf32, #tpu.memory_space<vmem>>, vector<8x256xf32>,
    %131 = vector.extract_strided_slice %90 {offsets = [0, 19], sizes = [8, 256], strides = [1, 1]} : vector<8x324xf32> to vector<8x256xf32>
    %cst_49 = arith.constant 0.000000e+00 : f32
    %132 = vector.shape_cast %37 : vector<1x256xi1> to vector<1x256xi1>
    %133 = vector.broadcast %132 : vector<1x256xi1> to vector<8x256xi1>
    %134 = vector.broadcast %cst_49 : f32 to vector<8x256xf32>
    %135 = arith.select %133, %131, %134 : vector<8x256xi1>, vector<8x256xf32>
    %c64 = arith.constant 64 : index
    %c0_50 = arith.constant 0 : index
    %136 = vector.load %arg11[%c64, %c0_50] : memref<200x512xf32, #tpu.memory_space<vmem>>, vector<8x256xf32>
    tpu.vector_store %arg11[%c64, %c0_50], %135 {strides = array<i32>} : memref<200x512xf32, #tpu.memory_space<vmem>>, vector<8x256xf32>,
    %137 = vector.extract_strided_slice %90 {offsets = [0, 20], sizes = [8, 256], strides = [1, 1]} : vector<8x324xf32> to vector<8x256xf32>
    %cst_51 = arith.constant 0.000000e+00 : f32
    %138 = vector.shape_cast %44 : vector<1x256xi1> to vector<1x256xi1>
    %139 = vector.broadcast %138 : vector<1x256xi1> to vector<8x256xi1>
    %140 = vector.broadcast %cst_51 : f32 to vector<8x256xf32>
    %141 = arith.select %139, %137, %140 : vector<8x256xi1>, vector<8x256xf32>
    %c72 = arith.constant 72 : index
    %c0_52 = arith.constant 0 : index
    %142 = vector.load %arg11[%c72, %c0_52] : memref<200x512xf32, #tpu.memory_space<vmem>>, vector<8x256xf32>
    tpu.vector_store %arg11[%c72, %c0_52], %141 {strides = array<i32>} : memref<200x512xf32, #tpu.memory_space<vmem>>, vector<8x256xf32>,
    %143 = vector.extract_strided_slice %90 {offsets = [0, 32], sizes = [8, 256], strides = [1, 1]} : vector<8x324xf32> to vector<8x256xf32>
    %cst_53 = arith.constant 0.000000e+00 : f32
    %144 = vector.shape_cast %23 : vector<1x256xi1> to vector<1x256xi1>
    %145 = vector.broadcast %144 : vector<1x256xi1> to vector<8x256xi1>
    %146 = vector.broadcast %cst_53 : f32 to vector<8x256xf32>
    %147 = arith.select %145, %143, %146 : vector<8x256xi1>, vector<8x256xf32>
    %c80 = arith.constant 80 : index
    %c0_54 = arith.constant 0 : index
    %148 = vector.load %arg11[%c80, %c0_54] : memref<200x512xf32, #tpu.memory_space<vmem>>, vector<8x256xf32>
    tpu.vector_store %arg11[%c80, %c0_54], %147 {strides = array<i32>} : memref<200x512xf32, #tpu.memory_space<vmem>>, vector<8x256xf32>,
    %149 = vector.extract_strided_slice %90 {offsets = [0, 33], sizes = [8, 256], strides = [1, 1]} : vector<8x324xf32> to vector<8x256xf32>
    %cst_55 = arith.constant 0.000000e+00 : f32
    %150 = vector.shape_cast %30 : vector<1x256xi1> to vector<1x256xi1>
    %151 = vector.broadcast %150 : vector<1x256xi1> to vector<8x256xi1>
    %152 = vector.broadcast %cst_55 : f32 to vector<8x256xf32>
    %153 = arith.select %151, %149, %152 : vector<8x256xi1>, vector<8x256xf32>
    %c88 = arith.constant 88 : index
    %c0_56 = arith.constant 0 : index
    %154 = vector.load %arg11[%c88, %c0_56] : memref<200x512xf32, #tpu.memory_space<vmem>>, vector<8x256xf32>
    tpu.vector_store %arg11[%c88, %c0_56], %153 {strides = array<i32>} : memref<200x512xf32, #tpu.memory_space<vmem>>, vector<8x256xf32>,
    %155 = vector.extract_strided_slice %90 {offsets = [0, 34], sizes = [8, 256], strides = [1, 1]} : vector<8x324xf32> to vector<8x256xf32>
    %c96 = arith.constant 96 : index
    %c0_57 = arith.constant 0 : index
    %156 = vector.load %arg11[%c96, %c0_57] : memref<200x512xf32, #tpu.memory_space<vmem>>, vector<8x256xf32>
    tpu.vector_store %arg11[%c96, %c0_57], %155 {strides = array<i32>} : memref<200x512xf32, #tpu.memory_space<vmem>>, vector<8x256xf32>,
    %157 = vector.extract_strided_slice %90 {offsets = [0, 35], sizes = [8, 256], strides = [1, 1]} : vector<8x324xf32> to vector<8x256xf32>
    %cst_58 = arith.constant 0.000000e+00 : f32
    %158 = vector.shape_cast %37 : vector<1x256xi1> to vector<1x256xi1>
    %159 = vector.broadcast %158 : vector<1x256xi1> to vector<8x256xi1>
    %160 = vector.broadcast %cst_58 : f32 to vector<8x256xf32>
    %161 = arith.select %159, %157, %160 : vector<8x256xi1>, vector<8x256xf32>
    %c104 = arith.constant 104 : index
    %c0_59 = arith.constant 0 : index
    %162 = vector.load %arg11[%c104, %c0_59] : memref<200x512xf32, #tpu.memory_space<vmem>>, vector<8x256xf32>
    tpu.vector_store %arg11[%c104, %c0_59], %161 {strides = array<i32>} : memref<200x512xf32, #tpu.memory_space<vmem>>, vector<8x256xf32>,
    %163 = vector.extract_strided_slice %90 {offsets = [0, 36], sizes = [8, 256], strides = [1, 1]} : vector<8x324xf32> to vector<8x256xf32>
    %cst_60 = arith.constant 0.000000e+00 : f32
    %164 = vector.shape_cast %44 : vector<1x256xi1> to vector<1x256xi1>
    %165 = vector.broadcast %164 : vector<1x256xi1> to vector<8x256xi1>
    %166 = vector.broadcast %cst_60 : f32 to vector<8x256xf32>
    %167 = arith.select %165, %163, %166 : vector<8x256xi1>, vector<8x256xf32>
    %c112 = arith.constant 112 : index
    %c0_61 = arith.constant 0 : index
    %168 = vector.load %arg11[%c112, %c0_61] : memref<200x512xf32, #tpu.memory_space<vmem>>, vector<8x256xf32>
    tpu.vector_store %arg11[%c112, %c0_61], %167 {strides = array<i32>} : memref<200x512xf32, #tpu.memory_space<vmem>>, vector<8x256xf32>,
    %169 = vector.extract_strided_slice %90 {offsets = [0, 48], sizes = [8, 256], strides = [1, 1]} : vector<8x324xf32> to vector<8x256xf32>
    %cst_62 = arith.constant 0.000000e+00 : f32
    %170 = vector.shape_cast %23 : vector<1x256xi1> to vector<1x256xi1>
    %171 = vector.broadcast %170 : vector<1x256xi1> to vector<8x256xi1>
    %172 = vector.broadcast %cst_62 : f32 to vector<8x256xf32>
    %173 = arith.select %171, %169, %172 : vector<8x256xi1>, vector<8x256xf32>
    %c120 = arith.constant 120 : index
    %c0_63 = arith.constant 0 : index
    %174 = vector.load %arg11[%c120, %c0_63] : memref<200x512xf32, #tpu.memory_space<vmem>>, vector<8x256xf32>
    tpu.vector_store %arg11[%c120, %c0_63], %173 {strides = array<i32>} : memref<200x512xf32, #tpu.memory_space<vmem>>, vector<8x256xf32>,
    %175 = vector.extract_strided_slice %90 {offsets = [0, 49], sizes = [8, 256], strides = [1, 1]} : vector<8x324xf32> to vector<8x256xf32>
    %cst_64 = arith.constant 0.000000e+00 : f32
    %176 = vector.shape_cast %30 : vector<1x256xi1> to vector<1x256xi1>
    %177 = vector.broadcast %176 : vector<1x256xi1> to vector<8x256xi1>
    %178 = vector.broadcast %cst_64 : f32 to vector<8x256xf32>
    %179 = arith.select %177, %175, %178 : vector<8x256xi1>, vector<8x256xf32>
    %c128 = arith.constant 128 : index
    %c0_65 = arith.constant 0 : index
    %180 = vector.load %arg11[%c128, %c0_65] : memref<200x512xf32, #tpu.memory_space<vmem>>, vector<8x256xf32>
    tpu.vector_store %arg11[%c128, %c0_65], %179 {strides = array<i32>} : memref<200x512xf32, #tpu.memory_space<vmem>>, vector<8x256xf32>,
    %181 = vector.extract_strided_slice %90 {offsets = [0, 50], sizes = [8, 256], strides = [1, 1]} : vector<8x324xf32> to vector<8x256xf32>
    %c136 = arith.constant 136 : index
    %c0_66 = arith.constant 0 : index
    %182 = vector.load %arg11[%c136, %c0_66] : memref<200x512xf32, #tpu.memory_space<vmem>>, vector<8x256xf32>
    tpu.vector_store %arg11[%c136, %c0_66], %181 {strides = array<i32>} : memref<200x512xf32, #tpu.memory_space<vmem>>, vector<8x256xf32>,
    %183 = vector.extract_strided_slice %90 {offsets = [0, 51], sizes = [8, 256], strides = [1, 1]} : vector<8x324xf32> to vector<8x256xf32>
    %cst_67 = arith.constant 0.000000e+00 : f32
    %184 = vector.shape_cast %37 : vector<1x256xi1> to vector<1x256xi1>
    %185 = vector.broadcast %184 : vector<1x256xi1> to vector<8x256xi1>
    %186 = vector.broadcast %cst_67 : f32 to vector<8x256xf32>
    %187 = arith.select %185, %183, %186 : vector<8x256xi1>, vector<8x256xf32>
    %c144 = arith.constant 144 : index
    %c0_68 = arith.constant 0 : index
    %188 = vector.load %arg11[%c144, %c0_68] : memref<200x512xf32, #tpu.memory_space<vmem>>, vector<8x256xf32>
    tpu.vector_store %arg11[%c144, %c0_68], %187 {strides = array<i32>} : memref<200x512xf32, #tpu.memory_space<vmem>>, vector<8x256xf32>,
    %189 = vector.extract_strided_slice %90 {offsets = [0, 52], sizes = [8, 256], strides = [1, 1]} : vector<8x324xf32> to vector<8x256xf32>
    %cst_69 = arith.constant 0.000000e+00 : f32
    %190 = vector.shape_cast %44 : vector<1x256xi1> to vector<1x256xi1>
    %191 = vector.broadcast %190 : vector<1x256xi1> to vector<8x256xi1>
    %192 = vector.broadcast %cst_69 : f32 to vector<8x256xf32>
    %193 = arith.select %191, %189, %192 : vector<8x256xi1>, vector<8x256xf32>
    %c152 = arith.constant 152 : index
    %c0_70 = arith.constant 0 : index
    %194 = vector.load %arg11[%c152, %c0_70] : memref<200x512xf32, #tpu.memory_space<vmem>>, vector<8x256xf32>
    tpu.vector_store %arg11[%c152, %c0_70], %193 {strides = array<i32>} : memref<200x512xf32, #tpu.memory_space<vmem>>, vector<8x256xf32>,
    %195 = vector.extract_strided_slice %90 {offsets = [0, 64], sizes = [8, 256], strides = [1, 1]} : vector<8x324xf32> to vector<8x256xf32>
    %cst_71 = arith.constant 0.000000e+00 : f32
    %196 = vector.shape_cast %23 : vector<1x256xi1> to vector<1x256xi1>
    %197 = vector.broadcast %196 : vector<1x256xi1> to vector<8x256xi1>
    %198 = vector.broadcast %cst_71 : f32 to vector<8x256xf32>
    %199 = arith.select %197, %195, %198 : vector<8x256xi1>, vector<8x256xf32>
    %c160 = arith.constant 160 : index
    %c0_72 = arith.constant 0 : index
    %200 = vector.load %arg11[%c160, %c0_72] : memref<200x512xf32, #tpu.memory_space<vmem>>, vector<8x256xf32>
    tpu.vector_store %arg11[%c160, %c0_72], %199 {strides = array<i32>} : memref<200x512xf32, #tpu.memory_space<vmem>>, vector<8x256xf32>,
    %201 = vector.extract_strided_slice %90 {offsets = [0, 65], sizes = [8, 256], strides = [1, 1]} : vector<8x324xf32> to vector<8x256xf32>
    %cst_73 = arith.constant 0.000000e+00 : f32
    %202 = vector.shape_cast %30 : vector<1x256xi1> to vector<1x256xi1>
    %203 = vector.broadcast %202 : vector<1x256xi1> to vector<8x256xi1>
    %204 = vector.broadcast %cst_73 : f32 to vector<8x256xf32>
    %205 = arith.select %203, %201, %204 : vector<8x256xi1>, vector<8x256xf32>
    %c168 = arith.constant 168 : index
    %c0_74 = arith.constant 0 : index
    %206 = vector.load %arg11[%c168, %c0_74] : memref<200x512xf32, #tpu.memory_space<vmem>>, vector<8x256xf32>
    tpu.vector_store %arg11[%c168, %c0_74], %205 {strides = array<i32>} : memref<200x512xf32, #tpu.memory_space<vmem>>, vector<8x256xf32>,
    %207 = vector.extract_strided_slice %90 {offsets = [0, 66], sizes = [8, 256], strides = [1, 1]} : vector<8x324xf32> to vector<8x256xf32>
    %c176 = arith.constant 176 : index
    %c0_75 = arith.constant 0 : index
    %208 = vector.load %arg11[%c176, %c0_75] : memref<200x512xf32, #tpu.memory_space<vmem>>, vector<8x256xf32>
    tpu.vector_store %arg11[%c176, %c0_75], %207 {strides = array<i32>} : memref<200x512xf32, #tpu.memory_space<vmem>>, vector<8x256xf32>,
    %209 = vector.extract_strided_slice %90 {offsets = [0, 67], sizes = [8, 256], strides = [1, 1]} : vector<8x324xf32> to vector<8x256xf32>
    %cst_76 = arith.constant 0.000000e+00 : f32
    %210 = vector.shape_cast %37 : vector<1x256xi1> to vector<1x256xi1>
    %211 = vector.broadcast %210 : vector<1x256xi1> to vector<8x256xi1>
    %212 = vector.broadcast %cst_76 : f32 to vector<8x256xf32>
    %213 = arith.select %211, %209, %212 : vector<8x256xi1>, vector<8x256xf32>
    %c184 = arith.constant 184 : index
    %c0_77 = arith.constant 0 : index
    %214 = vector.load %arg11[%c184, %c0_77] : memref<200x512xf32, #tpu.memory_space<vmem>>, vector<8x256xf32>
    tpu.vector_store %arg11[%c184, %c0_77], %213 {strides = array<i32>} : memref<200x512xf32, #tpu.memory_space<vmem>>, vector<8x256xf32>,
    %215 = vector.extract_strided_slice %90 {offsets = [0, 68], sizes = [8, 256], strides = [1, 1]} : vector<8x324xf32> to vector<8x256xf32>
    %cst_78 = arith.constant 0.000000e+00 : f32
    %216 = vector.shape_cast %44 : vector<1x256xi1> to vector<1x256xi1>
    %217 = vector.broadcast %216 : vector<1x256xi1> to vector<8x256xi1>
    %218 = vector.broadcast %cst_78 : f32 to vector<8x256xf32>
    %219 = arith.select %217, %215, %218 : vector<8x256xi1>, vector<8x256xf32>
    %c192 = arith.constant 192 : index
    %c0_79 = arith.constant 0 : index
    %220 = vector.load %arg11[%c192, %c0_79] : memref<200x512xf32, #tpu.memory_space<vmem>>, vector<8x256xf32>
    tpu.vector_store %arg11[%c192, %c0_79], %219 {strides = array<i32>} : memref<200x512xf32, #tpu.memory_space<vmem>>, vector<8x256xf32>,
    %cst_80 = arith.constant 0.000000e+00 : f32
    %221 = vector.broadcast %cst_80 : f32 to vector<4x256xf32>
    %222 = tpu.concatenate %79, %221 in 0 : vector<4x256xf32>, vector<4x256xf32> -> vector<8x256xf32>
    %cst_81 = arith.constant 0.000000e+00 : f32
    %223 = vector.broadcast %cst_81 : f32 to vector<8x17xf32>
    %cst_82 = arith.constant 0.000000e+00 : f32
    %224 = vector.broadcast %cst_82 : f32 to vector<8x17xf32>
    %225 = tpu.concatenate %223, %222, %224 in 1 : vector<8x17xf32>, vector<8x256xf32>, vector<8x17xf32> -> vector<8x290xf32>
    %226 = vector.extract_strided_slice %225 {offsets = [0, 0], sizes = [8, 256], strides = [1, 1]} : vector<8x290xf32> to vector<8x256xf32>
    %cst_83 = arith.constant 0.000000e+00 : f32
    %227 = vector.shape_cast %68 : vector<1x256xi1> to vector<1x256xi1>
    %228 = vector.broadcast %227 : vector<1x256xi1> to vector<8x256xi1>
    %229 = vector.broadcast %cst_83 : f32 to vector<8x256xf32>
    %230 = arith.select %228, %226, %229 : vector<8x256xi1>, vector<8x256xf32>
    %c0_84 = arith.constant 0 : index
    %c0_85 = arith.constant 0 : index
    %231 = vector.load %arg12[%c0_84, %c0_85] : memref<72x512xf32, #tpu.memory_space<vmem>>, vector<8x256xf32>
    tpu.vector_store %arg12[%c0_84, %c0_85], %230 {strides = array<i32>} : memref<72x512xf32, #tpu.memory_space<vmem>>, vector<8x256xf32>,
    %232 = vector.extract_strided_slice %225 {offsets = [0, 1], sizes = [8, 256], strides = [1, 1]} : vector<8x290xf32> to vector<8x256xf32>
    %c8_86 = arith.constant 8 : index
    %c0_87 = arith.constant 0 : index
    %233 = vector.load %arg12[%c8_86, %c0_87] : memref<72x512xf32, #tpu.memory_space<vmem>>, vector<8x256xf32>
    tpu.vector_store %arg12[%c8_86, %c0_87], %232 {strides = array<i32>} : memref<72x512xf32, #tpu.memory_space<vmem>>, vector<8x256xf32>,
    %234 = vector.extract_strided_slice %225 {offsets = [0, 2], sizes = [8, 256], strides = [1, 1]} : vector<8x290xf32> to vector<8x256xf32>
    %cst_88 = arith.constant 0.000000e+00 : f32
    %235 = vector.shape_cast %75 : vector<1x256xi1> to vector<1x256xi1>
    %236 = vector.broadcast %235 : vector<1x256xi1> to vector<8x256xi1>
    %237 = vector.broadcast %cst_88 : f32 to vector<8x256xf32>
    %238 = arith.select %236, %234, %237 : vector<8x256xi1>, vector<8x256xf32>
    %c16_89 = arith.constant 16 : index
    %c0_90 = arith.constant 0 : index
    %239 = vector.load %arg12[%c16_89, %c0_90] : memref<72x512xf32, #tpu.memory_space<vmem>>, vector<8x256xf32>
    tpu.vector_store %arg12[%c16_89, %c0_90], %238 {strides = array<i32>} : memref<72x512xf32, #tpu.memory_space<vmem>>, vector<8x256xf32>,
    %240 = vector.extract_strided_slice %225 {offsets = [0, 16], sizes = [8, 256], strides = [1, 1]} : vector<8x290xf32> to vector<8x256xf32>
    %cst_91 = arith.constant 0.000000e+00 : f32
    %241 = vector.shape_cast %68 : vector<1x256xi1> to vector<1x256xi1>
    %242 = vector.broadcast %241 : vector<1x256xi1> to vector<8x256xi1>
    %243 = vector.broadcast %cst_91 : f32 to vector<8x256xf32>
    %244 = arith.select %242, %240, %243 : vector<8x256xi1>, vector<8x256xf32>
    %c24_92 = arith.constant 24 : index
    %c0_93 = arith.constant 0 : index
    %245 = vector.load %arg12[%c24_92, %c0_93] : memref<72x512xf32, #tpu.memory_space<vmem>>, vector<8x256xf32>
    tpu.vector_store %arg12[%c24_92, %c0_93], %244 {strides = array<i32>} : memref<72x512xf32, #tpu.memory_space<vmem>>, vector<8x256xf32>,
    %246 = vector.extract_strided_slice %225 {offsets = [0, 17], sizes = [8, 256], strides = [1, 1]} : vector<8x290xf32> to vector<8x256xf32>
    %c32_94 = arith.constant 32 : index
    %c0_95 = arith.constant 0 : index
    %247 = vector.load %arg12[%c32_94, %c0_95] : memref<72x512xf32, #tpu.memory_space<vmem>>, vector<8x256xf32>
    tpu.vector_store %arg12[%c32_94, %c0_95], %246 {strides = array<i32>} : memref<72x512xf32, #tpu.memory_space<vmem>>, vector<8x256xf32>,
    %248 = vector.extract_strided_slice %225 {offsets = [0, 18], sizes = [8, 256], strides = [1, 1]} : vector<8x290xf32> to vector<8x256xf32>
    %cst_96 = arith.constant 0.000000e+00 : f32
    %249 = vector.shape_cast %75 : vector<1x256xi1> to vector<1x256xi1>
    %250 = vector.broadcast %249 : vector<1x256xi1> to vector<8x256xi1>
    %251 = vector.broadcast %cst_96 : f32 to vector<8x256xf32>
    %252 = arith.select %250, %248, %251 : vector<8x256xi1>, vector<8x256xf32>
    %c40_97 = arith.constant 40 : index
    %c0_98 = arith.constant 0 : index
    %253 = vector.load %arg12[%c40_97, %c0_98] : memref<72x512xf32, #tpu.memory_space<vmem>>, vector<8x256xf32>
    tpu.vector_store %arg12[%c40_97, %c0_98], %252 {strides = array<i32>} : memref<72x512xf32, #tpu.memory_space<vmem>>, vector<8x256xf32>,
    %254 = vector.extract_strided_slice %225 {offsets = [0, 32], sizes = [8, 256], strides = [1, 1]} : vector<8x290xf32> to vector<8x256xf32>
    %cst_99 = arith.constant 0.000000e+00 : f32
    %255 = vector.shape_cast %68 : vector<1x256xi1> to vector<1x256xi1>
    %256 = vector.broadcast %255 : vector<1x256xi1> to vector<8x256xi1>
    %257 = vector.broadcast %cst_99 : f32 to vector<8x256xf32>
    %258 = arith.select %256, %254, %257 : vector<8x256xi1>, vector<8x256xf32>
    %c48_100 = arith.constant 48 : index
    %c0_101 = arith.constant 0 : index
    %259 = vector.load %arg12[%c48_100, %c0_101] : memref<72x512xf32, #tpu.memory_space<vmem>>, vector<8x256xf32>
    tpu.vector_store %arg12[%c48_100, %c0_101], %258 {strides = array<i32>} : memref<72x512xf32, #tpu.memory_space<vmem>>, vector<8x256xf32>,
    %260 = vector.extract_strided_slice %225 {offsets = [0, 33], sizes = [8, 256], strides = [1, 1]} : vector<8x290xf32> to vector<8x256xf32>
    %c56_102 = arith.constant 56 : index
    %c0_103 = arith.constant 0 : index
    %261 = vector.load %arg12[%c56_102, %c0_103] : memref<72x512xf32, #tpu.memory_space<vmem>>, vector<8x256xf32>
    tpu.vector_store %arg12[%c56_102, %c0_103], %260 {strides = array<i32>} : memref<72x512xf32, #tpu.memory_space<vmem>>, vector<8x256xf32>,
    %262 = vector.extract_strided_slice %225 {offsets = [0, 34], sizes = [8, 256], strides = [1, 1]} : vector<8x290xf32> to vector<8x256xf32>
    %cst_104 = arith.constant 0.000000e+00 : f32
    %263 = vector.shape_cast %75 : vector<1x256xi1> to vector<1x256xi1>
    %264 = vector.broadcast %263 : vector<1x256xi1> to vector<8x256xi1>
    %265 = vector.broadcast %cst_104 : f32 to vector<8x256xf32>
    %266 = arith.select %264, %262, %265 : vector<8x256xi1>, vector<8x256xf32>
    %c64_105 = arith.constant 64 : index
    %c0_106 = arith.constant 0 : index
    %267 = vector.load %arg12[%c64_105, %c0_106] : memref<72x512xf32, #tpu.memory_space<vmem>>, vector<8x256xf32>
    tpu.vector_store %arg12[%c64_105, %c0_106], %266 {strides = array<i32>} : memref<72x512xf32, #tpu.memory_space<vmem>>, vector<8x256xf32>,
    %c1 = arith.constant 1 : index
    %c0_107 = arith.constant 0 : index
    %c0_108 = arith.constant 0 : index
    %268 = vector.load %arg1[%c1, %c0_107, %c0_108] : memref<2x4x256xf32, #tpu.memory_space<vmem>>, vector<1x4x256xf32>
    %269 = vector.shape_cast %268 : vector<1x4x256xf32> to vector<4x256xf32>
    %270 = arith.truncf %269 : vector<4x256xf32> to vector<4x256xbf16>
    %cst_109 = arith.constant dense<0.000000e+00> : vector<4x256xf32>
    %271 = tpu.matmul %76, %270, %cst_109 {dimension_numbers = #tpu.dot_dimension_numbers<[1], [0], [0], [1], [0, 0, 1, 1], [], []>} : vector<4x4xbf16>, vector<4x256xbf16>, vector<4x256xf32> -> vector<4x256xf32>
    %272 = vector.broadcast %77 : vector<4x1xf32> to vector<4x256xf32>
    %273 = arith.addf %271, %272 : vector<4x256xf32>
    %cst_110 = arith.constant 0.000000e+00 : f32
    %274 = vector.broadcast %cst_110 : f32 to vector<4x256xf32>
    %275 = arith.maximumf %273, %274 : vector<4x256xf32>
    %cst_111 = arith.constant 0.000000e+00 : f32
    %276 = vector.broadcast %cst_111 : f32 to vector<4x256xf32>
    %277 = tpu.concatenate %275, %276 in 0 : vector<4x256xf32>, vector<4x256xf32> -> vector<8x256xf32>
    %cst_112 = arith.constant 0.000000e+00 : f32
    %278 = vector.broadcast %cst_112 : f32 to vector<8x34xf32>
    %cst_113 = arith.constant 0.000000e+00 : f32
    %279 = vector.broadcast %cst_113 : f32 to vector<8x34xf32>
    %280 = tpu.concatenate %278, %277, %279 in 1 : vector<8x34xf32>, vector<8x256xf32>, vector<8x34xf32> -> vector<8x324xf32>
    %281 = vector.extract_strided_slice %280 {offsets = [0, 0], sizes = [8, 256], strides = [1, 1]} : vector<8x324xf32> to vector<8x256xf32>
    %cst_114 = arith.constant 0.000000e+00 : f32
    %282 = vector.shape_cast %23 : vector<1x256xi1> to vector<1x256xi1>
    %283 = vector.broadcast %282 : vector<1x256xi1> to vector<8x256xi1>
    %284 = vector.broadcast %cst_114 : f32 to vector<8x256xf32>
    %285 = arith.select %283, %281, %284 : vector<8x256xi1>, vector<8x256xf32>
    %c0_115 = arith.constant 0 : index
    %c256 = arith.constant 256 : index
    %286 = vector.load %arg11[%c0_115, %c256] : memref<200x512xf32, #tpu.memory_space<vmem>>, vector<8x256xf32>
    tpu.vector_store %arg11[%c0_115, %c256], %285 {strides = array<i32>} : memref<200x512xf32, #tpu.memory_space<vmem>>, vector<8x256xf32>,
    %287 = vector.extract_strided_slice %280 {offsets = [0, 1], sizes = [8, 256], strides = [1, 1]} : vector<8x324xf32> to vector<8x256xf32>
    %cst_116 = arith.constant 0.000000e+00 : f32
    %288 = vector.shape_cast %30 : vector<1x256xi1> to vector<1x256xi1>
    %289 = vector.broadcast %288 : vector<1x256xi1> to vector<8x256xi1>
    %290 = vector.broadcast %cst_116 : f32 to vector<8x256xf32>
    %291 = arith.select %289, %287, %290 : vector<8x256xi1>, vector<8x256xf32>
    %c8_117 = arith.constant 8 : index
    %c256_118 = arith.constant 256 : index
    %292 = vector.load %arg11[%c8_117, %c256_118] : memref<200x512xf32, #tpu.memory_space<vmem>>, vector<8x256xf32>
    tpu.vector_store %arg11[%c8_117, %c256_118], %291 {strides = array<i32>} : memref<200x512xf32, #tpu.memory_space<vmem>>, vector<8x256xf32>,
    %293 = vector.extract_strided_slice %280 {offsets = [0, 2], sizes = [8, 256], strides = [1, 1]} : vector<8x324xf32> to vector<8x256xf32>
    %c16_119 = arith.constant 16 : index
    %c256_120 = arith.constant 256 : index
    %294 = vector.load %arg11[%c16_119, %c256_120] : memref<200x512xf32, #tpu.memory_space<vmem>>, vector<8x256xf32>
    tpu.vector_store %arg11[%c16_119, %c256_120], %293 {strides = array<i32>} : memref<200x512xf32, #tpu.memory_space<vmem>>, vector<8x256xf32>,
    %295 = vector.extract_strided_slice %280 {offsets = [0, 3], sizes = [8, 256], strides = [1, 1]} : vector<8x324xf32> to vector<8x256xf32>
    %cst_121 = arith.constant 0.000000e+00 : f32
    %296 = vector.shape_cast %37 : vector<1x256xi1> to vector<1x256xi1>
    %297 = vector.broadcast %296 : vector<1x256xi1> to vector<8x256xi1>
    %298 = vector.broadcast %cst_121 : f32 to vector<8x256xf32>
    %299 = arith.select %297, %295, %298 : vector<8x256xi1>, vector<8x256xf32>
    %c24_122 = arith.constant 24 : index
    %c256_123 = arith.constant 256 : index
    %300 = vector.load %arg11[%c24_122, %c256_123] : memref<200x512xf32, #tpu.memory_space<vmem>>, vector<8x256xf32>
    tpu.vector_store %arg11[%c24_122, %c256_123], %299 {strides = array<i32>} : memref<200x512xf32, #tpu.memory_space<vmem>>, vector<8x256xf32>,
    %301 = vector.extract_strided_slice %280 {offsets = [0, 4], sizes = [8, 256], strides = [1, 1]} : vector<8x324xf32> to vector<8x256xf32>
    %cst_124 = arith.constant 0.000000e+00 : f32
    %302 = vector.shape_cast %44 : vector<1x256xi1> to vector<1x256xi1>
    %303 = vector.broadcast %302 : vector<1x256xi1> to vector<8x256xi1>
    %304 = vector.broadcast %cst_124 : f32 to vector<8x256xf32>
    %305 = arith.select %303, %301, %304 : vector<8x256xi1>, vector<8x256xf32>
    %c32_125 = arith.constant 32 : index
    %c256_126 = arith.constant 256 : index
    %306 = vector.load %arg11[%c32_125, %c256_126] : memref<200x512xf32, #tpu.memory_space<vmem>>, vector<8x256xf32>
    tpu.vector_store %arg11[%c32_125, %c256_126], %305 {strides = array<i32>} : memref<200x512xf32, #tpu.memory_space<vmem>>, vector<8x256xf32>,
    %307 = vector.extract_strided_slice %280 {offsets = [0, 16], sizes = [8, 256], strides = [1, 1]} : vector<8x324xf32> to vector<8x256xf32>
    %cst_127 = arith.constant 0.000000e+00 : f32
    %308 = vector.shape_cast %23 : vector<1x256xi1> to vector<1x256xi1>
    %309 = vector.broadcast %308 : vector<1x256xi1> to vector<8x256xi1>
    %310 = vector.broadcast %cst_127 : f32 to vector<8x256xf32>
    %311 = arith.select %309, %307, %310 : vector<8x256xi1>, vector<8x256xf32>
    %c40_128 = arith.constant 40 : index
    %c256_129 = arith.constant 256 : index
    %312 = vector.load %arg11[%c40_128, %c256_129] : memref<200x512xf32, #tpu.memory_space<vmem>>, vector<8x256xf32>
    tpu.vector_store %arg11[%c40_128, %c256_129], %311 {strides = array<i32>} : memref<200x512xf32, #tpu.memory_space<vmem>>, vector<8x256xf32>,
    %313 = vector.extract_strided_slice %280 {offsets = [0, 17], sizes = [8, 256], strides = [1, 1]} : vector<8x324xf32> to vector<8x256xf32>
    %cst_130 = arith.constant 0.000000e+00 : f32
    %314 = vector.shape_cast %30 : vector<1x256xi1> to vector<1x256xi1>
    %315 = vector.broadcast %314 : vector<1x256xi1> to vector<8x256xi1>
    %316 = vector.broadcast %cst_130 : f32 to vector<8x256xf32>
    %317 = arith.select %315, %313, %316 : vector<8x256xi1>, vector<8x256xf32>
    %c48_131 = arith.constant 48 : index
    %c256_132 = arith.constant 256 : index
    %318 = vector.load %arg11[%c48_131, %c256_132] : memref<200x512xf32, #tpu.memory_space<vmem>>, vector<8x256xf32>
    tpu.vector_store %arg11[%c48_131, %c256_132], %317 {strides = array<i32>} : memref<200x512xf32, #tpu.memory_space<vmem>>, vector<8x256xf32>,
    %319 = vector.extract_strided_slice %280 {offsets = [0, 18], sizes = [8, 256], strides = [1, 1]} : vector<8x324xf32> to vector<8x256xf32>
    %c56_133 = arith.constant 56 : index
    %c256_134 = arith.constant 256 : index
    %320 = vector.load %arg11[%c56_133, %c256_134] : memref<200x512xf32, #tpu.memory_space<vmem>>, vector<8x256xf32>
    tpu.vector_store %arg11[%c56_133, %c256_134], %319 {strides = array<i32>} : memref<200x512xf32, #tpu.memory_space<vmem>>, vector<8x256xf32>,
    %321 = vector.extract_strided_slice %280 {offsets = [0, 19], sizes = [8, 256], strides = [1, 1]} : vector<8x324xf32> to vector<8x256xf32>
    %cst_135 = arith.constant 0.000000e+00 : f32
    %322 = vector.shape_cast %37 : vector<1x256xi1> to vector<1x256xi1>
    %323 = vector.broadcast %322 : vector<1x256xi1> to vector<8x256xi1>
    %324 = vector.broadcast %cst_135 : f32 to vector<8x256xf32>
    %325 = arith.select %323, %321, %324 : vector<8x256xi1>, vector<8x256xf32>
    %c64_136 = arith.constant 64 : index
    %c256_137 = arith.constant 256 : index
    %326 = vector.load %arg11[%c64_136, %c256_137] : memref<200x512xf32, #tpu.memory_space<vmem>>, vector<8x256xf32>
    tpu.vector_store %arg11[%c64_136, %c256_137], %325 {strides = array<i32>} : memref<200x512xf32, #tpu.memory_space<vmem>>, vector<8x256xf32>,
    %327 = vector.extract_strided_slice %280 {offsets = [0, 20], sizes = [8, 256], strides = [1, 1]} : vector<8x324xf32> to vector<8x256xf32>
    %cst_138 = arith.constant 0.000000e+00 : f32
    %328 = vector.shape_cast %44 : vector<1x256xi1> to vector<1x256xi1>
    %329 = vector.broadcast %328 : vector<1x256xi1> to vector<8x256xi1>
    %330 = vector.broadcast %cst_138 : f32 to vector<8x256xf32>
    %331 = arith.select %329, %327, %330 : vector<8x256xi1>, vector<8x256xf32>
    %c72_139 = arith.constant 72 : index
    %c256_140 = arith.constant 256 : index
    %332 = vector.load %arg11[%c72_139, %c256_140] : memref<200x512xf32, #tpu.memory_space<vmem>>, vector<8x256xf32>
    tpu.vector_store %arg11[%c72_139, %c256_140], %331 {strides = array<i32>} : memref<200x512xf32, #tpu.memory_space<vmem>>, vector<8x256xf32>,
    %333 = vector.extract_strided_slice %280 {offsets = [0, 32], sizes = [8, 256], strides = [1, 1]} : vector<8x324xf32> to vector<8x256xf32>
    %cst_141 = arith.constant 0.000000e+00 : f32
    %334 = vector.shape_cast %23 : vector<1x256xi1> to vector<1x256xi1>
    %335 = vector.broadcast %334 : vector<1x256xi1> to vector<8x256xi1>
    %336 = vector.broadcast %cst_141 : f32 to vector<8x256xf32>
    %337 = arith.select %335, %333, %336 : vector<8x256xi1>, vector<8x256xf32>
    %c80_142 = arith.constant 80 : index
    %c256_143 = arith.constant 256 : index
    %338 = vector.load %arg11[%c80_142, %c256_143] : memref<200x512xf32, #tpu.memory_space<vmem>>, vector<8x256xf32>
    tpu.vector_store %arg11[%c80_142, %c256_143], %337 {strides = array<i32>} : memref<200x512xf32, #tpu.memory_space<vmem>>, vector<8x256xf32>,
    %339 = vector.extract_strided_slice %280 {offsets = [0, 33], sizes = [8, 256], strides = [1, 1]} : vector<8x324xf32> to vector<8x256xf32>
    %cst_144 = arith.constant 0.000000e+00 : f32
    %340 = vector.shape_cast %30 : vector<1x256xi1> to vector<1x256xi1>
    %341 = vector.broadcast %340 : vector<1x256xi1> to vector<8x256xi1>
    %342 = vector.broadcast %cst_144 : f32 to vector<8x256xf32>
    %343 = arith.select %341, %339, %342 : vector<8x256xi1>, vector<8x256xf32>
    %c88_145 = arith.constant 88 : index
    %c256_146 = arith.constant 256 : index
    %344 = vector.load %arg11[%c88_145, %c256_146] : memref<200x512xf32, #tpu.memory_space<vmem>>, vector<8x256xf32>
    tpu.vector_store %arg11[%c88_145, %c256_146], %343 {strides = array<i32>} : memref<200x512xf32, #tpu.memory_space<vmem>>, vector<8x256xf32>,
    %345 = vector.extract_strided_slice %280 {offsets = [0, 34], sizes = [8, 256], strides = [1, 1]} : vector<8x324xf32> to vector<8x256xf32>
    %c96_147 = arith.constant 96 : index
    %c256_148 = arith.constant 256 : index
    %346 = vector.load %arg11[%c96_147, %c256_148] : memref<200x512xf32, #tpu.memory_space<vmem>>, vector<8x256xf32>
    tpu.vector_store %arg11[%c96_147, %c256_148], %345 {strides = array<i32>} : memref<200x512xf32, #tpu.memory_space<vmem>>, vector<8x256xf32>,
    %347 = vector.extract_strided_slice %280 {offsets = [0, 35], sizes = [8, 256], strides = [1, 1]} : vector<8x324xf32> to vector<8x256xf32>
    %cst_149 = arith.constant 0.000000e+00 : f32
    %348 = vector.shape_cast %37 : vector<1x256xi1> to vector<1x256xi1>
    %349 = vector.broadcast %348 : vector<1x256xi1> to vector<8x256xi1>
    %350 = vector.broadcast %cst_149 : f32 to vector<8x256xf32>
    %351 = arith.select %349, %347, %350 : vector<8x256xi1>, vector<8x256xf32>
    %c104_150 = arith.constant 104 : index
    %c256_151 = arith.constant 256 : index
    %352 = vector.load %arg11[%c104_150, %c256_151] : memref<200x512xf32, #tpu.memory_space<vmem>>, vector<8x256xf32>
    tpu.vector_store %arg11[%c104_150, %c256_151], %351 {strides = array<i32>} : memref<200x512xf32, #tpu.memory_space<vmem>>, vector<8x256xf32>,
    %353 = vector.extract_strided_slice %280 {offsets = [0, 36], sizes = [8, 256], strides = [1, 1]} : vector<8x324xf32> to vector<8x256xf32>
    %cst_152 = arith.constant 0.000000e+00 : f32
    %354 = vector.shape_cast %44 : vector<1x256xi1> to vector<1x256xi1>
    %355 = vector.broadcast %354 : vector<1x256xi1> to vector<8x256xi1>
    %356 = vector.broadcast %cst_152 : f32 to vector<8x256xf32>
    %357 = arith.select %355, %353, %356 : vector<8x256xi1>, vector<8x256xf32>
    %c112_153 = arith.constant 112 : index
    %c256_154 = arith.constant 256 : index
    %358 = vector.load %arg11[%c112_153, %c256_154] : memref<200x512xf32, #tpu.memory_space<vmem>>, vector<8x256xf32>
    tpu.vector_store %arg11[%c112_153, %c256_154], %357 {strides = array<i32>} : memref<200x512xf32, #tpu.memory_space<vmem>>, vector<8x256xf32>,
    %359 = vector.extract_strided_slice %280 {offsets = [0, 48], sizes = [8, 256], strides = [1, 1]} : vector<8x324xf32> to vector<8x256xf32>
    %cst_155 = arith.constant 0.000000e+00 : f32
    %360 = vector.shape_cast %23 : vector<1x256xi1> to vector<1x256xi1>
    %361 = vector.broadcast %360 : vector<1x256xi1> to vector<8x256xi1>
    %362 = vector.broadcast %cst_155 : f32 to vector<8x256xf32>
    %363 = arith.select %361, %359, %362 : vector<8x256xi1>, vector<8x256xf32>
    %c120_156 = arith.constant 120 : index
    %c256_157 = arith.constant 256 : index
    %364 = vector.load %arg11[%c120_156, %c256_157] : memref<200x512xf32, #tpu.memory_space<vmem>>, vector<8x256xf32>
    tpu.vector_store %arg11[%c120_156, %c256_157], %363 {strides = array<i32>} : memref<200x512xf32, #tpu.memory_space<vmem>>, vector<8x256xf32>,
    %365 = vector.extract_strided_slice %280 {offsets = [0, 49], sizes = [8, 256], strides = [1, 1]} : vector<8x324xf32> to vector<8x256xf32>
    %cst_158 = arith.constant 0.000000e+00 : f32
    %366 = vector.shape_cast %30 : vector<1x256xi1> to vector<1x256xi1>
    %367 = vector.broadcast %366 : vector<1x256xi1> to vector<8x256xi1>
    %368 = vector.broadcast %cst_158 : f32 to vector<8x256xf32>
    %369 = arith.select %367, %365, %368 : vector<8x256xi1>, vector<8x256xf32>
    %c128_159 = arith.constant 128 : index
    %c256_160 = arith.constant 256 : index
    %370 = vector.load %arg11[%c128_159, %c256_160] : memref<200x512xf32, #tpu.memory_space<vmem>>, vector<8x256xf32>
    tpu.vector_store %arg11[%c128_159, %c256_160], %369 {strides = array<i32>} : memref<200x512xf32, #tpu.memory_space<vmem>>, vector<8x256xf32>,
    %371 = vector.extract_strided_slice %280 {offsets = [0, 50], sizes = [8, 256], strides = [1, 1]} : vector<8x324xf32> to vector<8x256xf32>
    %c136_161 = arith.constant 136 : index
    %c256_162 = arith.constant 256 : index
    %372 = vector.load %arg11[%c136_161, %c256_162] : memref<200x512xf32, #tpu.memory_space<vmem>>, vector<8x256xf32>
    tpu.vector_store %arg11[%c136_161, %c256_162], %371 {strides = array<i32>} : memref<200x512xf32, #tpu.memory_space<vmem>>, vector<8x256xf32>,
    %373 = vector.extract_strided_slice %280 {offsets = [0, 51], sizes = [8, 256], strides = [1, 1]} : vector<8x324xf32> to vector<8x256xf32>
    %cst_163 = arith.constant 0.000000e+00 : f32
    %374 = vector.shape_cast %37 : vector<1x256xi1> to vector<1x256xi1>
    %375 = vector.broadcast %374 : vector<1x256xi1> to vector<8x256xi1>
    %376 = vector.broadcast %cst_163 : f32 to vector<8x256xf32>
    %377 = arith.select %375, %373, %376 : vector<8x256xi1>, vector<8x256xf32>
    %c144_164 = arith.constant 144 : index
    %c256_165 = arith.constant 256 : index
    %378 = vector.load %arg11[%c144_164, %c256_165] : memref<200x512xf32, #tpu.memory_space<vmem>>, vector<8x256xf32>
    tpu.vector_store %arg11[%c144_164, %c256_165], %377 {strides = array<i32>} : memref<200x512xf32, #tpu.memory_space<vmem>>, vector<8x256xf32>,
    %379 = vector.extract_strided_slice %280 {offsets = [0, 52], sizes = [8, 256], strides = [1, 1]} : vector<8x324xf32> to vector<8x256xf32>
    %cst_166 = arith.constant 0.000000e+00 : f32
    %380 = vector.shape_cast %44 : vector<1x256xi1> to vector<1x256xi1>
    %381 = vector.broadcast %380 : vector<1x256xi1> to vector<8x256xi1>
    %382 = vector.broadcast %cst_166 : f32 to vector<8x256xf32>
    %383 = arith.select %381, %379, %382 : vector<8x256xi1>, vector<8x256xf32>
    %c152_167 = arith.constant 152 : index
    %c256_168 = arith.constant 256 : index
    %384 = vector.load %arg11[%c152_167, %c256_168] : memref<200x512xf32, #tpu.memory_space<vmem>>, vector<8x256xf32>
    tpu.vector_store %arg11[%c152_167, %c256_168], %383 {strides = array<i32>} : memref<200x512xf32, #tpu.memory_space<vmem>>, vector<8x256xf32>,
    %385 = vector.extract_strided_slice %280 {offsets = [0, 64], sizes = [8, 256], strides = [1, 1]} : vector<8x324xf32> to vector<8x256xf32>
    %cst_169 = arith.constant 0.000000e+00 : f32
    %386 = vector.shape_cast %23 : vector<1x256xi1> to vector<1x256xi1>
    %387 = vector.broadcast %386 : vector<1x256xi1> to vector<8x256xi1>
    %388 = vector.broadcast %cst_169 : f32 to vector<8x256xf32>
    %389 = arith.select %387, %385, %388 : vector<8x256xi1>, vector<8x256xf32>
    %c160_170 = arith.constant 160 : index
    %c256_171 = arith.constant 256 : index
    %390 = vector.load %arg11[%c160_170, %c256_171] : memref<200x512xf32, #tpu.memory_space<vmem>>, vector<8x256xf32>
    tpu.vector_store %arg11[%c160_170, %c256_171], %389 {strides = array<i32>} : memref<200x512xf32, #tpu.memory_space<vmem>>, vector<8x256xf32>,
    %391 = vector.extract_strided_slice %280 {offsets = [0, 65], sizes = [8, 256], strides = [1, 1]} : vector<8x324xf32> to vector<8x256xf32>
    %cst_172 = arith.constant 0.000000e+00 : f32
    %392 = vector.shape_cast %30 : vector<1x256xi1> to vector<1x256xi1>
    %393 = vector.broadcast %392 : vector<1x256xi1> to vector<8x256xi1>
    %394 = vector.broadcast %cst_172 : f32 to vector<8x256xf32>
    %395 = arith.select %393, %391, %394 : vector<8x256xi1>, vector<8x256xf32>
    %c168_173 = arith.constant 168 : index
    %c256_174 = arith.constant 256 : index
    %396 = vector.load %arg11[%c168_173, %c256_174] : memref<200x512xf32, #tpu.memory_space<vmem>>, vector<8x256xf32>
    tpu.vector_store %arg11[%c168_173, %c256_174], %395 {strides = array<i32>} : memref<200x512xf32, #tpu.memory_space<vmem>>, vector<8x256xf32>,
    %397 = vector.extract_strided_slice %280 {offsets = [0, 66], sizes = [8, 256], strides = [1, 1]} : vector<8x324xf32> to vector<8x256xf32>
    %c176_175 = arith.constant 176 : index
    %c256_176 = arith.constant 256 : index
    %398 = vector.load %arg11[%c176_175, %c256_176] : memref<200x512xf32, #tpu.memory_space<vmem>>, vector<8x256xf32>
    tpu.vector_store %arg11[%c176_175, %c256_176], %397 {strides = array<i32>} : memref<200x512xf32, #tpu.memory_space<vmem>>, vector<8x256xf32>,
    %399 = vector.extract_strided_slice %280 {offsets = [0, 67], sizes = [8, 256], strides = [1, 1]} : vector<8x324xf32> to vector<8x256xf32>
    %cst_177 = arith.constant 0.000000e+00 : f32
    %400 = vector.shape_cast %37 : vector<1x256xi1> to vector<1x256xi1>
    %401 = vector.broadcast %400 : vector<1x256xi1> to vector<8x256xi1>
    %402 = vector.broadcast %cst_177 : f32 to vector<8x256xf32>
    %403 = arith.select %401, %399, %402 : vector<8x256xi1>, vector<8x256xf32>
    %c184_178 = arith.constant 184 : index
    %c256_179 = arith.constant 256 : index
    %404 = vector.load %arg11[%c184_178, %c256_179] : memref<200x512xf32, #tpu.memory_space<vmem>>, vector<8x256xf32>
    tpu.vector_store %arg11[%c184_178, %c256_179], %403 {strides = array<i32>} : memref<200x512xf32, #tpu.memory_space<vmem>>, vector<8x256xf32>,
    %405 = vector.extract_strided_slice %280 {offsets = [0, 68], sizes = [8, 256], strides = [1, 1]} : vector<8x324xf32> to vector<8x256xf32>
    %cst_180 = arith.constant 0.000000e+00 : f32
    %406 = vector.shape_cast %44 : vector<1x256xi1> to vector<1x256xi1>
    %407 = vector.broadcast %406 : vector<1x256xi1> to vector<8x256xi1>
    %408 = vector.broadcast %cst_180 : f32 to vector<8x256xf32>
    %409 = arith.select %407, %405, %408 : vector<8x256xi1>, vector<8x256xf32>
    %c192_181 = arith.constant 192 : index
    %c256_182 = arith.constant 256 : index
    %410 = vector.load %arg11[%c192_181, %c256_182] : memref<200x512xf32, #tpu.memory_space<vmem>>, vector<8x256xf32>
    tpu.vector_store %arg11[%c192_181, %c256_182], %409 {strides = array<i32>} : memref<200x512xf32, #tpu.memory_space<vmem>>, vector<8x256xf32>,
    %cst_183 = arith.constant 0.000000e+00 : f32
    %411 = vector.broadcast %cst_183 : f32 to vector<4x256xf32>
    %412 = tpu.concatenate %269, %411 in 0 : vector<4x256xf32>, vector<4x256xf32> -> vector<8x256xf32>
    %cst_184 = arith.constant 0.000000e+00 : f32
    %413 = vector.broadcast %cst_184 : f32 to vector<8x17xf32>
    %cst_185 = arith.constant 0.000000e+00 : f32
    %414 = vector.broadcast %cst_185 : f32 to vector<8x17xf32>
    %415 = tpu.concatenate %413, %412, %414 in 1 : vector<8x17xf32>, vector<8x256xf32>, vector<8x17xf32> -> vector<8x290xf32>
    %416 = vector.extract_strided_slice %415 {offsets = [0, 0], sizes = [8, 256], strides = [1, 1]} : vector<8x290xf32> to vector<8x256xf32>
    %cst_186 = arith.constant 0.000000e+00 : f32
    %417 = vector.shape_cast %68 : vector<1x256xi1> to vector<1x256xi1>
    %418 = vector.broadcast %417 : vector<1x256xi1> to vector<8x256xi1>
    %419 = vector.broadcast %cst_186 : f32 to vector<8x256xf32>
    %420 = arith.select %418, %416, %419 : vector<8x256xi1>, vector<8x256xf32>
    %c0_187 = arith.constant 0 : index
    %c256_188 = arith.constant 256 : index
    %421 = vector.load %arg12[%c0_187, %c256_188] : memref<72x512xf32, #tpu.memory_space<vmem>>, vector<8x256xf32>
    tpu.vector_store %arg12[%c0_187, %c256_188], %420 {strides = array<i32>} : memref<72x512xf32, #tpu.memory_space<vmem>>, vector<8x256xf32>,
    %422 = vector.extract_strided_slice %415 {offsets = [0, 1], sizes = [8, 256], strides = [1, 1]} : vector<8x290xf32> to vector<8x256xf32>
    %c8_189 = arith.constant 8 : index
    %c256_190 = arith.constant 256 : index
    %423 = vector.load %arg12[%c8_189, %c256_190] : memref<72x512xf32, #tpu.memory_space<vmem>>, vector<8x256xf32>
    tpu.vector_store %arg12[%c8_189, %c256_190], %422 {strides = array<i32>} : memref<72x512xf32, #tpu.memory_space<vmem>>, vector<8x256xf32>,
    %424 = vector.extract_strided_slice %415 {offsets = [0, 2], sizes = [8, 256], strides = [1, 1]} : vector<8x290xf32> to vector<8x256xf32>
    %cst_191 = arith.constant 0.000000e+00 : f32
    %425 = vector.shape_cast %75 : vector<1x256xi1> to vector<1x256xi1>
    %426 = vector.broadcast %425 : vector<1x256xi1> to vector<8x256xi1>
    %427 = vector.broadcast %cst_191 : f32 to vector<8x256xf32>
    %428 = arith.select %426, %424, %427 : vector<8x256xi1>, vector<8x256xf32>
    %c16_192 = arith.constant 16 : index
    %c256_193 = arith.constant 256 : index
    %429 = vector.load %arg12[%c16_192, %c256_193] : memref<72x512xf32, #tpu.memory_space<vmem>>, vector<8x256xf32>
    tpu.vector_store %arg12[%c16_192, %c256_193], %428 {strides = array<i32>} : memref<72x512xf32, #tpu.memory_space<vmem>>, vector<8x256xf32>,
    %430 = vector.extract_strided_slice %415 {offsets = [0, 16], sizes = [8, 256], strides = [1, 1]} : vector<8x290xf32> to vector<8x256xf32>
    %cst_194 = arith.constant 0.000000e+00 : f32
    %431 = vector.shape_cast %68 : vector<1x256xi1> to vector<1x256xi1>
    %432 = vector.broadcast %431 : vector<1x256xi1> to vector<8x256xi1>
    %433 = vector.broadcast %cst_194 : f32 to vector<8x256xf32>
    %434 = arith.select %432, %430, %433 : vector<8x256xi1>, vector<8x256xf32>
    %c24_195 = arith.constant 24 : index
    %c256_196 = arith.constant 256 : index
    %435 = vector.load %arg12[%c24_195, %c256_196] : memref<72x512xf32, #tpu.memory_space<vmem>>, vector<8x256xf32>
    tpu.vector_store %arg12[%c24_195, %c256_196], %434 {strides = array<i32>} : memref<72x512xf32, #tpu.memory_space<vmem>>, vector<8x256xf32>,
    %436 = vector.extract_strided_slice %415 {offsets = [0, 17], sizes = [8, 256], strides = [1, 1]} : vector<8x290xf32> to vector<8x256xf32>
    %c32_197 = arith.constant 32 : index
    %c256_198 = arith.constant 256 : index
    %437 = vector.load %arg12[%c32_197, %c256_198] : memref<72x512xf32, #tpu.memory_space<vmem>>, vector<8x256xf32>
    tpu.vector_store %arg12[%c32_197, %c256_198], %436 {strides = array<i32>} : memref<72x512xf32, #tpu.memory_space<vmem>>, vector<8x256xf32>,
    %438 = vector.extract_strided_slice %415 {offsets = [0, 18], sizes = [8, 256], strides = [1, 1]} : vector<8x290xf32> to vector<8x256xf32>
    %cst_199 = arith.constant 0.000000e+00 : f32
    %439 = vector.shape_cast %75 : vector<1x256xi1> to vector<1x256xi1>
    %440 = vector.broadcast %439 : vector<1x256xi1> to vector<8x256xi1>
    %441 = vector.broadcast %cst_199 : f32 to vector<8x256xf32>
    %442 = arith.select %440, %438, %441 : vector<8x256xi1>, vector<8x256xf32>
    %c40_200 = arith.constant 40 : index
    %c256_201 = arith.constant 256 : index
    %443 = vector.load %arg12[%c40_200, %c256_201] : memref<72x512xf32, #tpu.memory_space<vmem>>, vector<8x256xf32>
    tpu.vector_store %arg12[%c40_200, %c256_201], %442 {strides = array<i32>} : memref<72x512xf32, #tpu.memory_space<vmem>>, vector<8x256xf32>,
    %444 = vector.extract_strided_slice %415 {offsets = [0, 32], sizes = [8, 256], strides = [1, 1]} : vector<8x290xf32> to vector<8x256xf32>
    %cst_202 = arith.constant 0.000000e+00 : f32
    %445 = vector.shape_cast %68 : vector<1x256xi1> to vector<1x256xi1>
    %446 = vector.broadcast %445 : vector<1x256xi1> to vector<8x256xi1>
    %447 = vector.broadcast %cst_202 : f32 to vector<8x256xf32>
    %448 = arith.select %446, %444, %447 : vector<8x256xi1>, vector<8x256xf32>
    %c48_203 = arith.constant 48 : index
    %c256_204 = arith.constant 256 : index
    %449 = vector.load %arg12[%c48_203, %c256_204] : memref<72x512xf32, #tpu.memory_space<vmem>>, vector<8x256xf32>
    tpu.vector_store %arg12[%c48_203, %c256_204], %448 {strides = array<i32>} : memref<72x512xf32, #tpu.memory_space<vmem>>, vector<8x256xf32>,
    %450 = vector.extract_strided_slice %415 {offsets = [0, 33], sizes = [8, 256], strides = [1, 1]} : vector<8x290xf32> to vector<8x256xf32>
    %c56_205 = arith.constant 56 : index
    %c256_206 = arith.constant 256 : index
    %451 = vector.load %arg12[%c56_205, %c256_206] : memref<72x512xf32, #tpu.memory_space<vmem>>, vector<8x256xf32>
    tpu.vector_store %arg12[%c56_205, %c256_206], %450 {strides = array<i32>} : memref<72x512xf32, #tpu.memory_space<vmem>>, vector<8x256xf32>,
    %452 = vector.extract_strided_slice %415 {offsets = [0, 34], sizes = [8, 256], strides = [1, 1]} : vector<8x290xf32> to vector<8x256xf32>
    %cst_207 = arith.constant 0.000000e+00 : f32
    %453 = vector.shape_cast %75 : vector<1x256xi1> to vector<1x256xi1>
    %454 = vector.broadcast %453 : vector<1x256xi1> to vector<8x256xi1>
    %455 = vector.broadcast %cst_207 : f32 to vector<8x256xf32>
    %456 = arith.select %454, %452, %455 : vector<8x256xi1>, vector<8x256xf32>
    %c64_208 = arith.constant 64 : index
    %c256_209 = arith.constant 256 : index
    %457 = vector.load %arg12[%c64_208, %c256_209] : memref<72x512xf32, #tpu.memory_space<vmem>>, vector<8x256xf32>
    tpu.vector_store %arg12[%c64_208, %c256_209], %456 {strides = array<i32>} : memref<72x512xf32, #tpu.memory_space<vmem>>, vector<8x256xf32>,
    %c0_210 = arith.constant 0 : index
    %c0_211 = arith.constant 0 : index
    %458 = vector.load %arg4[%c0_210, %c0_211] : memref<4x200xbf16, #tpu.memory_space<vmem>>, vector<4x200xbf16>
    %c0_212 = arith.constant 0 : index
    %c0_213 = arith.constant 0 : index
    %459 = vector.load %arg11[%c0_212, %c0_213] : memref<200x512xf32, #tpu.memory_space<vmem>>, vector<200x512xf32>
    %460 = arith.truncf %459 : vector<200x512xf32> to vector<200x512xbf16>
    %cst_214 = arith.constant dense<0.000000e+00> : vector<4x512xf32>
    %461 = tpu.matmul %458, %460, %cst_214 {dimension_numbers = #tpu.dot_dimension_numbers<[1], [0], [0], [1], [0, 0, 1, 1], [], []>} : vector<4x200xbf16>, vector<200x512xbf16>, vector<4x512xf32> -> vector<4x512xf32>
    %c0_215 = arith.constant 0 : index
    %c0_216 = arith.constant 0 : index
    %462 = vector.load %arg5[%c0_215, %c0_216] : memref<4x1xf32, #tpu.memory_space<vmem>>, vector<4x1xf32>
    %463 = vector.broadcast %462 : vector<4x1xf32> to vector<4x512xf32>
    %464 = arith.addf %461, %463 : vector<4x512xf32>
    %cst_217 = arith.constant 0.000000e+00 : f32
    %465 = vector.broadcast %cst_217 : f32 to vector<4x512xf32>
    %466 = arith.maximumf %464, %465 : vector<4x512xf32>
    %c0_218 = arith.constant 0 : index
    %c0_219 = arith.constant 0 : index
    %467 = vector.load %arg6[%c0_218, %c0_219] : memref<8x4xbf16, #tpu.memory_space<vmem>>, vector<8x4xbf16>
    %468 = arith.truncf %466 : vector<4x512xf32> to vector<4x512xbf16>
    %cst_220 = arith.constant dense<0.000000e+00> : vector<8x512xf32>
    %469 = tpu.matmul %467, %468, %cst_220 {dimension_numbers = #tpu.dot_dimension_numbers<[1], [0], [0], [1], [0, 0, 1, 1], [], []>} : vector<8x4xbf16>, vector<4x512xbf16>, vector<8x512xf32> -> vector<8x512xf32>
    %c0_221 = arith.constant 0 : index
    %c0_222 = arith.constant 0 : index
    %470 = vector.load %arg7[%c0_221, %c0_222] : memref<8x1xf32, #tpu.memory_space<vmem>>, vector<8x1xf32>
    %471 = vector.broadcast %470 : vector<8x1xf32> to vector<8x512xf32>
    %472 = arith.addf %469, %471 : vector<8x512xf32>
    %c0_223 = arith.constant 0 : index
    %c0_224 = arith.constant 0 : index
    %473 = vector.load %arg8[%c0_223, %c0_224] : memref<8x72xbf16, #tpu.memory_space<vmem>>, vector<8x72xbf16>
    %c0_225 = arith.constant 0 : index
    %c0_226 = arith.constant 0 : index
    %474 = vector.load %arg12[%c0_225, %c0_226] : memref<72x512xf32, #tpu.memory_space<vmem>>, vector<72x512xf32>
    %475 = arith.truncf %474 : vector<72x512xf32> to vector<72x512xbf16>
    %cst_227 = arith.constant dense<0.000000e+00> : vector<8x512xf32>
    %476 = tpu.matmul %473, %475, %cst_227 {dimension_numbers = #tpu.dot_dimension_numbers<[1], [0], [0], [1], [0, 0, 1, 1], [], []>} : vector<8x72xbf16>, vector<72x512xbf16>, vector<8x512xf32> -> vector<8x512xf32>
    %c0_228 = arith.constant 0 : index
    %c0_229 = arith.constant 0 : index
    %477 = vector.load %arg9[%c0_228, %c0_229] : memref<8x1xf32, #tpu.memory_space<vmem>>, vector<8x1xf32>
    %478 = vector.broadcast %477 : vector<8x1xf32> to vector<8x512xf32>
    %479 = arith.addf %476, %478 : vector<8x512xf32>
    %480 = vector.extract_strided_slice %472 {offsets = [0, 0], sizes = [8, 256], strides = [1, 1]} : vector<8x512xf32> to vector<8x256xf32>
    %481 = vector.extract_strided_slice %479 {offsets = [0, 0], sizes = [8, 256], strides = [1, 1]} : vector<8x512xf32> to vector<8x256xf32>
    %482 = arith.addf %480, %481 : vector<8x256xf32>
    %cst_230 = arith.constant 0.000000e+00 : f32
    %483 = vector.broadcast %cst_230 : f32 to vector<8x256xf32>
    %484 = arith.maximumf %482, %483 : vector<8x256xf32>
    %c0_231 = arith.constant 0 : index
    %c0_232 = arith.constant 0 : index
    %c0_233 = arith.constant 0 : index
    %485 = vector.load %arg10[%c0_231, %c0_232, %c0_233] : memref<2x8x256xf32, #tpu.memory_space<vmem>>, vector<1x8x256xf32>
    %486 = vector.shape_cast %485 : vector<1x8x256xf32> to vector<8x256xf32>
    %487 = vector.shape_cast %484 : vector<8x256xf32> to vector<1x8x256xf32>
    tpu.vector_store %arg10[%c0_231, %c0_232, %c0_233], %487 {strides = array<i32>} : memref<2x8x256xf32, #tpu.memory_space<vmem>>, vector<1x8x256xf32>,
    %488 = vector.extract_strided_slice %472 {offsets = [0, 256], sizes = [8, 256], strides = [1, 1]} : vector<8x512xf32> to vector<8x256xf32>
    %489 = vector.extract_strided_slice %479 {offsets = [0, 256], sizes = [8, 256], strides = [1, 1]} : vector<8x512xf32> to vector<8x256xf32>
    %490 = arith.addf %488, %489 : vector<8x256xf32>
    %cst_234 = arith.constant 0.000000e+00 : f32
    %491 = vector.broadcast %cst_234 : f32 to vector<8x256xf32>
    %492 = arith.maximumf %490, %491 : vector<8x256xf32>
    %c1_235 = arith.constant 1 : index
    %c0_236 = arith.constant 0 : index
    %c0_237 = arith.constant 0 : index
    %493 = vector.load %arg10[%c1_235, %c0_236, %c0_237] : memref<2x8x256xf32, #tpu.memory_space<vmem>>, vector<1x8x256xf32>
    %494 = vector.shape_cast %493 : vector<1x8x256xf32> to vector<8x256xf32>
    %495 = vector.shape_cast %492 : vector<8x256xf32> to vector<1x8x256xf32>
    tpu.vector_store %arg10[%c1_235, %c0_236, %c0_237], %495 {strides = array<i32>} : memref<2x8x256xf32, #tpu.memory_space<vmem>>, vector<1x8x256xf32>,
    return
  }
  func.func @transform_0(%arg0: i32) -> (i32, i32, i32) {
    %c0_i32 = arith.constant 0 : i32
    %c0_i32_0 = arith.constant 0 : i32
    %c0_i32_1 = arith.constant 0 : i32
    return %arg0, %c0_i32, %c0_i32_0 : i32, i32, i32
  }
  func.func @transform_1(%arg0: i32) -> (i32, i32) {
    %c0_i32 = arith.constant 0 : i32
    %c0_i32_0 = arith.constant 0 : i32
    %c0_i32_1 = arith.constant 0 : i32
    return %c0_i32, %c0_i32_0 : i32, i32
  }
  func.func @transform_2(%arg0: i32) -> (i32, i32) {
    %c0_i32 = arith.constant 0 : i32
    %c0_i32_0 = arith.constant 0 : i32
    %c0_i32_1 = arith.constant 0 : i32
    return %c0_i32, %c0_i32_0 : i32, i32
  }
  func.func @transform_3(%arg0: i32) -> (i32, i32) {
    %c0_i32 = arith.constant 0 : i32
    %c0_i32_0 = arith.constant 0 : i32
    %c0_i32_1 = arith.constant 0 : i32
    return %c0_i32, %c0_i32_0 : i32, i32
  }
  func.func @transform_4(%arg0: i32) -> (i32, i32) {
    %c0_i32 = arith.constant 0 : i32
    %c0_i32_0 = arith.constant 0 : i32
    %c0_i32_1 = arith.constant 0 : i32
    return %c0_i32, %c0_i32_0 : i32, i32
  }
  func.func @transform_5(%arg0: i32) -> (i32, i32) {
    %c0_i32 = arith.constant 0 : i32
    %c0_i32_0 = arith.constant 0 : i32
    %c0_i32_1 = arith.constant 0 : i32
    return %c0_i32, %c0_i32_0 : i32, i32
  }
  func.func @transform_6(%arg0: i32) -> (i32, i32) {
    %c0_i32 = arith.constant 0 : i32
    %c0_i32_0 = arith.constant 0 : i32
    %c0_i32_1 = arith.constant 0 : i32
    return %c0_i32, %c0_i32_0 : i32, i32
  }
  func.func @transform_7(%arg0: i32) -> (i32, i32) {
    %c0_i32 = arith.constant 0 : i32
    %c0_i32_0 = arith.constant 0 : i32
    %c0_i32_1 = arith.constant 0 : i32
    return %c0_i32, %c0_i32_0 : i32, i32
  }
  func.func @transform_8(%arg0: i32) -> (i32, i32) {
    %c0_i32 = arith.constant 0 : i32
    %c0_i32_0 = arith.constant 0 : i32
    %c0_i32_1 = arith.constant 0 : i32
    return %c0_i32, %c0_i32_0 : i32, i32
  }
  func.func @transform_9(%arg0: i32) -> (i32, i32, i32) {
    %c0_i32 = arith.constant 0 : i32
    %c0_i32_0 = arith.constant 0 : i32
    %c0_i32_1 = arith.constant 0 : i32
    return %arg0, %c0_i32, %c0_i32_0 : i32, i32, i32
  }
}

</mosaic_0001>

<llo_original>
// kernel: bottleneck_forward.1
$region0: #{bottleneck_forward.1}
  #allocation0 [shape = 'u32[]', space=smem, size = 0x4, offset = 0x4, fixed_abs, tag = 'smem constant byte address 0x4 - core index']
  #allocation1 [shape = 'u32[144,128]{1,0:T(1,128)}', space=vmem, size = 0x12000, scoped, tag = 'internal scratch']
  #allocation2 [shape = 'f32[200,512]{1,0:T(8,128)}', space=vmem, size = 0x64000, scoped, tag = 'scratch operand']
  #allocation3 [shape = 'f32[72,512]{1,0:T(8,128)}', space=vmem, size = 0x24000, scoped, tag = 'scratch operand']
  %s0 = inlined_call_operand.vmem [shape: f32[2,4,256], index: 0, kind: input, shape index: {}]
  %s1 = inlined_call_operand.vmem [shape: bf16[4,4], index: 1, kind: input, shape index: {}]
  %s2 = inlined_call_operand.vmem [shape: f32[4,1], index: 2, kind: input, shape index: {}]
  %s3 = inlined_call_operand.vmem [shape: bf16[4,200], index: 3, kind: input, shape index: {}]
  %s4 = inlined_call_operand.vmem [shape: f32[4,1], index: 4, kind: input, shape index: {}]
  %s5 = inlined_call_operand.vmem [shape: bf16[8,4], index: 5, kind: input, shape index: {}]
  %s6 = inlined_call_operand.vmem [shape: f32[8,1], index: 6, kind: input, shape index: {}]
  %s7 = inlined_call_operand.vmem [shape: bf16[8,72], index: 7, kind: input, shape index: {}]
  %s8 = inlined_call_operand.vmem [shape: f32[8,1], index: 8, kind: input, shape index: {}]
  %s9 = inlined_call_operand.vmem [shape: f32[2,8,256], index: 9, kind: output, shape index: {}]
  %s10 = sld [smem:[#allocation0]]
  $region46: #{bottleneck_forward.1} parent=0
    _
  %s12 = ssub.s32 1, %s10
  %s13 = scalar_select 0, %s12, %s10
  // Predicated region
  $region2: #{bottleneck_forward.1} parent=0 // pred_check
    _
  $region3: #{bottleneck_forward.1} parent=0 // pred_check_branch
    %15 = sbr.rel (0) target = $region5
  $region4: #{bottleneck_forward.1} parent=0 // pred_region
    _
  $region5: #{bottleneck_forward.1} parent=0 // pred_fallthru
    _
  // Predicated region
  $region6: #{bottleneck_forward.1} parent=0 // pred_check
    _
  $region7: #{bottleneck_forward.1} parent=0 // pred_check_branch
    %17 = sbr.rel (0) target = $region9
  $region8: #{bottleneck_forward.1} parent=0 // pred_region
    _
  $region9: #{bottleneck_forward.1} parent=0 // pred_fallthru
    _
  // Predicated region
  $region10: #{bottleneck_forward.1} parent=0 // pred_check
    _
  $region11: #{bottleneck_forward.1} parent=0 // pred_check_branch
    %19 = sbr.rel (0) target = $region13
  $region12: #{bottleneck_forward.1} parent=0 // pred_region
    _
  $region13: #{bottleneck_forward.1} parent=0 // pred_fallthru
    _
  // Predicated region
  $region14: #{bottleneck_forward.1} parent=0 // pred_check
    _
  $region15: #{bottleneck_forward.1} parent=0 // pred_check_branch
    %21 = sbr.rel (0) target = $region17
  $region16: #{bottleneck_forward.1} parent=0 // pred_region
    _
  $region17: #{bottleneck_forward.1} parent=0 // pred_fallthru
    _
  // Predicated region
  $region18: #{bottleneck_forward.1} parent=0 // pred_check
    _
  $region19: #{bottleneck_forward.1} parent=0 // pred_check_branch
    %23 = sbr.rel (0) target = $region21
  $region20: #{bottleneck_forward.1} parent=0 // pred_region
    _
  $region21: #{bottleneck_forward.1} parent=0 // pred_fallthru
    _
  // Predicated region
  $region22: #{bottleneck_forward.1} parent=0 // pred_check
    _
  $region23: #{bottleneck_forward.1} parent=0 // pred_check_branch
    %25 = sbr.rel (0) target = $region25
  $region24: #{bottleneck_forward.1} parent=0 // pred_region
    _
  $region25: #{bottleneck_forward.1} parent=0 // pred_fallthru
    _
  // Predicated region
  $region26: #{bottleneck_forward.1} parent=0 // pred_check
    _
  $region27: #{bottleneck_forward.1} parent=0 // pred_check_branch
    %27 = sbr.rel (0) target = $region29
  $region28: #{bottleneck_forward.1} parent=0 // pred_region
    _
  $region29: #{bottleneck_forward.1} parent=0 // pred_fallthru
    _
  // Predicated region
  $region30: #{bottleneck_forward.1} parent=0 // pred_check
    _
  $region31: #{bottleneck_forward.1} parent=0 // pred_check_branch
    %29 = sbr.rel (0) target = $region33
  $region32: #{bottleneck_forward.1} parent=0 // pred_region
    _
  $region33: #{bottleneck_forward.1} parent=0 // pred_fallthru
    _
  // Predicated region
  $region34: #{bottleneck_forward.1} parent=0 // pred_check
    _
  $region35: #{bottleneck_forward.1} parent=0 // pred_check_branch
    %31 = sbr.rel (0) target = $region37
  $region36: #{bottleneck_forward.1} parent=0 // pred_region
    _
  $region37: #{bottleneck_forward.1} parent=0 // pred_fallthru
    _
  %v33 = vlaneseq
  %v34 = vand.u32 %v33, 127
  %v35 = vadd.s32 %v34, 128
  %vm36 = vcmp.lt.s32.totalorder %v34, 0
  %v37 = vsub.s32 0, %v34
  %v38 = vsel %vm36, %v37, %v34
  %v39 = vshrl.u32 %v38, 4
  %v40 = vand.u32 %v38, 15
  %v41 = vsub.s32 0, %v40
  %v42 = vsel %vm36, %v41, %v40
  %vm43 = vcmp.lt.s32.totalorder %v35, 0
  %v44 = vsub.s32 0, %v35
  %v45 = vsel %vm43, %v44, %v35
  %v46 = vshrl.u32 %v45, 4
  %v47 = vand.u32 %v45, 15
  %v48 = vsub.s32 0, %v47
  %v49 = vsel %vm43, %v48, %v47
  %vm50 = vcmp.ne.s32.totalorder %v42, 0
  %vm51 = vcmp.ne.s32.totalorder %v49, 0
  %vm52 = vcmp.lt.s32.totalorder %v42, 0
  %vm53 = vcmp.lt.s32.totalorder %v49, 0
  %vm54 = vmand %vm52, %vm50
  %vm55 = vmand %vm53, %vm51
  %v56 = vadd.s32 %v42, 16
  %v57 = vadd.s32 %v49, 16
  %v58 = vsel %vm54, %v56, %v42
  %v59 = vsel %vm55, %v57, %v49
  %v60 = vadd.s32 %v58, 4294967294
  %v61 = vadd.s32 %v59, 4294967294
  %vm62 = vcmp.ge.s32.totalorder %v60, 0
  %vm63 = vcmp.ge.s32.totalorder %v61, 0
  %vm64 = vcmp.lt.s32.totalorder %v60, 16
  %vm65 = vcmp.lt.s32.totalorder %v61, 16
  %vm66 = vmand %vm62, %vm64
  %vm67 = vmand %vm63, %vm65
  %v68 = vadd.s32 %v58, 4294967295
  %v69 = vadd.s32 %v59, 4294967295
  %vm70 = vcmp.ge.s32.totalorder %v68, 0
  %vm71 = vcmp.ge.s32.totalorder %v69, 0
  %vm72 = vcmp.lt.s32.totalorder %v68, 16
  %vm73 = vcmp.lt.s32.totalorder %v69, 16
  %vm74 = vmand %vm70, %vm72
  %vm75 = vmand %vm71, %vm73
  %v76 = vadd.s32 %v58, 1
  %v77 = vadd.s32 %v59, 1
  %vm78 = vcmp.ge.s32.totalorder %v76, 0
  %vm79 = vcmp.ge.s32.totalorder %v77, 0
  %vm80 = vcmp.lt.s32.totalorder %v76, 16
  %vm81 = vcmp.lt.s32.totalorder %v77, 16
  %vm82 = vmand %vm78, %vm80
  %vm83 = vmand %vm79, %vm81
  %v84 = vadd.s32 %v58, 2
  %v85 = vadd.s32 %v59, 2
  %vm86 = vcmp.ge.s32.totalorder %v84, 0
  %vm87 = vcmp.ge.s32.totalorder %v85, 0
  %vm88 = vcmp.lt.s32.totalorder %v84, 16
  %vm89 = vcmp.lt.s32.totalorder %v85, 16
  %vm90 = vmand %vm86, %vm88
  %vm91 = vmand %vm87, %vm89
  %v92 = vld [vmem:[%s1] sm:$0x3]
  %v93 = vld [vmem:[%s2] sm:$0xf]
  %v94 = vld [vmem:[%s0] sm:$0xff]
  %v96 = vcombine.high %v94, %v94
  %v98 = vpack.c.bf16 %v94, %v94
  %v99 = vpack.c.bf16 %v96, %v96
  %101 = vset.pattern.permute.xlu0 0
  %102 = vperm.xlu0 %101, %v93
  %v103 = vpop.permute.xlu0 %102
  %vm105 = vcmask 31744
  %v107 = vsel %vm105, %v92, 0
  %vm109 = vcmask 1041408
  %v111 = vsel %vm109, %v98, 0
  %v114 = vsel %vm109, %v99, 0
  %116 = vmatprep.subr.bf16.mxu0 0
  %117 = vmatpush1.bf16.msra.mxu0 0
  %118 = vmatprep.subr.bf16.mxu0 0
  %119 = vmatpush1.bf16.msra.mxu0 0
  %120 = vmatprep.subr.bf16.mxu0 0
  %121 = vmatpush1.bf16.msra.mxu0 0
  %122 = vmatprep.subr.bf16.mxu0 0
  %123 = vmatpush1.bf16.msra.mxu0 0
  %124 = vmatprep.subr.bf16.mxu0 0
  %125 = vmatpush1.bf16.msra.mxu0 0
  %126 = vmatprep.subr.bf16.mxu0 0
  %127 = vmatpush1.bf16.msra.mxu0 0
  %128 = vmatprep.subr.bf16.mxu0 0
  %129 = vmatpush1.bf16.msra.mxu0 0
  %130 = vmatprep.subr.bf16.mxu0 %v114
  %131 = vmatpush1.bf16.msra.mxu0 %v111
  %132 = vmatprep.subr.bf16.mxu0 0
  %133 = vmatpush2.bf16.msra.mxu0 0
  %134 = vmatprep.subr.bf16.mxu0 0
  %135 = vmatpush2.bf16.msra.mxu0 0
  %136 = vmatprep.subr.bf16.mxu0 0
  %137 = vmatpush2.bf16.msra.mxu0 0
  %138 = vmatprep.subr.bf16.mxu0 0
  %139 = vmatpush2.bf16.msra.mxu0 0
  %140 = vmatprep.subr.bf16.mxu0 0
  %141 = vmatpush2.bf16.msra.mxu0 0
  %142 = vmatprep.subr.bf16.mxu0 0
  %143 = vmatpush2.bf16.msra.mxu0 0
  %144 = vmatprep.subr.bf16.mxu0 0
  %145 = vmatpush2.bf16.msra.mxu0 0
  %146 = vmatprep.subr.bf16.mxu0 0
  %147 = vmatpush2.bf16.msra.mxu0 0
  %148 = vmatprep.mubr.bf16.mxu0 0
  %149 = vmatmul.mubr.bf16.gmra.mxu0 %v107
  %v150 = vpop.f32.mrf.mxu0
  %v151 = vadd.f32 %v103, %v150
  %v152 = vpop.f32.mrf.mxu0
  %v153 = vadd.f32 %v103, %v152
  %v154 = vpop.f32.mrf.mxu0
  %v155 = vpop.f32.mrf.mxu0
  %156 = vdwg.mxu0
  %v157 = vmax.f32 %v151, 0.0
  %v158 = vmax.f32 %v153, 0.0
  %vm159 = vcmask 1043456
  %v160 = vsel %vm159, %v157, 0.0
  %v161 = vsel %vm159, %v158, 0.0
  %164 = vrot.lane.b32.xlu0 %v160, 34
  %v165 = vpop.permute.xlu0 %164
  %166 = vrot.lane.b32.xlu0 %v161, 34
  %v167 = vpop.permute.xlu0 %166
  %vm168 = vcmask 277504
  %v169 = vsel %vm168, %v165, %v167
  %v173 = vsel %vm168, 0.0, %v165
  %v174 = vsel %vm168, %v167, 0.0
  %v175 = vsel %vm66, 1, 0
  %v176 = vsel %vm67, 1, 0
  %vm177 = vcmp.eq.s32.totalorder %v175, 1
  %vm178 = vcmp.eq.s32.totalorder %v176, 1
  %v179 = vsel %vm177, %v173, 0.0
  %v180 = vsel %vm178, %v169, 0.0
  %181 = vst [vmem:[#allocation2] sm:$0xff] %v179
  %182 = vst [vmem:[#allocation2 + $0x8] sm:$0xff] %v180
  %v183 = vsel %vm74, 1, 0
  %v184 = vsel %vm75, 1, 0
  %vm185 = vcmp.eq.s32.totalorder %v183, 1
  %vm186 = vcmp.eq.s32.totalorder %v184, 1
  %189 = vrot.lane.b32.xlu0 %v173, 127
  %v190 = vpop.permute.xlu0 %189
  %191 = vrot.lane.b32.xlu0 %v169, 127
  %v192 = vpop.permute.xlu0 %191
  %193 = vrot.lane.b32.xlu0 %v174, 127
  %v194 = vpop.permute.xlu0 %193
  %vm195 = vcmask 1039360
  %v196 = vsel %vm195, %v190, %v192
  %v197 = vsel %vm195, %v192, %v194
  %v200 = vsel %vm185, %v196, 0.0
  %v201 = vsel %vm186, %v197, 0.0
  %202 = vst [vmem:[#allocation2 + $0x20] sm:$0xff] %v200
  %203 = vst [vmem:[#allocation2 + $0x28] sm:$0xff] %v201
  %204 = vrot.lane.b32.xlu0 %v173, 126
  %v205 = vpop.permute.xlu0 %204
  %206 = vrot.lane.b32.xlu0 %v169, 126
  %v207 = vpop.permute.xlu0 %206
  %208 = vrot.lane.b32.xlu0 %v174, 126
  %v209 = vpop.permute.xlu0 %208
  %vm210 = vcmask 1031168
  %v211 = vsel %vm210, %v205, %v207
  %v212 = vsel %vm210, %v207, %v209
  %215 = vst [vmem:[#allocation2 + $0x40] sm:$0xff] %v211
  %216 = vst [vmem:[#allocation2 + $0x48] sm:$0xff] %v212
  %v217 = vsel %vm82, 1, 0
  %v218 = vsel %vm83, 1, 0
  %vm219 = vcmp.eq.s32.totalorder %v217, 1
  %vm220 = vcmp.eq.s32.totalorder %v218, 1
  %221 = vrot.lane.b32.xlu0 %v173, 125
  %v222 = vpop.permute.xlu0 %221
  %223 = vrot.lane.b32.xlu0 %v169, 125
  %v224 = vpop.permute.xlu0 %223
  %225 = vrot.lane.b32.xlu0 %v174, 125
  %v226 = vpop.permute.xlu0 %225
  %vm227 = vcmask 1022976
  %v228 = vsel %vm227, %v222, %v224
  %v229 = vsel %vm227, %v224, %v226
  %v232 = vsel %vm219, %v228, 0.0
  %v233 = vsel %vm220, %v229, 0.0
  %234 = vst [vmem:[#allocation2 + $0x60] sm:$0xff] %v232
  %235 = vst [vmem:[#allocation2 + $0x68] sm:$0xff] %v233
  %v236 = vsel %vm90, 1, 0
  %v237 = vsel %vm91, 1, 0
  %vm238 = vcmp.eq.s32.totalorder %v236, 1
  %vm239 = vcmp.eq.s32.totalorder %v237, 1
  %240 = vrot.lane.b32.xlu0 %v173, 124
  %v241 = vpop.permute.xlu0 %240
  %242 = vrot.lane.b32.xlu0 %v169, 124
  %v243 = vpop.permute.xlu0 %242
  %244 = vrot.lane.b32.xlu0 %v174, 124
  %v245 = vpop.permute.xlu0 %244
  %vm246 = vcmask 1014784
  %v247 = vsel %vm246, %v241, %v243
  %v248 = vsel %vm246, %v243, %v245
  %v251 = vsel %vm238, %v247, 0.0
  %v252 = vsel %vm239, %v248, 0.0
  %253 = vst [vmem:[#allocation2 + $0x80] sm:$0xff] %v251
  %254 = vst [vmem:[#allocation2 + $0x88] sm:$0xff] %v252
  %255 = vrot.lane.b32.xlu0 %v173, 112
  %v256 = vpop.permute.xlu0 %255
  %257 = vrot.lane.b32.xlu0 %v169, 112
  %v258 = vpop.permute.xlu0 %257
  %259 = vrot.lane.b32.xlu0 %v174, 112
  %v260 = vpop.permute.xlu0 %259
  %vm261 = vcmask 916480
  %v262 = vsel %vm261, %v256, %v258
  %v263 = vsel %vm261, %v258, %v260
  %v266 = vsel %vm177, %v262, 0.0
  %v267 = vsel %vm178, %v263, 0.0
  %268 = vst [vmem:[#allocation2 + $0xa0] sm:$0xff] %v266
  %269 = vst [vmem:[#allocation2 + $0xa8] sm:$0xff] %v267
  %270 = vrot.lane.b32.xlu0 %v173, 111
  %v271 = vpop.permute.xlu0 %270
  %272 = vrot.lane.b32.xlu0 %v169, 111
  %v273 = vpop.permute.xlu0 %272
  %274 = vrot.lane.b32.xlu0 %v174, 111
  %v275 = vpop.permute.xlu0 %274
  %vm276 = vcmask 908288
  %v277 = vsel %vm276, %v271, %v273
  %v278 = vsel %vm276, %v273, %v275
  %v281 = vsel %vm185, %v277, 0.0
  %v282 = vsel %vm186, %v278, 0.0
  %283 = vst [vmem:[#allocation2 + $0xc0] sm:$0xff] %v281
  %284 = vst [vmem:[#allocation2 + $0xc8] sm:$0xff] %v282
  %285 = vrot.lane.b32.xlu0 %v173, 110
  %v286 = vpop.permute.xlu0 %285
  %287 = vrot.lane.b32.xlu0 %v169, 110
  %v288 = vpop.permute.xlu0 %287
  %289 = vrot.lane.b32.xlu0 %v174, 110
  %v290 = vpop.permute.xlu0 %289
  %vm291 = vcmask 900096
  %v292 = vsel %vm291, %v286, %v288
  %v293 = vsel %vm291, %v288, %v290
  %296 = vst [vmem:[#allocation2 + $0xe0] sm:$0xff] %v292
  %297 = vst [vmem:[#allocation2 + $0xe8] sm:$0xff] %v293
  %298 = vrot.lane.b32.xlu0 %v173, 109
  %v299 = vpop.permute.xlu0 %298
  %300 = vrot.lane.b32.xlu0 %v169, 109
  %v301 = vpop.permute.xlu0 %300
  %302 = vrot.lane.b32.xlu0 %v174, 109
  %v303 = vpop.permute.xlu0 %302
  %vm304 = vcmask 891904
  %v305 = vsel %vm304, %v299, %v301
  %v306 = vsel %vm304, %v301, %v303
  %v309 = vsel %vm219, %v305, 0.0
  %v310 = vsel %vm220, %v306, 0.0
  %311 = vst [vmem:[#allocation2 + $0x100] sm:$0xff] %v309
  %312 = vst [vmem:[#allocation2 + $0x108] sm:$0xff] %v310
  %313 = vrot.lane.b32.xlu0 %v173, 108
  %v314 = vpop.permute.xlu0 %313
  %315 = vrot.lane.b32.xlu0 %v169, 108
  %v316 = vpop.permute.xlu0 %315
  %317 = vrot.lane.b32.xlu0 %v174, 108
  %v318 = vpop.permute.xlu0 %317
  %vm319 = vcmask 883712
  %v320 = vsel %vm319, %v314, %v316
  %v321 = vsel %vm319, %v316, %v318
  %v324 = vsel %vm238, %v320, 0.0
  %v325 = vsel %vm239, %v321, 0.0
  %326 = vst [vmem:[#allocation2 + $0x120] sm:$0xff] %v324
  %327 = vst [vmem:[#allocation2 + $0x128] sm:$0xff] %v325
  %328 = vrot.lane.b32.xlu0 %v173, 96
  %v329 = vpop.permute.xlu0 %328
  %330 = vrot.lane.b32.xlu0 %v169, 96
  %v331 = vpop.permute.xlu0 %330
  %332 = vrot.lane.b32.xlu0 %v174, 96
  %v333 = vpop.permute.xlu0 %332
  %vm334 = vcmask 785408
  %v335 = vsel %vm334, %v329, %v331
  %v336 = vsel %vm334, %v331, %v333
  %v339 = vsel %vm177, %v335, 0.0
  %v340 = vsel %vm178, %v336, 0.0
  %341 = vst [vmem:[#allocation2 + $0x140] sm:$0xff] %v339
  %342 = vst [vmem:[#allocation2 + $0x148] sm:$0xff] %v340
  %343 = vrot.lane.b32.xlu0 %v173, 95
  %v344 = vpop.permute.xlu0 %343
  %345 = vrot.lane.b32.xlu0 %v169, 95
  %v346 = vpop.permute.xlu0 %345
  %347 = vrot.lane.b32.xlu0 %v174, 95
  %v348 = vpop.permute.xlu0 %347
  %vm349 = vcmask 777216
  %v350 = vsel %vm349, %v344, %v346
  %v351 = vsel %vm349, %v346, %v348
  %v354 = vsel %vm185, %v350, 0.0
  %v355 = vsel %vm186, %v351, 0.0
  %356 = vst [vmem:[#allocation2 + $0x160] sm:$0xff] %v354
  %357 = vst [vmem:[#allocation2 + $0x168] sm:$0xff] %v355
  %358 = vrot.lane.b32.xlu0 %v173, 94
  %v359 = vpop.permute.xlu0 %358
  %360 = vrot.lane.b32.xlu0 %v169, 94
  %v361 = vpop.permute.xlu0 %360
  %362 = vrot.lane.b32.xlu0 %v174, 94
  %v363 = vpop.permute.xlu0 %362
  %vm364 = vcmask 769024
  %v365 = vsel %vm364, %v359, %v361
  %v366 = vsel %vm364, %v361, %v363
  %369 = vst [vmem:[#allocation2 + $0x180] sm:$0xff] %v365
  %370 = vst [vmem:[#allocation2 + $0x188] sm:$0xff] %v366
  %371 = vrot.lane.b32.xlu0 %v173, 93
  %v372 = vpop.permute.xlu0 %371
  %373 = vrot.lane.b32.xlu0 %v169, 93
  %v374 = vpop.permute.xlu0 %373
  %375 = vrot.lane.b32.xlu0 %v174, 93
  %v376 = vpop.permute.xlu0 %375
  %vm377 = vcmask 760832
  %v378 = vsel %vm377, %v372, %v374
  %v379 = vsel %vm377, %v374, %v376
  %v382 = vsel %vm219, %v378, 0.0
  %v383 = vsel %vm220, %v379, 0.0
  %384 = vst [vmem:[#allocation2 + $0x1a0] sm:$0xff] %v382
  %385 = vst [vmem:[#allocation2 + $0x1a8] sm:$0xff] %v383
  %386 = vrot.lane.b32.xlu0 %v173, 92
  %v387 = vpop.permute.xlu0 %386
  %388 = vrot.lane.b32.xlu0 %v169, 92
  %v389 = vpop.permute.xlu0 %388
  %390 = vrot.lane.b32.xlu0 %v174, 92
  %v391 = vpop.permute.xlu0 %390
  %vm392 = vcmask 752640
  %v393 = vsel %vm392, %v387, %v389
  %v394 = vsel %vm392, %v389, %v391
  %v397 = vsel %vm238, %v393, 0.0
  %v398 = vsel %vm239, %v394, 0.0
  %399 = vst [vmem:[#allocation2 + $0x1c0] sm:$0xff] %v397
  %400 = vst [vmem:[#allocation2 + $0x1c8] sm:$0xff] %v398
  %401 = vrot.lane.b32.xlu0 %v173, 80
  %v402 = vpop.permute.xlu0 %401
  %403 = vrot.lane.b32.xlu0 %v169, 80
  %v404 = vpop.permute.xlu0 %403
  %405 = vrot.lane.b32.xlu0 %v174, 80
  %v406 = vpop.permute.xlu0 %405
  %vm407 = vcmask 654336
  %v408 = vsel %vm407, %v402, %v404
  %v409 = vsel %vm407, %v404, %v406
  %v412 = vsel %vm177, %v408, 0.0
  %v413 = vsel %vm178, %v409, 0.0
  %414 = vst [vmem:[#allocation2 + $0x1e0] sm:$0xff] %v412
  %415 = vst [vmem:[#allocation2 + $0x1e8] sm:$0xff] %v413
  %416 = vrot.lane.b32.xlu0 %v173, 79
  %v417 = vpop.permute.xlu0 %416
  %418 = vrot.lane.b32.xlu0 %v169, 79
  %v419 = vpop.permute.xlu0 %418
  %420 = vrot.lane.b32.xlu0 %v174, 79
  %v421 = vpop.permute.xlu0 %420
  %vm422 = vcmask 646144
  %v423 = vsel %vm422, %v417, %v419
  %v424 = vsel %vm422, %v419, %v421
  %v427 = vsel %vm185, %v423, 0.0
  %v428 = vsel %vm186, %v424, 0.0
  %429 = vst [vmem:[#allocation2 + $0x200] sm:$0xff] %v427
  %430 = vst [vmem:[#allocation2 + $0x208] sm:$0xff] %v428
  %431 = vrot.lane.b32.xlu0 %v173, 78
  %v432 = vpop.permute.xlu0 %431
  %433 = vrot.lane.b32.xlu0 %v169, 78
  %v434 = vpop.permute.xlu0 %433
  %435 = vrot.lane.b32.xlu0 %v174, 78
  %v436 = vpop.permute.xlu0 %435
  %vm437 = vcmask 637952
  %v438 = vsel %vm437, %v432, %v434
  %v439 = vsel %vm437, %v434, %v436
  %442 = vst [vmem:[#allocation2 + $0x220] sm:$0xff] %v438
  %443 = vst [vmem:[#allocation2 + $0x228] sm:$0xff] %v439
  %444 = vrot.lane.b32.xlu0 %v173, 77
  %v445 = vpop.permute.xlu0 %444
  %446 = vrot.lane.b32.xlu0 %v169, 77
  %v447 = vpop.permute.xlu0 %446
  %448 = vrot.lane.b32.xlu0 %v174, 77
  %v449 = vpop.permute.xlu0 %448
  %vm450 = vcmask 629760
  %v451 = vsel %vm450, %v445, %v447
  %v452 = vsel %vm450, %v447, %v449
  %v455 = vsel %vm219, %v451, 0.0
  %v456 = vsel %vm220, %v452, 0.0
  %457 = vst [vmem:[#allocation2 + $0x240] sm:$0xff] %v455
  %458 = vst [vmem:[#allocation2 + $0x248] sm:$0xff] %v456
  %459 = vrot.lane.b32.xlu0 %v173, 76
  %v460 = vpop.permute.xlu0 %459
  %461 = vrot.lane.b32.xlu0 %v169, 76
  %v462 = vpop.permute.xlu0 %461
  %463 = vrot.lane.b32.xlu0 %v174, 76
  %v464 = vpop.permute.xlu0 %463
  %vm465 = vcmask 621568
  %v466 = vsel %vm465, %v460, %v462
  %v467 = vsel %vm465, %v462, %v464
  %v470 = vsel %vm238, %v466, 0.0
  %v471 = vsel %vm239, %v467, 0.0
  %472 = vst [vmem:[#allocation2 + $0x260] sm:$0xff] %v470
  %473 = vst [vmem:[#allocation2 + $0x268] sm:$0xff] %v471
  %474 = vrot.lane.b32.xlu0 %v173, 64
  %v475 = vpop.permute.xlu0 %474
  %476 = vrot.lane.b32.xlu0 %v169, 64
  %v477 = vpop.permute.xlu0 %476
  %478 = vrot.lane.b32.xlu0 %v174, 64
  %v479 = vpop.permute.xlu0 %478
  %vm480 = vcmask 523264
  %v481 = vsel %vm480, %v475, %v477
  %v482 = vsel %vm480, %v477, %v479
  %v485 = vsel %vm177, %v481, 0.0
  %v486 = vsel %vm178, %v482, 0.0
  %487 = vst [vmem:[#allocation2 + $0x280] sm:$0xff] %v485
  %488 = vst [vmem:[#allocation2 + $0x288] sm:$0xff] %v486
  %489 = vrot.lane.b32.xlu0 %v173, 63
  %v490 = vpop.permute.xlu0 %489
  %491 = vrot.lane.b32.xlu0 %v169, 63
  %v492 = vpop.permute.xlu0 %491
  %493 = vrot.lane.b32.xlu0 %v174, 63
  %v494 = vpop.permute.xlu0 %493
  %vm495 = vcmask 515072
  %v496 = vsel %vm495, %v490, %v492
  %v497 = vsel %vm495, %v492, %v494
  %v500 = vsel %vm185, %v496, 0.0
  %v501 = vsel %vm186, %v497, 0.0
  %502 = vst [vmem:[#allocation2 + $0x2a0] sm:$0xff] %v500
  %503 = vst [vmem:[#allocation2 + $0x2a8] sm:$0xff] %v501
  %504 = vrot.lane.b32.xlu0 %v173, 62
  %v505 = vpop.permute.xlu0 %504
  %506 = vrot.lane.b32.xlu0 %v169, 62
  %v507 = vpop.permute.xlu0 %506
  %508 = vrot.lane.b32.xlu0 %v174, 62
  %v509 = vpop.permute.xlu0 %508
  %vm510 = vcmask 506880
  %v511 = vsel %vm510, %v505, %v507
  %v512 = vsel %vm510, %v507, %v509
  %515 = vst [vmem:[#allocation2 + $0x2c0] sm:$0xff] %v511
  %516 = vst [vmem:[#allocation2 + $0x2c8] sm:$0xff] %v512
  %517 = vrot.lane.b32.xlu0 %v173, 61
  %v518 = vpop.permute.xlu0 %517
  %519 = vrot.lane.b32.xlu0 %v169, 61
  %v520 = vpop.permute.xlu0 %519
  %521 = vrot.lane.b32.xlu0 %v174, 61
  %v522 = vpop.permute.xlu0 %521
  %vm523 = vcmask 498688
  %v524 = vsel %vm523, %v518, %v520
  %v525 = vsel %vm523, %v520, %v522
  %v528 = vsel %vm219, %v524, 0.0
  %v529 = vsel %vm220, %v525, 0.0
  %530 = vst [vmem:[#allocation2 + $0x2e0] sm:$0xff] %v528
  %531 = vst [vmem:[#allocation2 + $0x2e8] sm:$0xff] %v529
  %532 = vrot.lane.b32.xlu0 %v173, 60
  %v533 = vpop.permute.xlu0 %532
  %534 = vrot.lane.b32.xlu0 %v169, 60
  %v535 = vpop.permute.xlu0 %534
  %536 = vrot.lane.b32.xlu0 %v174, 60
  %v537 = vpop.permute.xlu0 %536
  %vm538 = vcmask 490496
  %v539 = vsel %vm538, %v533, %v535
  %v540 = vsel %vm538, %v535, %v537
  %v543 = vsel %vm238, %v539, 0.0
  %v544 = vsel %vm239, %v540, 0.0
  %545 = vst [vmem:[#allocation2 + $0x300] sm:$0xff] %v543
  %546 = vst [vmem:[#allocation2 + $0x308] sm:$0xff] %v544
  %v547 = vsel %vm159, %v94, 0.0
  %v548 = vsel %vm159, %v96, 0.0
  %551 = vrot.lane.b32.xlu0 %v547, 17
  %v552 = vpop.permute.xlu0 %551
  %553 = vrot.lane.b32.xlu0 %v548, 17
  %v554 = vpop.permute.xlu0 %553
  %vm555 = vcmask 138240
  %v556 = vsel %vm555, %v552, %v554
  %v560 = vsel %vm555, 0.0, %v552
  %v561 = vsel %vm555, %v554, 0.0
  %v562 = vsel %vm185, %v560, 0.0
  %v563 = vsel %vm186, %v556, 0.0
  %564 = vst [vmem:[#allocation3] sm:$0xff] %v562
  %565 = vst [vmem:[#allocation3 + $0x8] sm:$0xff] %v563
  %568 = vrot.lane.b32.xlu0 %v560, 127
  %v569 = vpop.permute.xlu0 %568
  %570 = vrot.lane.b32.xlu0 %v556, 127
  %v571 = vpop.permute.xlu0 %570
  %572 = vrot.lane.b32.xlu0 %v561, 127
  %v573 = vpop.permute.xlu0 %572
  %v574 = vsel %vm195, %v569, %v571
  %v575 = vsel %vm195, %v571, %v573
  %578 = vst [vmem:[#allocation3 + $0x20] sm:$0xff] %v574
  %579 = vst [vmem:[#allocation3 + $0x28] sm:$0xff] %v575
  %580 = vrot.lane.b32.xlu0 %v560, 126
  %v581 = vpop.permute.xlu0 %580
  %582 = vrot.lane.b32.xlu0 %v556, 126
  %v583 = vpop.permute.xlu0 %582
  %584 = vrot.lane.b32.xlu0 %v561, 126
  %v585 = vpop.permute.xlu0 %584
  %v586 = vsel %vm210, %v581, %v583
  %v587 = vsel %vm210, %v583, %v585
  %v590 = vsel %vm219, %v586, 0.0
  %v591 = vsel %vm220, %v587, 0.0
  %592 = vst [vmem:[#allocation3 + $0x40] sm:$0xff] %v590
  %593 = vst [vmem:[#allocation3 + $0x48] sm:$0xff] %v591
  %594 = vrot.lane.b32.xlu0 %v560, 112
  %v595 = vpop.permute.xlu0 %594
  %596 = vrot.lane.b32.xlu0 %v556, 112
  %v597 = vpop.permute.xlu0 %596
  %598 = vrot.lane.b32.xlu0 %v561, 112
  %v599 = vpop.permute.xlu0 %598
  %v600 = vsel %vm261, %v595, %v597
  %v601 = vsel %vm261, %v597, %v599
  %v604 = vsel %vm185, %v600, 0.0
  %v605 = vsel %vm186, %v601, 0.0
  %606 = vst [vmem:[#allocation3 + $0x60] sm:$0xff] %v604
  %607 = vst [vmem:[#allocation3 + $0x68] sm:$0xff] %v605
  %608 = vrot.lane.b32.xlu0 %v560, 111
  %v609 = vpop.permute.xlu0 %608
  %610 = vrot.lane.b32.xlu0 %v556, 111
  %v611 = vpop.permute.xlu0 %610
  %612 = vrot.lane.b32.xlu0 %v561, 111
  %v613 = vpop.permute.xlu0 %612
  %v614 = vsel %vm276, %v609, %v611
  %v615 = vsel %vm276, %v611, %v613
  %618 = vst [vmem:[#allocation3 + $0x80] sm:$0xff] %v614
  %619 = vst [vmem:[#allocation3 + $0x88] sm:$0xff] %v615
  %620 = vrot.lane.b32.xlu0 %v560, 110
  %v621 = vpop.permute.xlu0 %620
  %622 = vrot.lane.b32.xlu0 %v556, 110
  %v623 = vpop.permute.xlu0 %622
  %624 = vrot.lane.b32.xlu0 %v561, 110
  %v625 = vpop.permute.xlu0 %624
  %v626 = vsel %vm291, %v621, %v623
  %v627 = vsel %vm291, %v623, %v625
  %v630 = vsel %vm219, %v626, 0.0
  %v631 = vsel %vm220, %v627, 0.0
  %632 = vst [vmem:[#allocation3 + $0xa0] sm:$0xff] %v630
  %633 = vst [vmem:[#allocation3 + $0xa8] sm:$0xff] %v631
  %634 = vrot.lane.b32.xlu0 %v560, 96
  %v635 = vpop.permute.xlu0 %634
  %636 = vrot.lane.b32.xlu0 %v556, 96
  %v637 = vpop.permute.xlu0 %636
  %638 = vrot.lane.b32.xlu0 %v561, 96
  %v639 = vpop.permute.xlu0 %638
  %v640 = vsel %vm334, %v635, %v637
  %v641 = vsel %vm334, %v637, %v639
  %v644 = vsel %vm185, %v640, 0.0
  %v645 = vsel %vm186, %v641, 0.0
  %646 = vst [vmem:[#allocation3 + $0xc0] sm:$0xff] %v644
  %647 = vst [vmem:[#allocation3 + $0xc8] sm:$0xff] %v645
  %648 = vrot.lane.b32.xlu0 %v560, 95
  %v649 = vpop.permute.xlu0 %648
  %650 = vrot.lane.b32.xlu0 %v556, 95
  %v651 = vpop.permute.xlu0 %650
  %652 = vrot.lane.b32.xlu0 %v561, 95
  %v653 = vpop.permute.xlu0 %652
  %v654 = vsel %vm349, %v649, %v651
  %v655 = vsel %vm349, %v651, %v653
  %658 = vst [vmem:[#allocation3 + $0xe0] sm:$0xff] %v654
  %659 = vst [vmem:[#allocation3 + $0xe8] sm:$0xff] %v655
  %660 = vrot.lane.b32.xlu0 %v560, 94
  %v661 = vpop.permute.xlu0 %660
  %662 = vrot.lane.b32.xlu0 %v556, 94
  %v663 = vpop.permute.xlu0 %662
  %664 = vrot.lane.b32.xlu0 %v561, 94
  %v665 = vpop.permute.xlu0 %664
  %v666 = vsel %vm364, %v661, %v663
  %v667 = vsel %vm364, %v663, %v665
  %v670 = vsel %vm219, %v666, 0.0
  %v671 = vsel %vm220, %v667, 0.0
  %672 = vst [vmem:[#allocation3 + $0x100] sm:$0xff] %v670
  %673 = vst [vmem:[#allocation3 + $0x108] sm:$0xff] %v671
  %s674 = scalar_lea.vmem %s0, 8
  %v675 = vld [vmem:[%s674] sm:$0xff]
  %v677 = vcombine.high %v675, %v675
  %v679 = vpack.c.bf16 %v675, %v675
  %v680 = vpack.c.bf16 %v677, %v677
  %v682 = vsel %vm109, %v679, 0
  %v685 = vsel %vm109, %v680, 0
  %687 = vmatprep.subr.bf16.mxu0 0
  %688 = vmatpush1.bf16.msra.mxu0 0
  %689 = vmatprep.subr.bf16.mxu0 0
  %690 = vmatpush1.bf16.msra.mxu0 0
  %691 = vmatprep.subr.bf16.mxu0 0
  %692 = vmatpush1.bf16.msra.mxu0 0
  %693 = vmatprep.subr.bf16.mxu0 0
  %694 = vmatpush1.bf16.msra.mxu0 0
  %695 = vmatprep.subr.bf16.mxu0 0
  %696 = vmatpush1.bf16.msra.mxu0 0
  %697 = vmatprep.subr.bf16.mxu0 0
  %698 = vmatpush1.bf16.msra.mxu0 0
  %699 = vmatprep.subr.bf16.mxu0 0
  %700 = vmatpush1.bf16.msra.mxu0 0
  %701 = vmatprep.subr.bf16.mxu0 %v685
  %702 = vmatpush1.bf16.msra.mxu0 %v682
  %703 = vmatprep.subr.bf16.mxu0 0
  %704 = vmatpush2.bf16.msra.mxu0 0
  %705 = vmatprep.subr.bf16.mxu0 0
  %706 = vmatpush2.bf16.msra.mxu0 0
  %707 = vmatprep.subr.bf16.mxu0 0
  %708 = vmatpush2.bf16.msra.mxu0 0
  %709 = vmatprep.subr.bf16.mxu0 0
  %710 = vmatpush2.bf16.msra.mxu0 0
  %711 = vmatprep.subr.bf16.mxu0 0
  %712 = vmatpush2.bf16.msra.mxu0 0
  %713 = vmatprep.subr.bf16.mxu0 0
  %714 = vmatpush2.bf16.msra.mxu0 0
  %715 = vmatprep.subr.bf16.mxu0 0
  %716 = vmatpush2.bf16.msra.mxu0 0
  %717 = vmatprep.subr.bf16.mxu0 0
  %718 = vmatpush2.bf16.msra.mxu0 0
  %719 = vmatprep.mubr.bf16.mxu0 0
  %720 = vmatmul.mubr.bf16.gmra.mxu0 %v107
  %v721 = vpop.f32.mrf.mxu0
  %v722 = vadd.f32 %v103, %v721
  %v723 = vpop.f32.mrf.mxu0
  %v724 = vadd.f32 %v103, %v723
  %v725 = vpop.f32.mrf.mxu0
  %v726 = vpop.f32.mrf.mxu0
  %727 = vdwg.mxu0
  %v728 = vmax.f32 %v722, 0.0
  %v729 = vmax.f32 %v724, 0.0
  %v730 = vsel %vm159, %v728, 0.0
  %v731 = vsel %vm159, %v729, 0.0
  %734 = vrot.lane.b32.xlu0 %v730, 34
  %v735 = vpop.permute.xlu0 %734
  %736 = vrot.lane.b32.xlu0 %v731, 34
  %v737 = vpop.permute.xlu0 %736
  %v738 = vsel %vm168, %v735, %v737
  %v742 = vsel %vm168, 0.0, %v735
  %v743 = vsel %vm168, %v737, 0.0
  %v744 = vsel %vm177, %v742, 0.0
  %v745 = vsel %vm178, %v738, 0.0
  %746 = vst [vmem:[#allocation2 + $0x10] sm:$0xff] %v744
  %747 = vst [vmem:[#allocation2 + $0x18] sm:$0xff] %v745
  %750 = vrot.lane.b32.xlu0 %v742, 127
  %v751 = vpop.permute.xlu0 %750
  %752 = vrot.lane.b32.xlu0 %v738, 127
  %v753 = vpop.permute.xlu0 %752
  %754 = vrot.lane.b32.xlu0 %v743, 127
  %v755 = vpop.permute.xlu0 %754
  %v756 = vsel %vm195, %v751, %v753
  %v757 = vsel %vm195, %v753, %v755
  %v760 = vsel %vm185, %v756, 0.0
  %v761 = vsel %vm186, %v757, 0.0
  %762 = vst [vmem:[#allocation2 + $0x30] sm:$0xff] %v760
  %763 = vst [vmem:[#allocation2 + $0x38] sm:$0xff] %v761
  %764 = vrot.lane.b32.xlu0 %v742, 126
  %v765 = vpop.permute.xlu0 %764
  %766 = vrot.lane.b32.xlu0 %v738, 126
  %v767 = vpop.permute.xlu0 %766
  %768 = vrot.lane.b32.xlu0 %v743, 126
  %v769 = vpop.permute.xlu0 %768
  %v770 = vsel %vm210, %v765, %v767
  %v771 = vsel %vm210, %v767, %v769
  %774 = vst [vmem:[#allocation2 + $0x50] sm:$0xff] %v770
  %775 = vst [vmem:[#allocation2 + $0x58] sm:$0xff] %v771
  %776 = vrot.lane.b32.xlu0 %v742, 125
  %v777 = vpop.permute.xlu0 %776
  %778 = vrot.lane.b32.xlu0 %v738, 125
  %v779 = vpop.permute.xlu0 %778
  %780 = vrot.lane.b32.xlu0 %v743, 125
  %v781 = vpop.permute.xlu0 %780
  %v782 = vsel %vm227, %v777, %v779
  %v783 = vsel %vm227, %v779, %v781
  %v786 = vsel %vm219, %v782, 0.0
  %v787 = vsel %vm220, %v783, 0.0
  %788 = vst [vmem:[#allocation2 + $0x70] sm:$0xff] %v786
  %789 = vst [vmem:[#allocation2 + $0x78] sm:$0xff] %v787
  %790 = vrot.lane.b32.xlu0 %v742, 124
  %v791 = vpop.permute.xlu0 %790
  %792 = vrot.lane.b32.xlu0 %v738, 124
  %v793 = vpop.permute.xlu0 %792
  %794 = vrot.lane.b32.xlu0 %v743, 124
  %v795 = vpop.permute.xlu0 %794
  %v796 = vsel %vm246, %v791, %v793
  %v797 = vsel %vm246, %v793, %v795
  %v800 = vsel %vm238, %v796, 0.0
  %v801 = vsel %vm239, %v797, 0.0
  %802 = vst [vmem:[#allocation2 + $0x90] sm:$0xff] %v800
  %803 = vst [vmem:[#allocation2 + $0x98] sm:$0xff] %v801
  %804 = vrot.lane.b32.xlu0 %v742, 112
  %v805 = vpop.permute.xlu0 %804
  %806 = vrot.lane.b32.xlu0 %v738, 112
  %v807 = vpop.permute.xlu0 %806
  %808 = vrot.lane.b32.xlu0 %v743, 112
  %v809 = vpop.permute.xlu0 %808
  %v810 = vsel %vm261, %v805, %v807
  %v811 = vsel %vm261, %v807, %v809
  %v814 = vsel %vm177, %v810, 0.0
  %v815 = vsel %vm178, %v811, 0.0
  %816 = vst [vmem:[#allocation2 + $0xb0] sm:$0xff] %v814
  %817 = vst [vmem:[#allocation2 + $0xb8] sm:$0xff] %v815
  %818 = vrot.lane.b32.xlu0 %v742, 111
  %v819 = vpop.permute.xlu0 %818
  %820 = vrot.lane.b32.xlu0 %v738, 111
  %v821 = vpop.permute.xlu0 %820
  %822 = vrot.lane.b32.xlu0 %v743, 111
  %v823 = vpop.permute.xlu0 %822
  %v824 = vsel %vm276, %v819, %v821
  %v825 = vsel %vm276, %v821, %v823
  %v828 = vsel %vm185, %v824, 0.0
  %v829 = vsel %vm186, %v825, 0.0
  %830 = vst [vmem:[#allocation2 + $0xd0] sm:$0xff] %v828
  %831 = vst [vmem:[#allocation2 + $0xd8] sm:$0xff] %v829
  %832 = vrot.lane.b32.xlu0 %v742, 110
  %v833 = vpop.permute.xlu0 %832
  %834 = vrot.lane.b32.xlu0 %v738, 110
  %v835 = vpop.permute.xlu0 %834
  %836 = vrot.lane.b32.xlu0 %v743, 110
  %v837 = vpop.permute.xlu0 %836
  %v838 = vsel %vm291, %v833, %v835
  %v839 = vsel %vm291, %v835, %v837
  %842 = vst [vmem:[#allocation2 + $0xf0] sm:$0xff] %v838
  %843 = vst [vmem:[#allocation2 + $0xf8] sm:$0xff] %v839
  %844 = vrot.lane.b32.xlu0 %v742, 109
  %v845 = vpop.permute.xlu0 %844
  %846 = vrot.lane.b32.xlu0 %v738, 109
  %v847 = vpop.permute.xlu0 %846
  %848 = vrot.lane.b32.xlu0 %v743, 109
  %v849 = vpop.permute.xlu0 %848
  %v850 = vsel %vm304, %v845, %v847
  %v851 = vsel %vm304, %v847, %v849
  %v854 = vsel %vm219, %v850, 0.0
  %v855 = vsel %vm220, %v851, 0.0
  %856 = vst [vmem:[#allocation2 + $0x110] sm:$0xff] %v854
  %857 = vst [vmem:[#allocation2 + $0x118] sm:$0xff] %v855
  %858 = vrot.lane.b32.xlu0 %v742, 108
  %v859 = vpop.permute.xlu0 %858
  %860 = vrot.lane.b32.xlu0 %v738, 108
  %v861 = vpop.permute.xlu0 %860
  %862 = vrot.lane.b32.xlu0 %v743, 108
  %v863 = vpop.permute.xlu0 %862
  %v864 = vsel %vm319, %v859, %v861
  %v865 = vsel %vm319, %v861, %v863
  %v868 = vsel %vm238, %v864, 0.0
  %v869 = vsel %vm239, %v865, 0.0
  %870 = vst [vmem:[#allocation2 + $0x130] sm:$0xff] %v868
  %871 = vst [vmem:[#allocation2 + $0x138] sm:$0xff] %v869
  %872 = vrot.lane.b32.xlu0 %v742, 96
  %v873 = vpop.permute.xlu0 %872
  %874 = vrot.lane.b32.xlu0 %v738, 96
  %v875 = vpop.permute.xlu0 %874
  %876 = vrot.lane.b32.xlu0 %v743, 96
  %v877 = vpop.permute.xlu0 %876
  %v878 = vsel %vm334, %v873, %v875
  %v879 = vsel %vm334, %v875, %v877
  %v882 = vsel %vm177, %v878, 0.0
  %v883 = vsel %vm178, %v879, 0.0
  %884 = vst [vmem:[#allocation2 + $0x150] sm:$0xff] %v882
  %885 = vst [vmem:[#allocation2 + $0x158] sm:$0xff] %v883
  %886 = vrot.lane.b32.xlu0 %v742, 95
  %v887 = vpop.permute.xlu0 %886
  %888 = vrot.lane.b32.xlu0 %v738, 95
  %v889 = vpop.permute.xlu0 %888
  %890 = vrot.lane.b32.xlu0 %v743, 95
  %v891 = vpop.permute.xlu0 %890
  %v892 = vsel %vm349, %v887, %v889
  %v893 = vsel %vm349, %v889, %v891
  %v896 = vsel %vm185, %v892, 0.0
  %v897 = vsel %vm186, %v893, 0.0
  %898 = vst [vmem:[#allocation2 + $0x170] sm:$0xff] %v896
  %899 = vst [vmem:[#allocation2 + $0x178] sm:$0xff] %v897
  %900 = vrot.lane.b32.xlu0 %v742, 94
  %v901 = vpop.permute.xlu0 %900
  %902 = vrot.lane.b32.xlu0 %v738, 94
  %v903 = vpop.permute.xlu0 %902
  %904 = vrot.lane.b32.xlu0 %v743, 94
  %v905 = vpop.permute.xlu0 %904
  %v906 = vsel %vm364, %v901, %v903
  %v907 = vsel %vm364, %v903, %v905
  %910 = vst [vmem:[#allocation2 + $0x190] sm:$0xff] %v906
  %911 = vst [vmem:[#allocation2 + $0x198] sm:$0xff] %v907
  %912 = vrot.lane.b32.xlu0 %v742, 93
  %v913 = vpop.permute.xlu0 %912
  %914 = vrot.lane.b32.xlu0 %v738, 93
  %v915 = vpop.permute.xlu0 %914
  %916 = vrot.lane.b32.xlu0 %v743, 93
  %v917 = vpop.permute.xlu0 %916
  %v918 = vsel %vm377, %v913, %v915
  %v919 = vsel %vm377, %v915, %v917
  %v922 = vsel %vm219, %v918, 0.0
  %v923 = vsel %vm220, %v919, 0.0
  %924 = vst [vmem:[#allocation2 + $0x1b0] sm:$0xff] %v922
  %925 = vst [vmem:[#allocation2 + $0x1b8] sm:$0xff] %v923
  %926 = vrot.lane.b32.xlu0 %v742, 92
  %v927 = vpop.permute.xlu0 %926
  %928 = vrot.lane.b32.xlu0 %v738, 92
  %v929 = vpop.permute.xlu0 %928
  %930 = vrot.lane.b32.xlu0 %v743, 92
  %v931 = vpop.permute.xlu0 %930
  %v932 = vsel %vm392, %v927, %v929
  %v933 = vsel %vm392, %v929, %v931
  %v936 = vsel %vm238, %v932, 0.0
  %v937 = vsel %vm239, %v933, 0.0
  %938 = vst [vmem:[#allocation2 + $0x1d0] sm:$0xff] %v936
  %939 = vst [vmem:[#allocation2 + $0x1d8] sm:$0xff] %v937
  %940 = vrot.lane.b32.xlu0 %v742, 80
  %v941 = vpop.permute.xlu0 %940
  %942 = vrot.lane.b32.xlu0 %v738, 80
  %v943 = vpop.permute.xlu0 %942
  %944 = vrot.lane.b32.xlu0 %v743, 80
  %v945 = vpop.permute.xlu0 %944
  %v946 = vsel %vm407, %v941, %v943
  %v947 = vsel %vm407, %v943, %v945
  %v950 = vsel %vm177, %v946, 0.0
  %v951 = vsel %vm178, %v947, 0.0
  %952 = vst [vmem:[#allocation2 + $0x1f0] sm:$0xff] %v950
  %953 = vst [vmem:[#allocation2 + $0x1f8] sm:$0xff] %v951
  %954 = vrot.lane.b32.xlu0 %v742, 79
  %v955 = vpop.permute.xlu0 %954
  %956 = vrot.lane.b32.xlu0 %v738, 79
  %v957 = vpop.permute.xlu0 %956
  %958 = vrot.lane.b32.xlu0 %v743, 79
  %v959 = vpop.permute.xlu0 %958
  %v960 = vsel %vm422, %v955, %v957
  %v961 = vsel %vm422, %v957, %v959
  %v964 = vsel %vm185, %v960, 0.0
  %v965 = vsel %vm186, %v961, 0.0
  %966 = vst [vmem:[#allocation2 + $0x210] sm:$0xff] %v964
  %967 = vst [vmem:[#allocation2 + $0x218] sm:$0xff] %v965
  %968 = vrot.lane.b32.xlu0 %v742, 78
  %v969 = vpop.permute.xlu0 %968
  %970 = vrot.lane.b32.xlu0 %v738, 78
  %v971 = vpop.permute.xlu0 %970
  %972 = vrot.lane.b32.xlu0 %v743, 78
  %v973 = vpop.permute.xlu0 %972
  %v974 = vsel %vm437, %v969, %v971
  %v975 = vsel %vm437, %v971, %v973
  %978 = vst [vmem:[#allocation2 + $0x230] sm:$0xff] %v974
  %979 = vst [vmem:[#allocation2 + $0x238] sm:$0xff] %v975
  %980 = vrot.lane.b32.xlu0 %v742, 77
  %v981 = vpop.permute.xlu0 %980
  %982 = vrot.lane.b32.xlu0 %v738, 77
  %v983 = vpop.permute.xlu0 %982
  %984 = vrot.lane.b32.xlu0 %v743, 77
  %v985 = vpop.permute.xlu0 %984
  %v986 = vsel %vm450, %v981, %v983
  %v987 = vsel %vm450, %v983, %v985
  %v990 = vsel %vm219, %v986, 0.0
  %v991 = vsel %vm220, %v987, 0.0
  %992 = vst [vmem:[#allocation2 + $0x250] sm:$0xff] %v990
  %993 = vst [vmem:[#allocation2 + $0x258] sm:$0xff] %v991
  %994 = vrot.lane.b32.xlu0 %v742, 76
  %v995 = vpop.permute.xlu0 %994
  %996 = vrot.lane.b32.xlu0 %v738, 76
  %v997 = vpop.permute.xlu0 %996
  %998 = vrot.lane.b32.xlu0 %v743, 76
  %v999 = vpop.permute.xlu0 %998
  %v1000 = vsel %vm465, %v995, %v997
  %v1001 = vsel %vm465, %v997, %v999
  %v1004 = vsel %vm238, %v1000, 0.0
  %v1005 = vsel %vm239, %v1001, 0.0
  %1006 = vst [vmem:[#allocation2 + $0x270] sm:$0xff] %v1004
  %1007 = vst [vmem:[#allocation2 + $0x278] sm:$0xff] %v1005
  %1008 = vrot.lane.b32.xlu0 %v742, 64
  %v1009 = vpop.permute.xlu0 %1008
  %1010 = vrot.lane.b32.xlu0 %v738, 64
  %v1011 = vpop.permute.xlu0 %1010
  %1012 = vrot.lane.b32.xlu0 %v743, 64
  %v1013 = vpop.permute.xlu0 %1012
  %v1014 = vsel %vm480, %v1009, %v1011
  %v1015 = vsel %vm480, %v1011, %v1013
  %v1018 = vsel %vm177, %v1014, 0.0
  %v1019 = vsel %vm178, %v1015, 0.0
  %1020 = vst [vmem:[#allocation2 + $0x290] sm:$0xff] %v1018
  %1021 = vst [vmem:[#allocation2 + $0x298] sm:$0xff] %v1019
  %1022 = vrot.lane.b32.xlu0 %v742, 63
  %v1023 = vpop.permute.xlu0 %1022
  %1024 = vrot.lane.b32.xlu0 %v738, 63
  %v1025 = vpop.permute.xlu0 %1024
  %1026 = vrot.lane.b32.xlu0 %v743, 63
  %v1027 = vpop.permute.xlu0 %1026
  %v1028 = vsel %vm495, %v1023, %v1025
  %v1029 = vsel %vm495, %v1025, %v1027
  %v1032 = vsel %vm185, %v1028, 0.0
  %v1033 = vsel %vm186, %v1029, 0.0
  %1034 = vst [vmem:[#allocation2 + $0x2b0] sm:$0xff] %v1032
  %1035 = vst [vmem:[#allocation2 + $0x2b8] sm:$0xff] %v1033
  %1036 = vrot.lane.b32.xlu0 %v742, 62
  %v1037 = vpop.permute.xlu0 %1036
  %1038 = vrot.lane.b32.xlu0 %v738, 62
  %v1039 = vpop.permute.xlu0 %1038
  %1040 = vrot.lane.b32.xlu0 %v743, 62
  %v1041 = vpop.permute.xlu0 %1040
  %v1042 = vsel %vm510, %v1037, %v1039
  %v1043 = vsel %vm510, %v1039, %v1041
  %1046 = vst [vmem:[#allocation2 + $0x2d0] sm:$0xff] %v1042
  %1047 = vst [vmem:[#allocation2 + $0x2d8] sm:$0xff] %v1043
  %1048 = vrot.lane.b32.xlu0 %v742, 61
  %v1049 = vpop.permute.xlu0 %1048
  %1050 = vrot.lane.b32.xlu0 %v738, 61
  %v1051 = vpop.permute.xlu0 %1050
  %1052 = vrot.lane.b32.xlu0 %v743, 61
  %v1053 = vpop.permute.xlu0 %1052
  %v1054 = vsel %vm523, %v1049, %v1051
  %v1055 = vsel %vm523, %v1051, %v1053
  %v1058 = vsel %vm219, %v1054, 0.0
  %v1059 = vsel %vm220, %v1055, 0.0
  %1060 = vst [vmem:[#allocation2 + $0x2f0] sm:$0xff] %v1058
  %1061 = vst [vmem:[#allocation2 + $0x2f8] sm:$0xff] %v1059
  %1062 = vrot.lane.b32.xlu0 %v742, 60
  %v1063 = vpop.permute.xlu0 %1062
  %1064 = vrot.lane.b32.xlu0 %v738, 60
  %v1065 = vpop.permute.xlu0 %1064
  %1066 = vrot.lane.b32.xlu0 %v743, 60
  %v1067 = vpop.permute.xlu0 %1066
  %v1068 = vsel %vm538, %v1063, %v1065
  %v1069 = vsel %vm538, %v1065, %v1067
  %v1072 = vsel %vm238, %v1068, 0.0
  %v1073 = vsel %vm239, %v1069, 0.0
  %1074 = vst [vmem:[#allocation2 + $0x310] sm:$0xff] %v1072
  %1075 = vst [vmem:[#allocation2 + $0x318] sm:$0xff] %v1073
  %v1076 = vsel %vm159, %v675, 0.0
  %v1077 = vsel %vm159, %v677, 0.0
  %1080 = vrot.lane.b32.xlu0 %v1076, 17
  %v1081 = vpop.permute.xlu0 %1080
  %1082 = vrot.lane.b32.xlu0 %v1077, 17
  %v1083 = vpop.permute.xlu0 %1082
  %v1084 = vsel %vm555, %v1081, %v1083
  %v1088 = vsel %vm555, 0.0, %v1081
  %v1089 = vsel %vm555, %v1083, 0.0
  %v1090 = vsel %vm185, %v1088, 0.0
  %v1091 = vsel %vm186, %v1084, 0.0
  %1092 = vst [vmem:[#allocation3 + $0x10] sm:$0xff] %v1090
  %1093 = vst [vmem:[#allocation3 + $0x18] sm:$0xff] %v1091
  %1096 = vrot.lane.b32.xlu0 %v1088, 127
  %v1097 = vpop.permute.xlu0 %1096
  %1098 = vrot.lane.b32.xlu0 %v1084, 127
  %v1099 = vpop.permute.xlu0 %1098
  %1100 = vrot.lane.b32.xlu0 %v1089, 127
  %v1101 = vpop.permute.xlu0 %1100
  %v1102 = vsel %vm195, %v1097, %v1099
  %v1103 = vsel %vm195, %v1099, %v1101
  %1106 = vst [vmem:[#allocation3 + $0x30] sm:$0xff] %v1102
  %1107 = vst [vmem:[#allocation3 + $0x38] sm:$0xff] %v1103
  %1108 = vrot.lane.b32.xlu0 %v1088, 126
  %v1109 = vpop.permute.xlu0 %1108
  %1110 = vrot.lane.b32.xlu0 %v1084, 126
  %v1111 = vpop.permute.xlu0 %1110
  %1112 = vrot.lane.b32.xlu0 %v1089, 126
  %v1113 = vpop.permute.xlu0 %1112
  %v1114 = vsel %vm210, %v1109, %v1111
  %v1115 = vsel %vm210, %v1111, %v1113
  %v1118 = vsel %vm219, %v1114, 0.0
  %v1119 = vsel %vm220, %v1115, 0.0
  %1120 = vst [vmem:[#allocation3 + $0x50] sm:$0xff] %v1118
  %1121 = vst [vmem:[#allocation3 + $0x58] sm:$0xff] %v1119
  %1122 = vrot.lane.b32.xlu0 %v1088, 112
  %v1123 = vpop.permute.xlu0 %1122
  %1124 = vrot.lane.b32.xlu0 %v1084, 112
  %v1125 = vpop.permute.xlu0 %1124
  %1126 = vrot.lane.b32.xlu0 %v1089, 112
  %v1127 = vpop.permute.xlu0 %1126
  %v1128 = vsel %vm261, %v1123, %v1125
  %v1129 = vsel %vm261, %v1125, %v1127
  %v1132 = vsel %vm185, %v1128, 0.0
  %v1133 = vsel %vm186, %v1129, 0.0
  %1134 = vst [vmem:[#allocation3 + $0x70] sm:$0xff] %v1132
  %1135 = vst [vmem:[#allocation3 + $0x78] sm:$0xff] %v1133
  %1136 = vrot.lane.b32.xlu0 %v1088, 111
  %v1137 = vpop.permute.xlu0 %1136
  %1138 = vrot.lane.b32.xlu0 %v1084, 111
  %v1139 = vpop.permute.xlu0 %1138
  %1140 = vrot.lane.b32.xlu0 %v1089, 111
  %v1141 = vpop.permute.xlu0 %1140
  %v1142 = vsel %vm276, %v1137, %v1139
  %v1143 = vsel %vm276, %v1139, %v1141
  %1146 = vst [vmem:[#allocation3 + $0x90] sm:$0xff] %v1142
  %1147 = vst [vmem:[#allocation3 + $0x98] sm:$0xff] %v1143
  %1148 = vrot.lane.b32.xlu0 %v1088, 110
  %v1149 = vpop.permute.xlu0 %1148
  %1150 = vrot.lane.b32.xlu0 %v1084, 110
  %v1151 = vpop.permute.xlu0 %1150
  %1152 = vrot.lane.b32.xlu0 %v1089, 110
  %v1153 = vpop.permute.xlu0 %1152
  %v1154 = vsel %vm291, %v1149, %v1151
  %v1155 = vsel %vm291, %v1151, %v1153
  %v1158 = vsel %vm219, %v1154, 0.0
  %v1159 = vsel %vm220, %v1155, 0.0
  %1160 = vst [vmem:[#allocation3 + $0xb0] sm:$0xff] %v1158
  %1161 = vst [vmem:[#allocation3 + $0xb8] sm:$0xff] %v1159
  %1162 = vrot.lane.b32.xlu0 %v1088, 96
  %v1163 = vpop.permute.xlu0 %1162
  %1164 = vrot.lane.b32.xlu0 %v1084, 96
  %v1165 = vpop.permute.xlu0 %1164
  %1166 = vrot.lane.b32.xlu0 %v1089, 96
  %v1167 = vpop.permute.xlu0 %1166
  %v1168 = vsel %vm334, %v1163, %v1165
  %v1169 = vsel %vm334, %v1165, %v1167
  %v1172 = vsel %vm185, %v1168, 0.0
  %v1173 = vsel %vm186, %v1169, 0.0
  %1174 = vst [vmem:[#allocation3 + $0xd0] sm:$0xff] %v1172
  %1175 = vst [vmem:[#allocation3 + $0xd8] sm:$0xff] %v1173
  %1176 = vrot.lane.b32.xlu0 %v1088, 95
  %v1177 = vpop.permute.xlu0 %1176
  %1178 = vrot.lane.b32.xlu0 %v1084, 95
  %v1179 = vpop.permute.xlu0 %1178
  %1180 = vrot.lane.b32.xlu0 %v1089, 95
  %v1181 = vpop.permute.xlu0 %1180
  %v1182 = vsel %vm349, %v1177, %v1179
  %v1183 = vsel %vm349, %v1179, %v1181
  %1186 = vst [vmem:[#allocation3 + $0xf0] sm:$0xff] %v1182
  %1187 = vst [vmem:[#allocation3 + $0xf8] sm:$0xff] %v1183
  %1188 = vrot.lane.b32.xlu0 %v1088, 94
  %v1189 = vpop.permute.xlu0 %1188
  %1190 = vrot.lane.b32.xlu0 %v1084, 94
  %v1191 = vpop.permute.xlu0 %1190
  %1192 = vrot.lane.b32.xlu0 %v1089, 94
  %v1193 = vpop.permute.xlu0 %1192
  %v1194 = vsel %vm364, %v1189, %v1191
  %v1195 = vsel %vm364, %v1191, %v1193
  %v1198 = vsel %vm219, %v1194, 0.0
  %v1199 = vsel %vm220, %v1195, 0.0
  %1200 = vst [vmem:[#allocation3 + $0x110] sm:$0xff] %v1198
  %1201 = vst [vmem:[#allocation3 + $0x118] sm:$0xff] %v1199
  %v1202 = vld [vmem:[%s3] sm:$0xf]
  %v1203 = vld [vmem:[#allocation2] sm:$0xff]
  %v1204 = vld [vmem:[#allocation2 + $0x8] sm:$0xff]
  %v1205 = vld [vmem:[#allocation2 + $0x10] sm:$0xff]
  %v1206 = vld [vmem:[#allocation2 + $0x18] sm:$0xff]
  %v1207 = vld [vmem:[#allocation2 + $0x20] sm:$0xff]
  %v1208 = vld [vmem:[#allocation2 + $0x28] sm:$0xff]
  %v1209 = vld [vmem:[#allocation2 + $0x30] sm:$0xff]
  %v1210 = vld [vmem:[#allocation2 + $0x38] sm:$0xff]
  %v1211 = vld [vmem:[#allocation2 + $0x40] sm:$0xff]
  %v1212 = vld [vmem:[#allocation2 + $0x48] sm:$0xff]
  %v1213 = vld [vmem:[#allocation2 + $0x50] sm:$0xff]
  %v1214 = vld [vmem:[#allocation2 + $0x58] sm:$0xff]
  %v1215 = vld [vmem:[#allocation2 + $0x60] sm:$0xff]
  %v1216 = vld [vmem:[#allocation2 + $0x68] sm:$0xff]
  %v1217 = vld [vmem:[#allocation2 + $0x70] sm:$0xff]
  %v1218 = vld [vmem:[#allocation2 + $0x78] sm:$0xff]
  %v1219 = vld [vmem:[#allocation2 + $0x80] sm:$0xff]
  %v1220 = vld [vmem:[#allocation2 + $0x88] sm:$0xff]
  %v1221 = vld [vmem:[#allocation2 + $0x90] sm:$0xff]
  %v1222 = vld [vmem:[#allocation2 + $0x98] sm:$0xff]
  %v1223 = vld [vmem:[#allocation2 + $0xa0] sm:$0xff]
  %v1224 = vld [vmem:[#allocation2 + $0xa8] sm:$0xff]
  %v1225 = vld [vmem:[#allocation2 + $0xb0] sm:$0xff]
  %v1226 = vld [vmem:[#allocation2 + $0xb8] sm:$0xff]
  %v1227 = vld [vmem:[#allocation2 + $0xc0] sm:$0xff]
  %v1228 = vld [vmem:[#allocation2 + $0xc8] sm:$0xff]
  %v1229 = vld [vmem:[#allocation2 + $0xd0] sm:$0xff]
  %v1230 = vld [vmem:[#allocation2 + $0xd8] sm:$0xff]
  %v1231 = vld [vmem:[#allocation2 + $0xe0] sm:$0xff]
  %v1232 = vld [vmem:[#allocation2 + $0xe8] sm:$0xff]
  %v1233 = vld [vmem:[#allocation2 + $0xf0] sm:$0xff]
  %v1234 = vld [vmem:[#allocation2 + $0xf8] sm:$0xff]
  %v1235 = vld [vmem:[#allocation2 + $0x100] sm:$0xff]
  %v1236 = vld [vmem:[#allocation2 + $0x108] sm:$0xff]
  %v1237 = vld [vmem:[#allocation2 + $0x110] sm:$0xff]
  %v1238 = vld [vmem:[#allocation2 + $0x118] sm:$0xff]
  %v1239 = vld [vmem:[#allocation2 + $0x120] sm:$0xff]
  %v1240 = vld [vmem:[#allocation2 + $0x128] sm:$0xff]
  %v1241 = vld [vmem:[#allocation2 + $0x130] sm:$0xff]
  %v1242 = vld [vmem:[#allocation2 + $0x138] sm:$0xff]
  %v1243 = vld [vmem:[#allocation2 + $0x140] sm:$0xff]
  %v1244 = vld [vmem:[#allocation2 + $0x148] sm:$0xff]
  %v1245 = vld [vmem:[#allocation2 + $0x150] sm:$0xff]
  %v1246 = vld [vmem:[#allocation2 + $0x158] sm:$0xff]
  %v1247 = vld [vmem:[#allocation2 + $0x160] sm:$0xff]
  %v1248 = vld [vmem:[#allocation2 + $0x168] sm:$0xff]
  %v1249 = vld [vmem:[#allocation2 + $0x170] sm:$0xff]
  %v1250 = vld [vmem:[#allocation2 + $0x178] sm:$0xff]
  %v1251 = vld [vmem:[#allocation2 + $0x180] sm:$0xff]
  %v1252 = vld [vmem:[#allocation2 + $0x188] sm:$0xff]
  %v1253 = vld [vmem:[#allocation2 + $0x190] sm:$0xff]
  %v1254 = vld [vmem:[#allocation2 + $0x198] sm:$0xff]
  %v1255 = vld [vmem:[#allocation2 + $0x1a0] sm:$0xff]
  %v1256 = vld [vmem:[#allocation2 + $0x1a8] sm:$0xff]
  %v1257 = vld [vmem:[#allocation2 + $0x1b0] sm:$0xff]
  %v1258 = vld [vmem:[#allocation2 + $0x1b8] sm:$0xff]
  %v1259 = vld [vmem:[#allocation2 + $0x1c0] sm:$0xff]
  %v1260 = vld [vmem:[#allocation2 + $0x1c8] sm:$0xff]
  %v1261 = vld [vmem:[#allocation2 + $0x1d0] sm:$0xff]
  %v1262 = vld [vmem:[#allocation2 + $0x1d8] sm:$0xff]
  %v1263 = vld [vmem:[#allocation2 + $0x1e0] sm:$0xff]
  %v1264 = vld [vmem:[#allocation2 + $0x1e8] sm:$0xff]
  %v1265 = vld [vmem:[#allocation2 + $0x1f0] sm:$0xff]
  %v1266 = vld [vmem:[#allocation2 + $0x1f8] sm:$0xff]
  %v1267 = vld [vmem:[#allocation2 + $0x200] sm:$0xff]
  %v1268 = vld [vmem:[#allocation2 + $0x208] sm:$0xff]
  %v1269 = vld [vmem:[#allocation2 + $0x210] sm:$0xff]
  %v1270 = vld [vmem:[#allocation2 + $0x218] sm:$0xff]
  %v1271 = vld [vmem:[#allocation2 + $0x220] sm:$0xff]
  %v1272 = vld [vmem:[#allocation2 + $0x228] sm:$0xff]
  %v1273 = vld [vmem:[#allocation2 + $0x230] sm:$0xff]
  %v1274 = vld [vmem:[#allocation2 + $0x238] sm:$0xff]
  %v1275 = vld [vmem:[#allocation2 + $0x240] sm:$0xff]
  %v1276 = vld [vmem:[#allocation2 + $0x248] sm:$0xff]
  %v1277 = vld [vmem:[#allocation2 + $0x250] sm:$0xff]
  %v1278 = vld [vmem:[#allocation2 + $0x258] sm:$0xff]
  %v1279 = vld [vmem:[#allocation2 + $0x260] sm:$0xff]
  %v1280 = vld [vmem:[#allocation2 + $0x268] sm:$0xff]
  %v1281 = vld [vmem:[#allocation2 + $0x270] sm:$0xff]
  %v1282 = vld [vmem:[#allocation2 + $0x278] sm:$0xff]
  %v1283 = vld [vmem:[#allocation2 + $0x280] sm:$0xff]
  %v1284 = vld [vmem:[#allocation2 + $0x288] sm:$0xff]
  %v1285 = vld [vmem:[#allocation2 + $0x290] sm:$0xff]
  %v1286 = vld [vmem:[#allocation2 + $0x298] sm:$0xff]
  %v1287 = vld [vmem:[#allocation2 + $0x2a0] sm:$0xff]
  %v1288 = vld [vmem:[#allocation2 + $0x2a8] sm:$0xff]
  %v1289 = vld [vmem:[#allocation2 + $0x2b0] sm:$0xff]
  %v1290 = vld [vmem:[#allocation2 + $0x2b8] sm:$0xff]
  %v1291 = vld [vmem:[#allocation2 + $0x2c0] sm:$0xff]
  %v1292 = vld [vmem:[#allocation2 + $0x2c8] sm:$0xff]
  %v1293 = vld [vmem:[#allocation2 + $0x2d0] sm:$0xff]
  %v1294 = vld [vmem:[#allocation2 + $0x2d8] sm:$0xff]
  %v1295 = vld [vmem:[#allocation2 + $0x2e0] sm:$0xff]
  %v1296 = vld [vmem:[#allocation2 + $0x2e8] sm:$0xff]
  %v1297 = vld [vmem:[#allocation2 + $0x2f0] sm:$0xff]
  %v1298 = vld [vmem:[#allocation2 + $0x2f8] sm:$0xff]
  %v1299 = vld [vmem:[#allocation2 + $0x300] sm:$0xff]
  %v1300 = vld [vmem:[#allocation2 + $0x308] sm:$0xff]
  %v1301 = vld [vmem:[#allocation2 + $0x310] sm:$0xff]
  %v1302 = vld [vmem:[#allocation2 + $0x318] sm:$0xff]
  %v1303 = vpack.c.bf16 %v1207, %v1203
  %v1304 = vpack.c.bf16 %v1208, %v1204
  %v1305 = vpack.c.bf16 %v1209, %v1205
  %v1306 = vpack.c.bf16 %v1210, %v1206
  %v1307 = vpack.c.bf16 %v1215, %v1211
  %v1308 = vpack.c.bf16 %v1216, %v1212
  %v1309 = vpack.c.bf16 %v1217, %v1213
  %v1310 = vpack.c.bf16 %v1218, %v1214
  %v1311 = vpack.c.bf16 %v1223, %v1219
  %v1312 = vpack.c.bf16 %v1224, %v1220
  %v1313 = vpack.c.bf16 %v1225, %v1221
  %v1314 = vpack.c.bf16 %v1226, %v1222
  %v1315 = vpack.c.bf16 %v1231, %v1227
  %v1316 = vpack.c.bf16 %v1232, %v1228
  %v1317 = vpack.c.bf16 %v1233, %v1229
  %v1318 = vpack.c.bf16 %v1234, %v1230
  %v1319 = vpack.c.bf16 %v1239, %v1235
  %v1320 = vpack.c.bf16 %v1240, %v1236
  %v1321 = vpack.c.bf16 %v1241, %v1237
  %v1322 = vpack.c.bf16 %v1242, %v1238
  %v1323 = vpack.c.bf16 %v1247, %v1243
  %v1324 = vpack.c.bf16 %v1248, %v1244
  %v1325 = vpack.c.bf16 %v1249, %v1245
  %v1326 = vpack.c.bf16 %v1250, %v1246
  %v1327 = vpack.c.bf16 %v1255, %v1251
  %v1328 = vpack.c.bf16 %v1256, %v1252
  %v1329 = vpack.c.bf16 %v1257, %v1253
  %v1330 = vpack.c.bf16 %v1258, %v1254
  %v1331 = vpack.c.bf16 %v1263, %v1259
  %v1332 = vpack.c.bf16 %v1264, %v1260
  %v1333 = vpack.c.bf16 %v1265, %v1261
  %v1334 = vpack.c.bf16 %v1266, %v1262
  %v1335 = vpack.c.bf16 %v1271, %v1267
  %v1336 = vpack.c.bf16 %v1272, %v1268
  %v1337 = vpack.c.bf16 %v1273, %v1269
  %v1338 = vpack.c.bf16 %v1274, %v1270
  %v1339 = vpack.c.bf16 %v1279, %v1275
  %v1340 = vpack.c.bf16 %v1280, %v1276
  %v1341 = vpack.c.bf16 %v1281, %v1277
  %v1342 = vpack.c.bf16 %v1282, %v1278
  %v1343 = vpack.c.bf16 %v1287, %v1283
  %v1344 = vpack.c.bf16 %v1288, %v1284
  %v1345 = vpack.c.bf16 %v1289, %v1285
  %v1346 = vpack.c.bf16 %v1290, %v1286
  %v1347 = vpack.c.bf16 %v1295, %v1291
  %v1348 = vpack.c.bf16 %v1296, %v1292
  %v1349 = vpack.c.bf16 %v1297, %v1293
  %v1350 = vpack.c.bf16 %v1298, %v1294
  %v1351 = vpack.c.bf16 %v1299, %v1299
  %v1352 = vpack.c.bf16 %v1300, %v1300
  %v1353 = vpack.c.bf16 %v1301, %v1301
  %v1354 = vpack.c.bf16 %v1302, %v1302
  %v1355 = vld [vmem:[%s4] sm:$0xf]
  %1357 = vset.pattern.permute.xlu0 0
  %1358 = vperm.xlu0 %1357, %v1355
  %v1359 = vpop.permute.xlu0 %1358
  %v1363 = vunpack.c.l.s4 1983009808
  %v1364 = vunpack.c.0.s8 %v1363
  %v1365 = vlaneseq
  %v1366 = vshrl.u32 %v1365, 7
  %v1367 = vsub.s32 %v1364, %v1366
  %v1368 = vrot.slane %v1202, %v1367
  %v1369 = vcombine.high %v1368, %v1368
  %vm1371 = vcmask 588800
  %v1373 = vsel %vm1371, %v1369, 0
  %v1376 = vsel %vm159, %v1351, 0
  %v1379 = vsel %vm159, %v1352, 0
  %v1382 = vsel %vm159, %v1353, 0
  %v1385 = vsel %vm159, %v1354, 0
  %1387 = vmatprep.subr.bf16.mxu0 %v1332
  %1388 = vmatpush1.bf16.msra.mxu0 %v1331
  %1389 = vmatprep.subr.bf16.mxu0 %v1328
  %1390 = vmatpush1.bf16.msra.mxu0 %v1327
  %1391 = vmatprep.subr.bf16.mxu0 %v1324
  %1392 = vmatpush1.bf16.msra.mxu0 %v1323
  %1393 = vmatprep.subr.bf16.mxu0 %v1320
  %1394 = vmatpush1.bf16.msra.mxu0 %v1319
  %1395 = vmatprep.subr.bf16.mxu0 %v1316
  %1396 = vmatpush1.bf16.msra.mxu0 %v1315
  %1397 = vmatprep.subr.bf16.mxu0 %v1312
  %1398 = vmatpush1.bf16.msra.mxu0 %v1311
  %1399 = vmatprep.subr.bf16.mxu0 %v1308
  %1400 = vmatpush1.bf16.msra.mxu0 %v1307
  %1401 = vmatprep.subr.bf16.mxu0 %v1304
  %1402 = vmatpush1.bf16.msra.mxu0 %v1303
  %1403 = vmatprep.subr.bf16.mxu0 0
  %1404 = vmatpush2.bf16.msra.mxu0 0
  %1405 = vmatprep.subr.bf16.mxu0 0
  %1406 = vmatpush2.bf16.msra.mxu0 0
  %1407 = vmatprep.subr.bf16.mxu0 0
  %1408 = vmatpush2.bf16.msra.mxu0 0
  %1409 = vmatprep.subr.bf16.mxu0 %v1379
  %1410 = vmatpush2.bf16.msra.mxu0 %v1376
  %1411 = vmatprep.subr.bf16.mxu0 %v1348
  %1412 = vmatpush2.bf16.msra.mxu0 %v1347
  %1413 = vmatprep.subr.bf16.mxu0 %v1344
  %1414 = vmatpush2.bf16.msra.mxu0 %v1343
  %1415 = vmatprep.subr.bf16.mxu0 %v1340
  %1416 = vmatpush2.bf16.msra.mxu0 %v1339
  %1417 = vmatprep.subr.bf16.mxu0 %v1336
  %1418 = vmatpush2.bf16.msra.mxu0 %v1335
  %1419 = vmatprep.mubr.bf16.mxu0 %v1373
  %1420 = vmatmul.mubr.bf16.gmra.mxu0 %v1368
  %v1421 = vpop.f32.mrf.mxu0
  %v1422 = vadd.f32 %v1359, %v1421
  %v1423 = vpop.f32.mrf.mxu0
  %v1424 = vadd.f32 %v1359, %v1423
  %v1425 = vpop.f32.mrf.mxu0
  %v1426 = vpop.f32.mrf.mxu0
  %1427 = vdwg.mxu0
  %1428 = vmatprep.subr.bf16.mxu0 %v1334
  %1429 = vmatpush1.bf16.msra.mxu0 %v1333
  %1430 = vmatprep.subr.bf16.mxu0 %v1330
  %1431 = vmatpush1.bf16.msra.mxu0 %v1329
  %1432 = vmatprep.subr.bf16.mxu0 %v1326
  %1433 = vmatpush1.bf16.msra.mxu0 %v1325
  %1434 = vmatprep.subr.bf16.mxu0 %v1322
  %1435 = vmatpush1.bf16.msra.mxu0 %v1321
  %1436 = vmatprep.subr.bf16.mxu0 %v1318
  %1437 = vmatpush1.bf16.msra.mxu0 %v1317
  %1438 = vmatprep.subr.bf16.mxu0 %v1314
  %1439 = vmatpush1.bf16.msra.mxu0 %v1313
  %1440 = vmatprep.subr.bf16.mxu0 %v1310
  %1441 = vmatpush1.bf16.msra.mxu0 %v1309
  %1442 = vmatprep.subr.bf16.mxu0 %v1306
  %1443 = vmatpush1.bf16.msra.mxu0 %v1305
  %1444 = vmatprep.subr.bf16.mxu0 0
  %1445 = vmatpush2.bf16.msra.mxu0 0
  %1446 = vmatprep.subr.bf16.mxu0 0
  %1447 = vmatpush2.bf16.msra.mxu0 0
  %1448 = vmatprep.subr.bf16.mxu0 0
  %1449 = vmatpush2.bf16.msra.mxu0 0
  %1450 = vmatprep.subr.bf16.mxu0 %v1385
  %1451 = vmatpush2.bf16.msra.mxu0 %v1382
  %1452 = vmatprep.subr.bf16.mxu0 %v1350
  %1453 = vmatpush2.bf16.msra.mxu0 %v1349
  %1454 = vmatprep.subr.bf16.mxu0 %v1346
  %1455 = vmatpush2.bf16.msra.mxu0 %v1345
  %1456 = vmatprep.subr.bf16.mxu0 %v1342
  %1457 = vmatpush2.bf16.msra.mxu0 %v1341
  %1458 = vmatprep.subr.bf16.mxu0 %v1338
  %1459 = vmatpush2.bf16.msra.mxu0 %v1337
  %1460 = vmatprep.mubr.bf16.mxu0 %v1373
  %1461 = vmatmul.mubr.bf16.gmra.mxu0 %v1368
  %v1462 = vpop.f32.mrf.mxu0
  %v1463 = vadd.f32 %v1359, %v1462
  %v1464 = vpop.f32.mrf.mxu0
  %v1465 = vadd.f32 %v1359, %v1464
  %v1466 = vpop.f32.mrf.mxu0
  %v1467 = vpop.f32.mrf.mxu0
  %1468 = vdwg.mxu0
  %v1469 = vmax.f32 %v1422, 0.0
  %v1470 = vmax.f32 %v1424, 0.0
  %v1471 = vmax.f32 %v1463, 0.0
  %v1472 = vmax.f32 %v1465, 0.0
  %v1473 = vld [vmem:[%s5] sm:$0xf]
  %v1474 = vpack.c.bf16 %v1469, %v1469
  %v1475 = vpack.c.bf16 %v1470, %v1470
  %v1476 = vpack.c.bf16 %v1471, %v1471
  %v1477 = vpack.c.bf16 %v1472, %v1472
  %v1478 = vld [vmem:[%s6] sm:$0xff]
  %1480 = vset.pattern.permute.xlu0 0
  %1481 = vperm.xlu0 %1480, %v1478
  %v1482 = vpop.permute.xlu0 %1481
  %v1485 = vsel %vm105, %v1473, 0
  %v1488 = vsel %vm109, %v1474, 0
  %v1491 = vsel %vm109, %v1475, 0
  %v1494 = vsel %vm109, %v1476, 0
  %v1497 = vsel %vm109, %v1477, 0
  %1499 = vmatprep.subr.bf16.mxu0 0
  %1500 = vmatpush1.bf16.msra.mxu0 0
  %1501 = vmatprep.subr.bf16.mxu0 0
  %1502 = vmatpush1.bf16.msra.mxu0 0
  %1503 = vmatprep.subr.bf16.mxu0 0
  %1504 = vmatpush1.bf16.msra.mxu0 0
  %1505 = vmatprep.subr.bf16.mxu0 0
  %1506 = vmatpush1.bf16.msra.mxu0 0
  %1507 = vmatprep.subr.bf16.mxu0 0
  %1508 = vmatpush1.bf16.msra.mxu0 0
  %1509 = vmatprep.subr.bf16.mxu0 0
  %1510 = vmatpush1.bf16.msra.mxu0 0
  %1511 = vmatprep.subr.bf16.mxu0 0
  %1512 = vmatpush1.bf16.msra.mxu0 0
  %1513 = vmatprep.subr.bf16.mxu0 %v1491
  %1514 = vmatpush1.bf16.msra.mxu0 %v1488
  %1515 = vmatprep.subr.bf16.mxu0 0
  %1516 = vmatpush2.bf16.msra.mxu0 0
  %1517 = vmatprep.subr.bf16.mxu0 0
  %1518 = vmatpush2.bf16.msra.mxu0 0
  %1519 = vmatprep.subr.bf16.mxu0 0
  %1520 = vmatpush2.bf16.msra.mxu0 0
  %1521 = vmatprep.subr.bf16.mxu0 0
  %1522 = vmatpush2.bf16.msra.mxu0 0
  %1523 = vmatprep.subr.bf16.mxu0 0
  %1524 = vmatpush2.bf16.msra.mxu0 0
  %1525 = vmatprep.subr.bf16.mxu0 0
  %1526 = vmatpush2.bf16.msra.mxu0 0
  %1527 = vmatprep.subr.bf16.mxu0 0
  %1528 = vmatpush2.bf16.msra.mxu0 0
  %1529 = vmatprep.subr.bf16.mxu0 0
  %1530 = vmatpush2.bf16.msra.mxu0 0
  %1531 = vmatprep.mubr.bf16.mxu0 0
  %1532 = vmatmul.mubr.bf16.gmra.mxu0 %v1485
  %v1533 = vpop.f32.mrf.mxu0
  %v1534 = vadd.f32 %v1482, %v1533
  %v1535 = vpop.f32.mrf.mxu0
  %v1536 = vadd.f32 %v1482, %v1535
  %v1537 = vpop.f32.mrf.mxu0
  %v1538 = vpop.f32.mrf.mxu0
  %1539 = vdwg.mxu0
  %1540 = vmatprep.subr.bf16.mxu0 0
  %1541 = vmatpush1.bf16.msra.mxu0 0
  %1542 = vmatprep.subr.bf16.mxu0 0
  %1543 = vmatpush1.bf16.msra.mxu0 0
  %1544 = vmatprep.subr.bf16.mxu0 0
  %1545 = vmatpush1.bf16.msra.mxu0 0
  %1546 = vmatprep.subr.bf16.mxu0 0
  %1547 = vmatpush1.bf16.msra.mxu0 0
  %1548 = vmatprep.subr.bf16.mxu0 0
  %1549 = vmatpush1.bf16.msra.mxu0 0
  %1550 = vmatprep.subr.bf16.mxu0 0
  %1551 = vmatpush1.bf16.msra.mxu0 0
  %1552 = vmatprep.subr.bf16.mxu0 0
  %1553 = vmatpush1.bf16.msra.mxu0 0
  %1554 = vmatprep.subr.bf16.mxu0 %v1497
  %1555 = vmatpush1.bf16.msra.mxu0 %v1494
  %1556 = vmatprep.subr.bf16.mxu0 0
  %1557 = vmatpush2.bf16.msra.mxu0 0
  %1558 = vmatprep.subr.bf16.mxu0 0
  %1559 = vmatpush2.bf16.msra.mxu0 0
  %1560 = vmatprep.subr.bf16.mxu0 0
  %1561 = vmatpush2.bf16.msra.mxu0 0
  %1562 = vmatprep.subr.bf16.mxu0 0
  %1563 = vmatpush2.bf16.msra.mxu0 0
  %1564 = vmatprep.subr.bf16.mxu0 0
  %1565 = vmatpush2.bf16.msra.mxu0 0
  %1566 = vmatprep.subr.bf16.mxu0 0
  %1567 = vmatpush2.bf16.msra.mxu0 0
  %1568 = vmatprep.subr.bf16.mxu0 0
  %1569 = vmatpush2.bf16.msra.mxu0 0
  %1570 = vmatprep.subr.bf16.mxu0 0
  %1571 = vmatpush2.bf16.msra.mxu0 0
  %1572 = vmatprep.mubr.bf16.mxu0 0
  %1573 = vmatmul.mubr.bf16.gmra.mxu0 %v1485
  %v1574 = vpop.f32.mrf.mxu0
  %v1575 = vadd.f32 %v1482, %v1574
  %v1576 = vpop.f32.mrf.mxu0
  %v1577 = vadd.f32 %v1482, %v1576
  %v1578 = vpop.f32.mrf.mxu0
  %v1579 = vpop.f32.mrf.mxu0
  %1580 = vdwg.mxu0
  %v1581 = vld [vmem:[%s7] sm:$0xf]
  %v1582 = vld [vmem:[#allocation3] sm:$0xff]
  %v1583 = vld [vmem:[#allocation3 + $0x8] sm:$0xff]
  %v1584 = vld [vmem:[#allocation3 + $0x10] sm:$0xff]
  %v1585 = vld [vmem:[#allocation3 + $0x18] sm:$0xff]
  %v1586 = vld [vmem:[#allocation3 + $0x20] sm:$0xff]
  %v1587 = vld [vmem:[#allocation3 + $0x28] sm:$0xff]
  %v1588 = vld [vmem:[#allocation3 + $0x30] sm:$0xff]
  %v1589 = vld [vmem:[#allocation3 + $0x38] sm:$0xff]
  %v1590 = vld [vmem:[#allocation3 + $0x40] sm:$0xff]
  %v1591 = vld [vmem:[#allocation3 + $0x48] sm:$0xff]
  %v1592 = vld [vmem:[#allocation3 + $0x50] sm:$0xff]
  %v1593 = vld [vmem:[#allocation3 + $0x58] sm:$0xff]
  %v1594 = vld [vmem:[#allocation3 + $0x60] sm:$0xff]
  %v1595 = vld [vmem:[#allocation3 + $0x68] sm:$0xff]
  %v1596 = vld [vmem:[#allocation3 + $0x70] sm:$0xff]
  %v1597 = vld [vmem:[#allocation3 + $0x78] sm:$0xff]
  %v1598 = vld [vmem:[#allocation3 + $0x80] sm:$0xff]
  %v1599 = vld [vmem:[#allocation3 + $0x88] sm:$0xff]
  %v1600 = vld [vmem:[#allocation3 + $0x90] sm:$0xff]
  %v1601 = vld [vmem:[#allocation3 + $0x98] sm:$0xff]
  %v1602 = vld [vmem:[#allocation3 + $0xa0] sm:$0xff]
  %v1603 = vld [vmem:[#allocation3 + $0xa8] sm:$0xff]
  %v1604 = vld [vmem:[#allocation3 + $0xb0] sm:$0xff]
  %v1605 = vld [vmem:[#allocation3 + $0xb8] sm:$0xff]
  %v1606 = vld [vmem:[#allocation3 + $0xc0] sm:$0xff]
  %v1607 = vld [vmem:[#allocation3 + $0xc8] sm:$0xff]
  %v1608 = vld [vmem:[#allocation3 + $0xd0] sm:$0xff]
  %v1609 = vld [vmem:[#allocation3 + $0xd8] sm:$0xff]
  %v1610 = vld [vmem:[#allocation3 + $0xe0] sm:$0xff]
  %v1611 = vld [vmem:[#allocation3 + $0xe8] sm:$0xff]
  %v1612 = vld [vmem:[#allocation3 + $0xf0] sm:$0xff]
  %v1613 = vld [vmem:[#allocation3 + $0xf8] sm:$0xff]
  %v1614 = vld [vmem:[#allocation3 + $0x100] sm:$0xff]
  %v1615 = vld [vmem:[#allocation3 + $0x108] sm:$0xff]
  %v1616 = vld [vmem:[#allocation3 + $0x110] sm:$0xff]
  %v1617 = vld [vmem:[#allocation3 + $0x118] sm:$0xff]
  %v1618 = vpack.c.bf16 %v1586, %v1582
  %v1619 = vpack.c.bf16 %v1587, %v1583
  %v1620 = vpack.c.bf16 %v1588, %v1584
  %v1621 = vpack.c.bf16 %v1589, %v1585
  %v1622 = vpack.c.bf16 %v1594, %v1590
  %v1623 = vpack.c.bf16 %v1595, %v1591
  %v1624 = vpack.c.bf16 %v1596, %v1592
  %v1625 = vpack.c.bf16 %v1597, %v1593
  %v1626 = vpack.c.bf16 %v1602, %v1598
  %v1627 = vpack.c.bf16 %v1603, %v1599
  %v1628 = vpack.c.bf16 %v1604, %v1600
  %v1629 = vpack.c.bf16 %v1605, %v1601
  %v1630 = vpack.c.bf16 %v1610, %v1606
  %v1631 = vpack.c.bf16 %v1611, %v1607
  %v1632 = vpack.c.bf16 %v1612, %v1608
  %v1633 = vpack.c.bf16 %v1613, %v1609
  %v1634 = vpack.c.bf16 %v1614, %v1614
  %v1635 = vpack.c.bf16 %v1615, %v1615
  %v1636 = vpack.c.bf16 %v1616, %v1616
  %v1637 = vpack.c.bf16 %v1617, %v1617
  %v1638 = vld [vmem:[%s8] sm:$0xff]
  %1640 = vset.pattern.permute.xlu0 0
  %1641 = vperm.xlu0 %1640, %v1638
  %v1642 = vpop.permute.xlu0 %1641
  %v1645 = vsel %vm1371, %v1581, 0
  %v1648 = vsel %vm159, %v1634, 0
  %v1651 = vsel %vm159, %v1635, 0
  %v1654 = vsel %vm159, %v1636, 0
  %v1657 = vsel %vm159, %v1637, 0
  %1659 = vmatprep.subr.bf16.mxu0 0
  %1660 = vmatpush1.bf16.msra.mxu0 0
  %1661 = vmatprep.subr.bf16.mxu0 0
  %1662 = vmatpush1.bf16.msra.mxu0 0
  %1663 = vmatprep.subr.bf16.mxu0 0
  %1664 = vmatpush1.bf16.msra.mxu0 0
  %1665 = vmatprep.subr.bf16.mxu0 %v1651
  %1666 = vmatpush1.bf16.msra.mxu0 %v1648
  %1667 = vmatprep.subr.bf16.mxu0 %v1631
  %1668 = vmatpush1.bf16.msra.mxu0 %v1630
  %1669 = vmatprep.subr.bf16.mxu0 %v1627
  %1670 = vmatpush1.bf16.msra.mxu0 %v1626
  %1671 = vmatprep.subr.bf16.mxu0 %v1623
  %1672 = vmatpush1.bf16.msra.mxu0 %v1622
  %1673 = vmatprep.subr.bf16.mxu0 %v1619
  %1674 = vmatpush1.bf16.msra.mxu0 %v1618
  %1675 = vmatprep.subr.bf16.mxu0 0
  %1676 = vmatpush2.bf16.msra.mxu0 0
  %1677 = vmatprep.subr.bf16.mxu0 0
  %1678 = vmatpush2.bf16.msra.mxu0 0
  %1679 = vmatprep.subr.bf16.mxu0 0
  %1680 = vmatpush2.bf16.msra.mxu0 0
  %1681 = vmatprep.subr.bf16.mxu0 0
  %1682 = vmatpush2.bf16.msra.mxu0 0
  %1683 = vmatprep.subr.bf16.mxu0 0
  %1684 = vmatpush2.bf16.msra.mxu0 0
  %1685 = vmatprep.subr.bf16.mxu0 0
  %1686 = vmatpush2.bf16.msra.mxu0 0
  %1687 = vmatprep.subr.bf16.mxu0 0
  %1688 = vmatpush2.bf16.msra.mxu0 0
  %1689 = vmatprep.subr.bf16.mxu0 0
  %1690 = vmatpush2.bf16.msra.mxu0 0
  %1691 = vmatprep.mubr.bf16.mxu0 0
  %1692 = vmatmul.mubr.bf16.gmra.mxu0 %v1645
  %v1693 = vpop.f32.mrf.mxu0
  %v1694 = vadd.f32 %v1642, %v1693
  %v1695 = vpop.f32.mrf.mxu0
  %v1696 = vadd.f32 %v1642, %v1695
  %v1697 = vpop.f32.mrf.mxu0
  %v1698 = vpop.f32.mrf.mxu0
  %1699 = vdwg.mxu0
  %1700 = vmatprep.subr.bf16.mxu0 0
  %1701 = vmatpush1.bf16.msra.mxu0 0
  %1702 = vmatprep.subr.bf16.mxu0 0
  %1703 = vmatpush1.bf16.msra.mxu0 0
  %1704 = vmatprep.subr.bf16.mxu0 0
  %1705 = vmatpush1.bf16.msra.mxu0 0
  %1706 = vmatprep.subr.bf16.mxu0 %v1657
  %1707 = vmatpush1.bf16.msra.mxu0 %v1654
  %1708 = vmatprep.subr.bf16.mxu0 %v1633
  %1709 = vmatpush1.bf16.msra.mxu0 %v1632
  %1710 = vmatprep.subr.bf16.mxu0 %v1629
  %1711 = vmatpush1.bf16.msra.mxu0 %v1628
  %1712 = vmatprep.subr.bf16.mxu0 %v1625
  %1713 = vmatpush1.bf16.msra.mxu0 %v1624
  %1714 = vmatprep.subr.bf16.mxu0 %v1621
  %1715 = vmatpush1.bf16.msra.mxu0 %v1620
  %1716 = vmatprep.subr.bf16.mxu0 0
  %1717 = vmatpush2.bf16.msra.mxu0 0
  %1718 = vmatprep.subr.bf16.mxu0 0
  %1719 = vmatpush2.bf16.msra.mxu0 0
  %1720 = vmatprep.subr.bf16.mxu0 0
  %1721 = vmatpush2.bf16.msra.mxu0 0
  %1722 = vmatprep.subr.bf16.mxu0 0
  %1723 = vmatpush2.bf16.msra.mxu0 0
  %1724 = vmatprep.subr.bf16.mxu0 0
  %1725 = vmatpush2.bf16.msra.mxu0 0
  %1726 = vmatprep.subr.bf16.mxu0 0
  %1727 = vmatpush2.bf16.msra.mxu0 0
  %1728 = vmatprep.subr.bf16.mxu0 0
  %1729 = vmatpush2.bf16.msra.mxu0 0
  %1730 = vmatprep.subr.bf16.mxu0 0
  %1731 = vmatpush2.bf16.msra.mxu0 0
  %1732 = vmatprep.mubr.bf16.mxu0 0
  %1733 = vmatmul.mubr.bf16.gmra.mxu0 %v1645
  %v1734 = vpop.f32.mrf.mxu0
  %v1735 = vadd.f32 %v1642, %v1734
  %v1736 = vpop.f32.mrf.mxu0
  %v1737 = vadd.f32 %v1642, %v1736
  %v1738 = vpop.f32.mrf.mxu0
  %v1739 = vpop.f32.mrf.mxu0
  %1740 = vdwg.mxu0
  %v1741 = vadd.f32 %v1534, %v1694
  %v1742 = vadd.f32 %v1536, %v1696
  %v1743 = vmax.f32 %v1741, 0.0
  %v1744 = vmax.f32 %v1742, 0.0
  %1745 = vst [vmem:[%s9] sm:$0xff] %v1743
  %1746 = vst [vmem:[%s9 + $0x8] sm:$0xff] %v1744
  %v1747 = vadd.f32 %v1575, %v1735
  %v1748 = vadd.f32 %v1577, %v1737
  %v1749 = vmax.f32 %v1747, 0.0
  %v1750 = vmax.f32 %v1748, 0.0
  %s1751 = scalar_lea.vmem %s9, 16
  %1752 = vst [vmem:[%s1751] sm:$0xff] %v1749
  %1753 = vst [vmem:[%s1751 + $0x8] sm:$0xff] %v1750
  // Predicated region
  $region38: #{bottleneck_forward.1} parent=0 // pred_check
    _
  $region39: #{bottleneck_forward.1} parent=0 // pred_check_branch
    %1755 = sbr.rel (0) target = $region41
  $region40: #{bottleneck_forward.1} parent=0 // pred_region
    _
  $region41: #{bottleneck_forward.1} parent=0 // pred_fallthru
    _
  // Predicated region
  $region42: #{bottleneck_forward.1} parent=0 // pred_check
    _
  $region43: #{bottleneck_forward.1} parent=0 // pred_check_branch
    %1757 = sbr.rel (0) target = $region45
  $region44: #{bottleneck_forward.1} parent=0 // pred_region
    _
  $region45: #{bottleneck_forward.1} parent=0 // pred_fallthru
    _

</llo_original>
